<compile_context>
chip_gen: v7x
topology: tpu7x:2x2x1
jax: 0.10.0
libtpu: 0.0.40
codegen_flags: <defaults>
</compile_context>

<pallas_src>
import jax
import jax.numpy as jnp
from jax.experimental import pallas as pl
from jax.experimental.pallas import tpu as pltpu

_HI = jax.lax.Precision.HIGHEST


def _vmem_capacity_bytes():
    try:
        return int(pltpu.get_tpu_info().vmem_capacity_bytes)
    except Exception:
        return 64 * 1024 * 1024        # conservative (v7x per-core VMEM)


# --------------------------- fused single-pass kernel ---------------------------
def _psa_fused_kernel(x_ref, wq_ref, wchwv_ref, wchwz_ref, wspwq_ref,
                      wspwv_t_ref, vc_ref, vh_ref, out_ref):
    """Whole per-image PSA forward with x resident in VMEM.

    x_ref:      (1, C, HW) input slab (NCHW, spatial flattened), native dtype.
    wq_ref:     (1, C) ch_wq weight row (bias cancels in the softmax).
    wchwv_ref:  (C/2, C) ch_wv weight.       wchwz_ref: (C, C/2) ch_wz weight.
    wspwq_ref:  (C/2, C) sp_wq weight.       wspwv_t_ref: (C, C/2) sp_wv weight^T.
    vc_ref:     (C, 3) columns = [ch_wz_b, ln_gamma, ln_beta].
    vh_ref:     (C/2, 3) columns = [ch_wv_b, sp_wq_b, sp_wv_b].
    """
    f32 = jnp.float32
    hw = x_ref.shape[-1]
    x = x_ref[0].astype(f32)                                            # (C, HW)

    # ---- channel softmax over HW (stable) + the two per-channel statistics ----
    logits = jnp.dot(wq_ref[...], x, precision=_HI,
                     preferred_element_type=f32)                        # (1, HW)
    m = jnp.max(logits, axis=-1, keepdims=True)
    p = jnp.exp(logits - m)                                             # (1, HW)
    l = jnp.sum(p, axis=-1, keepdims=True)
    wsum = jnp.sum(x * p, axis=-1, keepdims=True) / l                   # (C, 1)
    xmean = jnp.sum(x, axis=-1, keepdims=True) * (1.0 / hw)             # (C, 1)

    # ---- channel branch: ch_wv -> ch_wz -> LayerNorm -> sigmoid (column space) ----
    wz = jnp.dot(wchwv_ref[...], wsum, precision=_HI,
                 preferred_element_type=f32) + vh_ref[:, 0:1]           # (C/2, 1)
    z = jnp.dot(wchwz_ref[...], wz, precision=_HI,
                preferred_element_type=f32) + vc_ref[:, 0:1]            # (C, 1)
    mu = jnp.mean(z, axis=0, keepdims=True)
    var = jnp.mean((z - mu) ** 2, axis=0, keepdims=True)
    zn = (z - mu) * jax.lax.rsqrt(var + 1e-5)
    cw = jax.nn.sigmoid(zn * vc_ref[:, 1:2] + vc_ref[:, 2:3])           # (C, 1)

    # ---- spatial branch folded into a per-channel gate v and a scalar const ----
    sq_l = jnp.dot(wspwq_ref[...], cw * xmean, precision=_HI,
                   preferred_element_type=f32) + vh_ref[:, 1:2]         # (C/2, 1)
    sq = jnp.exp(sq_l - jnp.max(sq_l, axis=0, keepdims=True))
    sq = sq / jnp.sum(sq, axis=0, keepdims=True)                        # (C/2, 1)
    v = cw * jnp.dot(wspwv_t_ref[...], sq, precision=_HI,
                     preferred_element_type=f32)                        # (C, 1)
    const = jnp.sum(sq * vh_ref[:, 2:3], axis=0, keepdims=True)         # (1, 1)

    # ---- apply both gates ----
    sz = jnp.sum(v * x, axis=0, keepdims=True) + const                  # (1, HW)
    out_ref[0] = (jax.nn.sigmoid(sz) * (cw * x)).astype(out_ref.dtype)


# ------------------- two-pass streaming fallback (large HW) -------------------
def _make_stats_kernel(hw_total, tile_hw):
    """Pass 1: online softmax over HW of (wq . x) + running sums of x."""
    needs_mask = (hw_total % tile_hw) != 0

    def kernel(x_ref, wq_ref, wsum_ref, xsum_ref, m_ref, l_ref, awx_ref, asx_ref):
        t = pl.program_id(1)
        n_t = pl.num_programs(1)

        @pl.when(t == 0)
        def _init():
            m_ref[...] = jnp.full((1, 1), -jnp.inf, jnp.float32)
            l_ref[...] = jnp.zeros((1, 1), jnp.float32)
            awx_ref[...] = jnp.zeros_like(awx_ref)
            asx_ref[...] = jnp.zeros_like(asx_ref)

        x = x_ref[0].astype(jnp.float32)                                 # (C, TH)
        if needs_mask:
            lane = jax.lax.broadcasted_iota(jnp.int32, (1, tile_hw), 1)
            valid = lane < (hw_total - t * tile_hw)
            x = jnp.where(valid, x, 0.0)

        logits = jnp.dot(wq_ref[...], x, precision=_HI,
                         preferred_element_type=jnp.float32)             # (1, TH)
        if needs_mask:
            logits = jnp.where(valid, logits, -jnp.inf)

        m_prev = m_ref[...]
        m_new = jnp.maximum(m_prev, jnp.max(logits, axis=-1, keepdims=True))
        alpha = jnp.exp(m_prev - m_new)
        p = jnp.exp(logits - m_new)                                      # masked -> 0

        l_ref[...] = alpha * l_ref[...] + jnp.sum(p, axis=-1, keepdims=True)
        awx_ref[...] = alpha * awx_ref[...] + jnp.sum(x * p, axis=-1, keepdims=True)
        asx_ref[...] = asx_ref[...] + jnp.sum(x, axis=-1, keepdims=True)
        m_ref[...] = m_new

        @pl.when(t == n_t - 1)
        def _finalize():
            wsum_ref[0] = awx_ref[...] / l_ref[...]
            xsum_ref[0] = asx_ref[...]

    return kernel


def _psa_apply_kernel(x_ref, v_ref, cw_ref, const_ref, out_ref):
    """Pass 2: out = sigmoid(x . v + const) * (channel_weight * x), per HW tile."""
    x = x_ref[0].astype(jnp.float32)                                     # (C, TH)
    sz = jnp.sum(x * v_ref[0], axis=0, keepdims=True) + const_ref[0]     # (1, TH)
    out_ref[0] = ((cw_ref[0] * x) * jax.nn.sigmoid(sz)).astype(out_ref.dtype)


def _pick_hw_tile(hw, c, vmem_cap):
    """Largest lane-aligned HW tile whose f32 footprint is ~vmem_cap/16."""
    tile_budget = max(1 << 20, min(8 << 20, vmem_cap // 16))   # bytes (f32)
    th = (tile_budget // (c * 4)) // 128 * 128
    th = max(th, 128)
    th = min(th, pl.cdiv(hw, 128) * 128)
    return int(th)


# ---------------------------------- wrapper ----------------------------------
def polarized_self_attention(x_nchw, params, *, force_two_pass=False, tile_hw=None):
    """Sequential PSA forward.  x_nchw: (B, C, H, W).  tile_hw (if given) must be
    a multiple of 128 and is only used by the two-pass fallback."""
    B, C, H, W = x_nchw.shape
    HW = H * W
    Ch = C // 2
    f32 = jnp.float32
    out_dtype = x_nchw.dtype
    isz = x_nchw.dtype.itemsize
    x = x_nchw.reshape(B, C, HW)            # free NCHW view; native dtype on the wire

    vmem_cap = _vmem_capacity_bytes()
    # Fused-path VMEM estimate: 2x in + 2x out buffers (native dtype) plus ~3
    # f32-sized working copies of the (C, HW) slab inside the kernel body.
    fused_req = C * HW * (4 * isz + 12) + (2 << 20)
    fused_budget = min(40 << 20, int(0.6 * vmem_cap))
    use_fused = (not force_two_pass) and (fused_req <= fused_budget)

    wq_row = params["ch_wq_w"].reshape(1, C).astype(f32)    # ch_wq bias cancels

    if use_fused:
        w_chwv = params["ch_wv_w"].astype(f32)                        # (Ch, C)
        w_chwz = params["ch_wz_w"].astype(f32)                        # (C, Ch)
        w_spwq = params["sp_wq_w"].astype(f32)                        # (Ch, C)
        w_spwv_t = params["sp_wv_w"].T.astype(f32)                    # (C, Ch)
        vec_c = jnp.stack([params["ch_wz_b"], params["ln_g"],
                           params["ln_b"]], axis=1).astype(f32)       # (C, 3)
        vec_h = jnp.stack([params["ch_wv_b"], params["sp_wq_b"],
                           params["sp_wv_b"]], axis=1).astype(f32)    # (Ch, 3)

        limit = int(min(int(0.9 * vmem_cap),
                        max(32 << 20, fused_req + (16 << 20))))
        out = pl.pallas_call(
            _psa_fused_kernel,
            out_shape=jax.ShapeDtypeStruct((B, C, HW), out_dtype),
            grid_spec=pltpu.PrefetchScalarGridSpec(
                num_scalar_prefetch=0,
                grid=(B,),
                in_specs=[
                    pl.BlockSpec((1, C, HW), lambda b: (b, 0, 0)),    # x slab
                    pl.BlockSpec((1, C), lambda b: (0, 0)),           # wq row
                    pl.BlockSpec((Ch, C), lambda b: (0, 0)),          # ch_wv
                    pl.BlockSpec((C, Ch), lambda b: (0, 0)),          # ch_wz
                    pl.BlockSpec((Ch, C), lambda b: (0, 0)),          # sp_wq
                    pl.BlockSpec((C, Ch), lambda b: (0, 0)),          # sp_wv^T
                    pl.BlockSpec((C, 3), lambda b: (0, 0)),           # C-vectors
                    pl.BlockSpec((Ch, 3), lambda b: (0, 0)),          # C/2-vectors
                ],
                out_specs=pl.BlockSpec((1, C, HW), lambda b: (b, 0, 0)),
            ),
            compiler_params=pltpu.CompilerParams(
                dimension_semantics=("parallel",),
                vmem_limit_bytes=limit),
        )(x, wq_row, w_chwv, w_chwz, w_spwq, w_spwv_t, vec_c, vec_h)
        return out.reshape(B, C, H, W)

    # ---------------- fallback: two-pass streaming over HW tiles ----------------
    # TODO(synk): v7x megacore when B==1 — split pass-1's HW axis across cores and
    # merge the partial online-softmax stats with the associative combine.
    TH = int(tile_hw) if tile_hw is not None else _pick_hw_tile(HW, C, vmem_cap)
    n_t = pl.cdiv(HW, TH)
    tile_f32 = C * TH * 4
    limit = int(min(int(0.9 * vmem_cap),
                    max(32 << 20, 8 * tile_f32 + (16 << 20))))

    wsum, xsum = pl.pallas_call(
        _make_stats_kernel(HW, TH),
        out_shape=(jax.ShapeDtypeStruct((B, C, 1), f32),
                   jax.ShapeDtypeStruct((B, C, 1), f32)),
        grid_spec=pltpu.PrefetchScalarGridSpec(
            num_scalar_prefetch=0,
            grid=(B, n_t),
            in_specs=[
                pl.BlockSpec((1, C, TH), lambda b, t: (b, 0, t)),     # x tile
                pl.BlockSpec((1, C), lambda b, t: (0, 0)),            # wq row
            ],
            out_specs=[
                pl.BlockSpec((1, C, 1), lambda b, t: (b, 0, 0)),
                pl.BlockSpec((1, C, 1), lambda b, t: (b, 0, 0)),
            ],
            scratch_shapes=[
                pltpu.VMEM((1, 1), f32),     # running max
                pltpu.VMEM((1, 1), f32),     # running sum of exp
                pltpu.VMEM((C, 1), f32),     # softmax-weighted-x accumulator
                pltpu.VMEM((C, 1), f32),     # plain-x accumulator
            ]),
        compiler_params=pltpu.CompilerParams(
            dimension_semantics=("parallel", "arbitrary"),
            vmem_limit_bytes=limit),
    )(x, wq_row)

    # Tiny per-image O(C^2) epilogue (ordinary XLA; negligible vs the streaming passes).
    wsum_v = wsum[..., 0]                               # (B, C)
    mean_v = xsum[..., 0] / HW                          # (B, C)
    wz = jnp.dot(wsum_v, params["ch_wv_w"].T, precision=_HI) + params["ch_wv_b"]
    z = jnp.dot(wz, params["ch_wz_w"].T, precision=_HI) + params["ch_wz_b"]
    mu = jnp.mean(z, axis=-1, keepdims=True)
    var = jnp.mean((z - mu) ** 2, axis=-1, keepdims=True)
    zn = (z - mu) * jax.lax.rsqrt(var + 1e-5)
    cw = jax.nn.sigmoid(zn * params["ln_g"] + params["ln_b"])         # channel weight
    sq_logits = jnp.dot(mean_v * cw, params["sp_wq_w"].T, precision=_HI) \
        + params["sp_wq_b"]
    sq = jax.nn.softmax(sq_logits, axis=-1)                           # (B, C/2)
    v = cw * jnp.dot(sq, params["sp_wv_w"], precision=_HI)            # (B, C)
    const = jnp.dot(sq, params["sp_wv_b"], precision=_HI)             # (B,)

    out = pl.pallas_call(
        _psa_apply_kernel,
        out_shape=jax.ShapeDtypeStruct((B, C, HW), out_dtype),
        grid_spec=pltpu.PrefetchScalarGridSpec(
            num_scalar_prefetch=0,
            grid=(B, n_t),
            in_specs=[
                pl.BlockSpec((1, C, TH), lambda b, t: (b, 0, t)),     # x tile
                pl.BlockSpec((1, C, 1), lambda b, t: (b, 0, 0)),      # v
                pl.BlockSpec((1, C, 1), lambda b, t: (b, 0, 0)),      # channel weight
                pl.BlockSpec((1, 1, 1), lambda b, t: (b, 0, 0)),      # const
            ],
            out_specs=pl.BlockSpec((1, C, TH), lambda b, t: (b, 0, t)),
        ),
        compiler_params=pltpu.CompilerParams(
            dimension_semantics=("parallel", "parallel"),
            vmem_limit_bytes=limit),
    )(x, v[..., None].astype(f32), cw[..., None].astype(f32),
      const[:, None, None].astype(f32))
    return out.reshape(B, C, H, W)


# ------------------------------ pure-JAX reference ------------------------------
def reference_forward(x, p):
    b, c, h, w = x.shape
    conv1x1 = lambda t, W, bias: (
        jnp.einsum('bchw,oc->bohw', t, W, precision=_HI)
        + bias[None, :, None, None])

    channel_wv = conv1x1(x, p["ch_wv_w"], p["ch_wv_b"]).reshape(b, c // 2, -1)
    channel_wq = conv1x1(x, p["ch_wq_w"], p["ch_wq_b"]).reshape(b, -1, 1)
    channel_wq = jax.nn.softmax(channel_wq, axis=1)
    channel_wz = jnp.matmul(channel_wv, channel_wq, precision=_HI)[..., None]
    z = conv1x1(channel_wz, p["ch_wz_w"], p["ch_wz_b"]).reshape(b, c, 1)
    z = jnp.transpose(z, (0, 2, 1))
    mu = jnp.mean(z, axis=-1, keepdims=True)
    var = jnp.mean((z - mu) ** 2, axis=-1, keepdims=True)
    z = (z - mu) / jnp.sqrt(var + 1e-5) * p["ln_g"] + p["ln_b"]
    channel_weight = jax.nn.sigmoid(z).transpose(0, 2, 1).reshape(b, c, 1, 1)
    channel_out = channel_weight * x

    spatial_wv = conv1x1(channel_out, p["sp_wv_w"], p["sp_wv_b"])
    spatial_wq = conv1x1(channel_out, p["sp_wq_w"], p["sp_wq_b"])
    spatial_wq = jnp.mean(spatial_wq, axis=(2, 3), keepdims=True)     # AdaptiveAvgPool2d
    spatial_wv = spatial_wv.reshape(b, c // 2, -1)
    spatial_wq = jnp.transpose(spatial_wq, (0, 2, 3, 1)).reshape(b, 1, c // 2)
    spatial_wq = jax.nn.softmax(spatial_wq, axis=-1)
    spatial_wz = jnp.matmul(spatial_wq, spatial_wv, precision=_HI)
    spatial_weight = jax.nn.sigmoid(spatial_wz.reshape(b, 1, h, w))
    return spatial_weight * channel_out


def make_params(key, C):
    C2 = C // 2
    ks = jax.random.split(key, 12)
    init_w = lambda k, o, i: 0.1 * jax.random.normal(k, (o, i), dtype=jnp.float32)
    init_b = lambda k, n: 0.1 * jax.random.normal(k, (n,), dtype=jnp.float32)
    return {
        "ch_wv_w": init_w(ks[0], C2, C),  "ch_wv_b": init_b(ks[1], C2),
        "ch_wq_w": init_w(ks[2], 1, C),   "ch_wq_b": init_b(ks[3], 1),
        "ch_wz_w": init_w(ks[4], C, C2),  "ch_wz_b": init_b(ks[5], C),
        "ln_g": 1.0 + 0.1 * jax.random.normal(ks[6], (C,), dtype=jnp.float32),
        "ln_b": init_b(ks[7], C),
        "sp_wv_w": init_w(ks[8], C2, C),  "sp_wv_b": init_b(ks[9], C2),
        "sp_wq_w": init_w(ks[10], C2, C), "sp_wq_b": init_b(ks[11], C2),
    }


if __name__ == "__main__":
    key = jax.random.PRNGKey(0)
    k_p64, k_p32, k_a, k_b, k_c = jax.random.split(key, 5)

    fwd = jax.jit(polarized_self_attention,
                  static_argnames=("force_two_pass", "tile_hw"))

    # --- A: fused single-kernel path (typical small feature map) ---
    p64 = make_params(k_p64, 64)
    xa = jax.random.normal(k_a, (2, 64, 16, 16), dtype=jnp.float32)
    out_a = jax.block_until_ready(fwd(xa, p64))
    ref_a = jax.block_until_ready(reference_forward(xa, p64))
    assert out_a.shape == xa.shape
    err_a = float(jnp.max(jnp.abs(out_a - ref_a)))
    assert jnp.allclose(out_a, ref_a, atol=1e-4, rtol=1e-4), err_a

    # --- B: fused path with a non-128-aligned spatial extent (14x14) ---
    p32 = make_params(k_p32, 32)
    xb = jax.random.normal(k_b, (1, 32, 14, 14), dtype=jnp.float32)
    out_b = jax.block_until_ready(fwd(xb, p32))
    ref_b = jax.block_until_ready(reference_forward(xb, p32))
    err_b = float(jnp.max(jnp.abs(out_b - ref_b)))
    assert jnp.allclose(out_b, ref_b, atol=1e-4, rtol=1e-4), err_b

    # --- C: forced two-pass streaming fallback, multi-tile with masked last tile ---
    xc = jax.random.normal(k_c, (2, 64, 18, 14), dtype=jnp.float32)   # HW = 252
    out_c = jax.block_until_ready(fwd(xc, p64, force_two_pass=True, tile_hw=128))
    ref_c = jax.block_until_ready(reference_forward(xc, p64))
    err_c = float(jnp.max(jnp.abs(out_c - ref_c)))
    assert jnp.allclose(out_c, ref_c, atol=1e-4, rtol=1e-4), err_c

    print("KERNEL_OK")
</pallas_src>

<mosaic_0001>
module attributes {stable_mosaic.version = 11 : i64} {
  func.func @_psa_fused_kernel(%arg0: i32, %arg1: memref<1x64x256xf32, #tpu.memory_space<vmem>>, %arg2: memref<1x64xf32, #tpu.memory_space<vmem>>, %arg3: memref<32x64xf32, #tpu.memory_space<vmem>>, %arg4: memref<64x32xf32, #tpu.memory_space<vmem>>, %arg5: memref<32x64xf32, #tpu.memory_space<vmem>>, %arg6: memref<64x32xf32, #tpu.memory_space<vmem>>, %arg7: memref<64x3xf32, #tpu.memory_space<vmem>>, %arg8: memref<32x3xf32, #tpu.memory_space<vmem>>, %arg9: memref<1x64x256xf32, #tpu.memory_space<vmem>>) attributes {dimension_semantics = [#tpu.dimension_semantics<parallel>], iteration_bounds = array<i64: 2>, scalar_prefetch = 0 : i64, scratch_operands = 0 : i64, tpu.core_type = #tpu.core_type<tc>, window_params = [{transform_indices = @transform_0, window_bounds = array<i64: 1, 64, 256>}, {pipeline_mode = #tpu.pipeline_mode<synchronous>, transform_indices = @transform_1, window_bounds = array<i64: 1, 64>}, {pipeline_mode = #tpu.pipeline_mode<synchronous>, transform_indices = @transform_2, window_bounds = array<i64: 32, 64>}, {pipeline_mode = #tpu.pipeline_mode<synchronous>, transform_indices = @transform_3, window_bounds = array<i64: 64, 32>}, {pipeline_mode = #tpu.pipeline_mode<synchronous>, transform_indices = @transform_4, window_bounds = array<i64: 32, 64>}, {pipeline_mode = #tpu.pipeline_mode<synchronous>, transform_indices = @transform_5, window_bounds = array<i64: 64, 32>}, {pipeline_mode = #tpu.pipeline_mode<synchronous>, transform_indices = @transform_6, window_bounds = array<i64: 64, 3>}, {pipeline_mode = #tpu.pipeline_mode<synchronous>, transform_indices = @transform_7, window_bounds = array<i64: 32, 3>}, {transform_indices = @transform_8, window_bounds = array<i64: 1, 64, 256>}]} {
    %c0 = arith.constant 0 : index
    %c0_0 = arith.constant 0 : index
    %c0_1 = arith.constant 0 : index
    %0 = vector.load %arg1[%c0, %c0_0, %c0_1] : memref<1x64x256xf32, #tpu.memory_space<vmem>>, vector<1x64x256xf32>
    %1 = vector.shape_cast %0 : vector<1x64x256xf32> to vector<64x256xf32>
    %c0_2 = arith.constant 0 : index
    %c0_3 = arith.constant 0 : index
    %2 = vector.load %arg2[%c0_2, %c0_3] : memref<1x64xf32, #tpu.memory_space<vmem>>, vector<1x64xf32>
    %cst = arith.constant dense<0.000000e+00> : vector<1x256xf32>
    %3 = tpu.matmul %2, %1, %cst {dimension_numbers = #tpu.dot_dimension_numbers<[1], [0], [0], [1], [0, 0, 1, 1], [], []>, precision = #tpu.contract_precision<fp32>} : vector<1x64xf32>, vector<64x256xf32>, vector<1x256xf32> -> vector<1x256xf32>
    %cst_4 = arith.constant dense<0xFF800000> : vector<1xf32>
    %4 = vector.multi_reduction <maximumf>, %3, %cst_4 [1] : vector<1x256xf32> to vector<1xf32>
    %5 = vector.shape_cast %4 : vector<1xf32> to vector<1x1xf32>
    %6 = vector.broadcast %5 : vector<1x1xf32> to vector<1x256xf32>
    %7 = arith.subf %3, %6 : vector<1x256xf32>
    %8 = math.exp %7 : vector<1x256xf32>
    %cst_5 = arith.constant dense<0.000000e+00> : vector<1xf32>
    %9 = vector.multi_reduction <add>, %8, %cst_5 [1] : vector<1x256xf32> to vector<1xf32>
    %10 = vector.shape_cast %9 : vector<1xf32> to vector<1x1xf32>
    %11 = vector.broadcast %8 : vector<1x256xf32> to vector<64x256xf32>
    %12 = arith.mulf %1, %11 : vector<64x256xf32>
    %cst_6 = arith.constant dense<0.000000e+00> : vector<64xf32>
    %13 = vector.multi_reduction <add>, %12, %cst_6 [1] : vector<64x256xf32> to vector<64xf32>
    %14 = vector.shape_cast %13 : vector<64xf32> to vector<64x1xf32>
    %15 = vector.broadcast %10 : vector<1x1xf32> to vector<64x1xf32>
    %16 = arith.divf %14, %15 : vector<64x1xf32>
    %cst_7 = arith.constant dense<0.000000e+00> : vector<64xf32>
    %17 = vector.multi_reduction <add>, %1, %cst_7 [1] : vector<64x256xf32> to vector<64xf32>
    %18 = vector.shape_cast %17 : vector<64xf32> to vector<64x1xf32>
    %cst_8 = arith.constant 3.906250e-03 : f32
    %19 = vector.broadcast %cst_8 : f32 to vector<64x1xf32>
    %20 = arith.mulf %18, %19 : vector<64x1xf32>
    %c0_9 = arith.constant 0 : index
    %c0_10 = arith.constant 0 : index
    %21 = vector.load %arg3[%c0_9, %c0_10] : memref<32x64xf32, #tpu.memory_space<vmem>>, vector<32x64xf32>
    %cst_11 = arith.constant dense<0.000000e+00> : vector<32x1xf32>
    %22 = tpu.matmul %21, %16, %cst_11 {dimension_numbers = #tpu.dot_dimension_numbers<[1], [0], [0], [1], [0, 0, 1, 1], [], []>, precision = #tpu.contract_precision<fp32>} : vector<32x64xf32>, vector<64x1xf32>, vector<32x1xf32> -> vector<32x1xf32>
    %c0_12 = arith.constant 0 : index
    %c0_13 = arith.constant 0 : index
    %23 = vector.load %arg8[%c0_12, %c0_13] : memref<32x3xf32, #tpu.memory_space<vmem>>, vector<32x1xf32>
    %24 = arith.addf %22, %23 : vector<32x1xf32>
    %c0_14 = arith.constant 0 : index
    %c0_15 = arith.constant 0 : index
    %25 = vector.load %arg4[%c0_14, %c0_15] : memref<64x32xf32, #tpu.memory_space<vmem>>, vector<64x32xf32>
    %cst_16 = arith.constant dense<0.000000e+00> : vector<64x1xf32>
    %26 = tpu.matmul %25, %24, %cst_16 {dimension_numbers = #tpu.dot_dimension_numbers<[1], [0], [0], [1], [0, 0, 1, 1], [], []>, precision = #tpu.contract_precision<fp32>} : vector<64x32xf32>, vector<32x1xf32>, vector<64x1xf32> -> vector<64x1xf32>
    %c0_17 = arith.constant 0 : index
    %c0_18 = arith.constant 0 : index
    %27 = vector.load %arg7[%c0_17, %c0_18] : memref<64x3xf32, #tpu.memory_space<vmem>>, vector<64x1xf32>
    %28 = arith.addf %26, %27 : vector<64x1xf32>
    %cst_19 = arith.constant dense<0.000000e+00> : vector<1xf32>
    %29 = vector.multi_reduction <add>, %28, %cst_19 [0] : vector<64x1xf32> to vector<1xf32>
    %30 = vector.shape_cast %29 : vector<1xf32> to vector<1x1xf32>
    %cst_20 = arith.constant 6.400000e+01 : f32
    %31 = vector.broadcast %cst_20 : f32 to vector<1x1xf32>
    %32 = arith.divf %30, %31 : vector<1x1xf32>
    %33 = vector.broadcast %32 : vector<1x1xf32> to vector<64x1xf32>
    %34 = arith.subf %28, %33 : vector<64x1xf32>
    %35 = arith.mulf %34, %34 : vector<64x1xf32>
    %cst_21 = arith.constant dense<0.000000e+00> : vector<1xf32>
    %36 = vector.multi_reduction <add>, %35, %cst_21 [0] : vector<64x1xf32> to vector<1xf32>
    %37 = vector.shape_cast %36 : vector<1xf32> to vector<1x1xf32>
    %cst_22 = arith.constant 6.400000e+01 : f32
    %38 = vector.broadcast %cst_22 : f32 to vector<1x1xf32>
    %39 = arith.divf %37, %38 : vector<1x1xf32>
    %40 = vector.broadcast %32 : vector<1x1xf32> to vector<64x1xf32>
    %41 = arith.subf %28, %40 : vector<64x1xf32>
    %cst_23 = arith.constant 9.99999974E-6 : f32
    %42 = vector.broadcast %cst_23 : f32 to vector<1x1xf32>
    %43 = arith.addf %39, %42 : vector<1x1xf32>
    %44 = math.rsqrt %43 : vector<1x1xf32>
    %45 = vector.broadcast %44 : vector<1x1xf32> to vector<64x1xf32>
    %46 = arith.mulf %41, %45 : vector<64x1xf32>
    %c0_24 = arith.constant 0 : index
    %c1 = arith.constant 1 : index
    %47 = vector.load %arg7[%c0_24, %c1] : memref<64x3xf32, #tpu.memory_space<vmem>>, vector<64x1xf32>
    %48 = arith.mulf %46, %47 : vector<64x1xf32>
    %c0_25 = arith.constant 0 : index
    %c2 = arith.constant 2 : index
    %49 = vector.load %arg7[%c0_25, %c2] : memref<64x3xf32, #tpu.memory_space<vmem>>, vector<64x1xf32>
    %50 = arith.addf %48, %49 : vector<64x1xf32>
    %51 = arith.negf %50 : vector<64x1xf32>
    %52 = math.exp %51 : vector<64x1xf32>
    %cst_26 = arith.constant 1.000000e+00 : f32
    %53 = vector.broadcast %cst_26 : f32 to vector<64x1xf32>
    %54 = arith.addf %53, %52 : vector<64x1xf32>
    %55 = arith.divf %53, %54 : vector<64x1xf32>
    %c0_27 = arith.constant 0 : index
    %c0_28 = arith.constant 0 : index
    %56 = vector.load %arg5[%c0_27, %c0_28] : memref<32x64xf32, #tpu.memory_space<vmem>>, vector<32x64xf32>
    %57 = arith.mulf %55, %20 : vector<64x1xf32>
    %cst_29 = arith.constant dense<0.000000e+00> : vector<32x1xf32>
    %58 = tpu.matmul %56, %57, %cst_29 {dimension_numbers = #tpu.dot_dimension_numbers<[1], [0], [0], [1], [0, 0, 1, 1], [], []>, precision = #tpu.contract_precision<fp32>} : vector<32x64xf32>, vector<64x1xf32>, vector<32x1xf32> -> vector<32x1xf32>
    %c0_30 = arith.constant 0 : index
    %c1_31 = arith.constant 1 : index
    %59 = vector.load %arg8[%c0_30, %c1_31] : memref<32x3xf32, #tpu.memory_space<vmem>>, vector<32x1xf32>
    %60 = arith.addf %58, %59 : vector<32x1xf32>
    %cst_32 = arith.constant dense<0xFF800000> : vector<1xf32>
    %61 = vector.multi_reduction <maximumf>, %60, %cst_32 [0] : vector<32x1xf32> to vector<1xf32>
    %62 = vector.shape_cast %61 : vector<1xf32> to vector<1x1xf32>
    %63 = vector.broadcast %62 : vector<1x1xf32> to vector<32x1xf32>
    %64 = arith.subf %60, %63 : vector<32x1xf32>
    %65 = math.exp %64 : vector<32x1xf32>
    %cst_33 = arith.constant dense<0.000000e+00> : vector<1xf32>
    %66 = vector.multi_reduction <add>, %65, %cst_33 [0] : vector<32x1xf32> to vector<1xf32>
    %67 = vector.shape_cast %66 : vector<1xf32> to vector<1x1xf32>
    %68 = vector.broadcast %67 : vector<1x1xf32> to vector<32x1xf32>
    %69 = arith.divf %65, %68 : vector<32x1xf32>
    %c0_34 = arith.constant 0 : index
    %c0_35 = arith.constant 0 : index
    %70 = vector.load %arg6[%c0_34, %c0_35] : memref<64x32xf32, #tpu.memory_space<vmem>>, vector<64x32xf32>
    %cst_36 = arith.constant dense<0.000000e+00> : vector<64x1xf32>
    %71 = tpu.matmul %70, %69, %cst_36 {dimension_numbers = #tpu.dot_dimension_numbers<[1], [0], [0], [1], [0, 0, 1, 1], [], []>, precision = #tpu.contract_precision<fp32>} : vector<64x32xf32>, vector<32x1xf32>, vector<64x1xf32> -> vector<64x1xf32>
    %72 = arith.mulf %55, %71 : vector<64x1xf32>
    %c0_37 = arith.constant 0 : index
    %c2_38 = arith.constant 2 : index
    %73 = vector.load %arg8[%c0_37, %c2_38] : memref<32x3xf32, #tpu.memory_space<vmem>>, vector<32x1xf32>
    %74 = arith.mulf %69, %73 : vector<32x1xf32>
    %cst_39 = arith.constant dense<0.000000e+00> : vector<1xf32>
    %75 = vector.multi_reduction <add>, %74, %cst_39 [0] : vector<32x1xf32> to vector<1xf32>
    %76 = vector.shape_cast %75 : vector<1xf32> to vector<1x1xf32>
    %77 = vector.broadcast %72 : vector<64x1xf32> to vector<64x256xf32>
    %78 = arith.mulf %77, %1 : vector<64x256xf32>
    %cst_40 = arith.constant dense<0.000000e+00> : vector<256xf32>
    %79 = vector.multi_reduction <add>, %78, %cst_40 [0] : vector<64x256xf32> to vector<256xf32>
    %80 = vector.shape_cast %79 : vector<256xf32> to vector<1x256xf32>
    %81 = vector.broadcast %76 : vector<1x1xf32> to vector<1x256xf32>
    %82 = arith.addf %80, %81 : vector<1x256xf32>
    %83 = arith.negf %82 : vector<1x256xf32>
    %84 = math.exp %83 : vector<1x256xf32>
    %cst_41 = arith.constant 1.000000e+00 : f32
    %85 = vector.broadcast %cst_41 : f32 to vector<1x256xf32>
    %86 = arith.addf %85, %84 : vector<1x256xf32>
    %87 = arith.divf %85, %86 : vector<1x256xf32>
    %88 = vector.broadcast %55 : vector<64x1xf32> to vector<64x256xf32>
    %89 = arith.mulf %88, %1 : vector<64x256xf32>
    %90 = vector.broadcast %87 : vector<1x256xf32> to vector<64x256xf32>
    %91 = arith.mulf %90, %89 : vector<64x256xf32>
    %c0_42 = arith.constant 0 : index
    %c0_43 = arith.constant 0 : index
    %c0_44 = arith.constant 0 : index
    %92 = vector.load %arg9[%c0_42, %c0_43, %c0_44] : memref<1x64x256xf32, #tpu.memory_space<vmem>>, vector<1x64x256xf32>
    %93 = vector.shape_cast %92 : vector<1x64x256xf32> to vector<64x256xf32>
    %94 = vector.shape_cast %91 : vector<64x256xf32> to vector<1x64x256xf32>
    tpu.vector_store %arg9[%c0_42, %c0_43, %c0_44], %94 {strides = array<i32>} : memref<1x64x256xf32, #tpu.memory_space<vmem>>, vector<1x64x256xf32>,
    return
  }
  func.func @transform_0(%arg0: i32) -> (i32, i32, i32) {
    %c0_i32 = arith.constant 0 : i32
    %c0_i32_0 = arith.constant 0 : i32
    %c0_i32_1 = arith.constant 0 : i32
    return %arg0, %c0_i32, %c0_i32_0 : i32, i32, i32
  }
  func.func @transform_1(%arg0: i32) -> (i32, i32) {
    %c0_i32 = arith.constant 0 : i32
    %c0_i32_0 = arith.constant 0 : i32
    %c0_i32_1 = arith.constant 0 : i32
    return %c0_i32, %c0_i32_0 : i32, i32
  }
  func.func @transform_2(%arg0: i32) -> (i32, i32) {
    %c0_i32 = arith.constant 0 : i32
    %c0_i32_0 = arith.constant 0 : i32
    %c0_i32_1 = arith.constant 0 : i32
    return %c0_i32, %c0_i32_0 : i32, i32
  }
  func.func @transform_3(%arg0: i32) -> (i32, i32) {
    %c0_i32 = arith.constant 0 : i32
    %c0_i32_0 = arith.constant 0 : i32
    %c0_i32_1 = arith.constant 0 : i32
    return %c0_i32, %c0_i32_0 : i32, i32
  }
  func.func @transform_4(%arg0: i32) -> (i32, i32) {
    %c0_i32 = arith.constant 0 : i32
    %c0_i32_0 = arith.constant 0 : i32
    %c0_i32_1 = arith.constant 0 : i32
    return %c0_i32, %c0_i32_0 : i32, i32
  }
  func.func @transform_5(%arg0: i32) -> (i32, i32) {
    %c0_i32 = arith.constant 0 : i32
    %c0_i32_0 = arith.constant 0 : i32
    %c0_i32_1 = arith.constant 0 : i32
    return %c0_i32, %c0_i32_0 : i32, i32
  }
  func.func @transform_6(%arg0: i32) -> (i32, i32) {
    %c0_i32 = arith.constant 0 : i32
    %c0_i32_0 = arith.constant 0 : i32
    %c0_i32_1 = arith.constant 0 : i32
    return %c0_i32, %c0_i32_0 : i32, i32
  }
  func.func @transform_7(%arg0: i32) -> (i32, i32) {
    %c0_i32 = arith.constant 0 : i32
    %c0_i32_0 = arith.constant 0 : i32
    %c0_i32_1 = arith.constant 0 : i32
    return %c0_i32, %c0_i32_0 : i32, i32
  }
  func.func @transform_8(%arg0: i32) -> (i32, i32, i32) {
    %c0_i32 = arith.constant 0 : i32
    %c0_i32_0 = arith.constant 0 : i32
    %c0_i32_1 = arith.constant 0 : i32
    return %arg0, %c0_i32, %c0_i32_0 : i32, i32, i32
  }
}

</mosaic_0001>

<llo_original>
// kernel: polarized_self_attention.1
$region0: #{polarized_self_attention.1}
  #allocation0 [shape = 'u32[]', space=smem, size = 0x4, offset = 0x4, fixed_abs, tag = 'smem constant byte address 0x4 - core index']
  #allocation1 [shape = 'u32[144,128]{1,0:T(1,128)}', space=vmem, size = 0x12000, scoped, tag = 'internal scratch']
  %s0 = inlined_call_operand.vmem [shape: f32[2,64,256], index: 0, kind: input, shape index: {}]
  %s1 = inlined_call_operand.vmem [shape: f32[1,64], index: 1, kind: input, shape index: {}]
  %s2 = inlined_call_operand.vmem [shape: f32[32,64], index: 2, kind: input, shape index: {}]
  %s3 = inlined_call_operand.vmem [shape: f32[64,32], index: 3, kind: input, shape index: {}]
  %s4 = inlined_call_operand.vmem [shape: f32[32,64], index: 4, kind: input, shape index: {}]
  %s5 = inlined_call_operand.vmem [shape: f32[64,32], index: 5, kind: input, shape index: {}]
  %s6 = inlined_call_operand.vmem [shape: f32[64,3], index: 6, kind: input, shape index: {}]
  %s7 = inlined_call_operand.vmem [shape: f32[32,3], index: 7, kind: input, shape index: {}]
  %s8 = inlined_call_operand.vmem [shape: f32[2,64,256], index: 8, kind: output, shape index: {}]
  %s9 = sld [smem:[#allocation0]]
  $region65: #{polarized_self_attention.1} parent=0
    _
  %s11 = ssub.s32 1, %s9
  %s12 = scalar_select 0, %s11, %s9
  loop: start=0, step=1, limit=4
  $region2: #{polarized_self_attention.1} parent=0 // loop_pre_header
    _
  $region3: #{polarized_self_attention.1} parent=0 // loop_header
    %s14 = sphi 0, %s18
    %p15 = scmp.ge.s32.totalorder %s14, 4
    %s24 = sphi 0, %s26
    %s27 = sphi 0, %s24
    %s28 = sphi 0, %s27
    %s44 = sphi 0, %s28
    %s48 = sphi 0, %s48
    %s50 = sphi 0, %s48
    %s51 = sphi 0, %s50
    %s65 = sphi 0, %s51
    %s69 = sphi 0, %s69
    %s71 = sphi 0, %s69
    %s72 = sphi 0, %s71
    %s86 = sphi 0, %s72
    %s90 = sphi 0, %s90
    %s92 = sphi 0, %s90
    %s93 = sphi 0, %s92
    %s107 = sphi 0, %s93
    %s111 = sphi 0, %s111
    %s113 = sphi 0, %s111
    %s114 = sphi 0, %s113
    %s128 = sphi 0, %s114
    %s132 = sphi 0, %s132
    %s134 = sphi 0, %s132
    %s135 = sphi 0, %s134
    %s149 = sphi 0, %s135
    %s153 = sphi 0, %s153
    %s155 = sphi 0, %s153
    %s156 = sphi 0, %s155
    %s170 = sphi 0, %s156
    %s174 = sphi 0, %s174
    %s176 = sphi 0, %s174
    %s177 = sphi 0, %s176
    %s191 = sphi 0, %s177
    %s197 = sphi 0, %s199
    %s200 = sphi 0, %s197
    %s201 = sphi 0, %s200
    %s217 = sphi 0, %s201
  $region4: #{polarized_self_attention.1} parent=0 // loop_header_branch
    %17 = sbr.rel (%p15) target = $region8
  $region5: #{polarized_self_attention.1} parent=0 // loop_body
    %s19 = ssub.s32 %s14, 1
    %s20 = ssub.s32 %s14, 2
    %s21 = sadd.s32 %s14, 1
    %s22 = ssub.s32 %s14, %s21
    %p23 = scmp.eq.s32.totalorder %s22, 0
    %s25 = sadd.s32 %s24, 1
    %s26 = scalar_select %p23, %s24, %s25
    %p29 = pneg %p23
    %p30 = scmp.eq.s32.totalorder %s14, 1
    %p31 = por %p29, %p30
    %p32 = scmp.ne.s32.totalorder %s24, %s27
    %p33 = scmp.eq.s32.totalorder %s14, 0
    %p34 = por %p32, %p33
    %p35 = scmp.ne.s32.totalorder %s24, %s27
    %p36 = scmp.eq.s32.totalorder %s19, 1
    %p37 = por %p35, %p36
    %p38 = scmp.ne.s32.totalorder %s27, %s28
    %p39 = scmp.eq.s32.totalorder %s19, 0
    %p40 = por %p38, %p39
    %p41 = scmp.ne.s32.totalorder %s27, %s28
    %p42 = scmp.eq.s32.totalorder %s20, 1
    %p43 = por %p41, %p42
    %p45 = scmp.ne.s32.totalorder %s28, %s44
    %p46 = scmp.eq.s32.totalorder %s20, 0
    %p47 = por %p45, %p46
    %s49 = sadd.s32 %s48, 1
    %p52 = scmp.eq.s32.totalorder %s14, 1
    %p53 = scmp.ne.s32.totalorder %s48, %s50
    %p54 = scmp.eq.s32.totalorder %s14, 0
    %p55 = por %p53, %p54
    %p56 = scmp.ne.s32.totalorder %s48, %s50
    %p57 = scmp.eq.s32.totalorder %s19, 1
    %p58 = por %p56, %p57
    %p59 = scmp.ne.s32.totalorder %s50, %s51
    %p60 = scmp.eq.s32.totalorder %s19, 0
    %p61 = por %p59, %p60
    %p62 = scmp.ne.s32.totalorder %s50, %s51
    %p63 = scmp.eq.s32.totalorder %s20, 1
    %p64 = por %p62, %p63
    %p66 = scmp.ne.s32.totalorder %s51, %s65
    %p67 = scmp.eq.s32.totalorder %s20, 0
    %p68 = por %p66, %p67
    %s70 = sadd.s32 %s69, 1
    %p73 = scmp.eq.s32.totalorder %s14, 1
    %p74 = scmp.ne.s32.totalorder %s69, %s71
    %p75 = scmp.eq.s32.totalorder %s14, 0
    %p76 = por %p74, %p75
    %p77 = scmp.ne.s32.totalorder %s69, %s71
    %p78 = scmp.eq.s32.totalorder %s19, 1
    %p79 = por %p77, %p78
    %p80 = scmp.ne.s32.totalorder %s71, %s72
    %p81 = scmp.eq.s32.totalorder %s19, 0
    %p82 = por %p80, %p81
    %p83 = scmp.ne.s32.totalorder %s71, %s72
    %p84 = scmp.eq.s32.totalorder %s20, 1
    %p85 = por %p83, %p84
    %p87 = scmp.ne.s32.totalorder %s72, %s86
    %p88 = scmp.eq.s32.totalorder %s20, 0
    %p89 = por %p87, %p88
    %s91 = sadd.s32 %s90, 1
    %p94 = scmp.eq.s32.totalorder %s14, 1
    %p95 = scmp.ne.s32.totalorder %s90, %s92
    %p96 = scmp.eq.s32.totalorder %s14, 0
    %p97 = por %p95, %p96
    %p98 = scmp.ne.s32.totalorder %s90, %s92
    %p99 = scmp.eq.s32.totalorder %s19, 1
    %p100 = por %p98, %p99
    %p101 = scmp.ne.s32.totalorder %s92, %s93
    %p102 = scmp.eq.s32.totalorder %s19, 0
    %p103 = por %p101, %p102
    %p104 = scmp.ne.s32.totalorder %s92, %s93
    %p105 = scmp.eq.s32.totalorder %s20, 1
    %p106 = por %p104, %p105
    %p108 = scmp.ne.s32.totalorder %s93, %s107
    %p109 = scmp.eq.s32.totalorder %s20, 0
    %p110 = por %p108, %p109
    %s112 = sadd.s32 %s111, 1
    %p115 = scmp.eq.s32.totalorder %s14, 1
    %p116 = scmp.ne.s32.totalorder %s111, %s113
    %p117 = scmp.eq.s32.totalorder %s14, 0
    %p118 = por %p116, %p117
    %p119 = scmp.ne.s32.totalorder %s111, %s113
    %p120 = scmp.eq.s32.totalorder %s19, 1
    %p121 = por %p119, %p120
    %p122 = scmp.ne.s32.totalorder %s113, %s114
    %p123 = scmp.eq.s32.totalorder %s19, 0
    %p124 = por %p122, %p123
    %p125 = scmp.ne.s32.totalorder %s113, %s114
    %p126 = scmp.eq.s32.totalorder %s20, 1
    %p127 = por %p125, %p126
    %p129 = scmp.ne.s32.totalorder %s114, %s128
    %p130 = scmp.eq.s32.totalorder %s20, 0
    %p131 = por %p129, %p130
    %s133 = sadd.s32 %s132, 1
    %p136 = scmp.eq.s32.totalorder %s14, 1
    %p137 = scmp.ne.s32.totalorder %s132, %s134
    %p138 = scmp.eq.s32.totalorder %s14, 0
    %p139 = por %p137, %p138
    %p140 = scmp.ne.s32.totalorder %s132, %s134
    %p141 = scmp.eq.s32.totalorder %s19, 1
    %p142 = por %p140, %p141
    %p143 = scmp.ne.s32.totalorder %s134, %s135
    %p144 = scmp.eq.s32.totalorder %s19, 0
    %p145 = por %p143, %p144
    %p146 = scmp.ne.s32.totalorder %s134, %s135
    %p147 = scmp.eq.s32.totalorder %s20, 1
    %p148 = por %p146, %p147
    %p150 = scmp.ne.s32.totalorder %s135, %s149
    %p151 = scmp.eq.s32.totalorder %s20, 0
    %p152 = por %p150, %p151
    %s154 = sadd.s32 %s153, 1
    %p157 = scmp.eq.s32.totalorder %s14, 1
    %p158 = scmp.ne.s32.totalorder %s153, %s155
    %p159 = scmp.eq.s32.totalorder %s14, 0
    %p160 = por %p158, %p159
    %p161 = scmp.ne.s32.totalorder %s153, %s155
    %p162 = scmp.eq.s32.totalorder %s19, 1
    %p163 = por %p161, %p162
    %p164 = scmp.ne.s32.totalorder %s155, %s156
    %p165 = scmp.eq.s32.totalorder %s19, 0
    %p166 = por %p164, %p165
    %p167 = scmp.ne.s32.totalorder %s155, %s156
    %p168 = scmp.eq.s32.totalorder %s20, 1
    %p169 = por %p167, %p168
    %p171 = scmp.ne.s32.totalorder %s156, %s170
    %p172 = scmp.eq.s32.totalorder %s20, 0
    %p173 = por %p171, %p172
    %s175 = sadd.s32 %s174, 1
    %p178 = scmp.eq.s32.totalorder %s14, 1
    %p179 = scmp.ne.s32.totalorder %s174, %s176
    %p180 = scmp.eq.s32.totalorder %s14, 0
    %p181 = por %p179, %p180
    %p182 = scmp.ne.s32.totalorder %s174, %s176
    %p183 = scmp.eq.s32.totalorder %s19, 1
    %p184 = por %p182, %p183
    %p185 = scmp.ne.s32.totalorder %s176, %s177
    %p186 = scmp.eq.s32.totalorder %s19, 0
    %p187 = por %p185, %p186
    %p188 = scmp.ne.s32.totalorder %s176, %s177
    %p189 = scmp.eq.s32.totalorder %s20, 1
    %p190 = por %p188, %p189
    %p192 = scmp.ne.s32.totalorder %s177, %s191
    %p193 = scmp.eq.s32.totalorder %s20, 0
    %p194 = por %p192, %p193
    %s195 = ssub.s32 %s14, %s21
    %p196 = scmp.eq.s32.totalorder %s195, 0
    %s198 = sadd.s32 %s197, 1
    %s199 = scalar_select %p196, %s197, %s198
    %p202 = pneg %p196
    %p203 = scmp.eq.s32.totalorder %s14, 1
    %p204 = por %p202, %p203
    %p205 = scmp.ne.s32.totalorder %s197, %s200
    %p206 = scmp.eq.s32.totalorder %s14, 0
    %p207 = por %p205, %p206
    %p208 = scmp.ne.s32.totalorder %s197, %s200
    %p209 = scmp.eq.s32.totalorder %s19, 1
    %p210 = por %p208, %p209
    %p211 = scmp.ne.s32.totalorder %s200, %s201
    %p212 = scmp.eq.s32.totalorder %s19, 0
    %p213 = por %p211, %p212
    %p214 = scmp.ne.s32.totalorder %s200, %s201
    %p215 = scmp.eq.s32.totalorder %s20, 1
    %p216 = por %p214, %p215
    %p218 = scmp.ne.s32.totalorder %s201, %s217
    %p219 = scmp.eq.s32.totalorder %s20, 0
    %p220 = por %p218, %p219
    %p221 = scmp.le.s32.totalorder 1, %s14
    %p222 = scmp.lt.s32.totalorder %s14, 3
    %p223 = pnand %p221, %p222
    %p224 = pneg %p223
    // Predicated region
    $region9: #{polarized_self_attention.1} parent=5 // pred_check
      _
    $region10: #{polarized_self_attention.1} parent=5 // pred_check_branch
      %226 = sbr.rel (%p223) target = $region12
    $region11: #{polarized_self_attention.1} parent=5 // pred_region
      %s227 = ssub.s32 %s14, 1
      // Predicated region
      $region13: #{polarized_self_attention.1} parent=11 // pred_check
        %p228 = pneg %p61
      $region14: #{polarized_self_attention.1} parent=11 // pred_check_branch
        %230 = sbr.rel (%p228) target = $region16
      $region15: #{polarized_self_attention.1} parent=11 // pred_region
        _
      $region16: #{polarized_self_attention.1} parent=11 // pred_fallthru
        _
      // Predicated region
      $region17: #{polarized_self_attention.1} parent=11 // pred_check
        %p231 = pneg %p82
      $region18: #{polarized_self_attention.1} parent=11 // pred_check_branch
        %233 = sbr.rel (%p231) target = $region20
      $region19: #{polarized_self_attention.1} parent=11 // pred_region
        _
      $region20: #{polarized_self_attention.1} parent=11 // pred_fallthru
        _
      // Predicated region
      $region21: #{polarized_self_attention.1} parent=11 // pred_check
        %p234 = pneg %p103
      $region22: #{polarized_self_attention.1} parent=11 // pred_check_branch
        %236 = sbr.rel (%p234) target = $region24
      $region23: #{polarized_self_attention.1} parent=11 // pred_region
        _
      $region24: #{polarized_self_attention.1} parent=11 // pred_fallthru
        _
      // Predicated region
      $region25: #{polarized_self_attention.1} parent=11 // pred_check
        %p237 = pneg %p124
      $region26: #{polarized_self_attention.1} parent=11 // pred_check_branch
        %239 = sbr.rel (%p237) target = $region28
      $region27: #{polarized_self_attention.1} parent=11 // pred_region
        _
      $region28: #{polarized_self_attention.1} parent=11 // pred_fallthru
        _
      // Predicated region
      $region29: #{polarized_self_attention.1} parent=11 // pred_check
        %p240 = pneg %p145
      $region30: #{polarized_self_attention.1} parent=11 // pred_check_branch
        %242 = sbr.rel (%p240) target = $region32
      $region31: #{polarized_self_attention.1} parent=11 // pred_region
        _
      $region32: #{polarized_self_attention.1} parent=11 // pred_fallthru
        _
      // Predicated region
      $region33: #{polarized_self_attention.1} parent=11 // pred_check
        %p243 = pneg %p166
      $region34: #{polarized_self_attention.1} parent=11 // pred_check_branch
        %245 = sbr.rel (%p243) target = $region36
      $region35: #{polarized_self_attention.1} parent=11 // pred_region
        _
      $region36: #{polarized_self_attention.1} parent=11 // pred_fallthru
        _
      // Predicated region
      $region37: #{polarized_self_attention.1} parent=11 // pred_check
        %p246 = pneg %p187
      $region38: #{polarized_self_attention.1} parent=11 // pred_check_branch
        %248 = sbr.rel (%p246) target = $region40
      $region39: #{polarized_self_attention.1} parent=11 // pred_region
        _
      $region40: #{polarized_self_attention.1} parent=11 // pred_fallthru
        _
    $region12: #{polarized_self_attention.1} parent=5 // pred_fallthru
      _
    %p249 = scmp.lt.s32.totalorder %s14, 2
    // Predicated region
    $region41: #{polarized_self_attention.1} parent=5 // pred_check
      %p250 = pneg %p249
    $region42: #{polarized_self_attention.1} parent=5 // pred_check_branch
      %252 = sbr.rel (%p250) target = $region44
    $region43: #{polarized_self_attention.1} parent=5 // pred_region
      // Predicated region
      $region45: #{polarized_self_attention.1} parent=43 // pred_check
        %p253 = pneg %p34
      $region46: #{polarized_self_attention.1} parent=43 // pred_check_branch
        %255 = sbr.rel (%p253) target = $region48
      $region47: #{polarized_self_attention.1} parent=43 // pred_region
        %p256 = scmp.lt.s32.totalorder %s14, 1
        %s257 = scalar_select %p256, %s14, 1
        %s258 = smul.addr %s257, 16
        %s259 = smul.addr %s258, 8
        %s260 = scalar_lea.vmem %s0, %s259
      $region48: #{polarized_self_attention.1} parent=43 // pred_fallthru
        _
    $region44: #{polarized_self_attention.1} parent=5 // pred_fallthru
      _
    %p261 = scmp.le.s32.totalorder 1, %s14
    %p262 = scmp.lt.s32.totalorder %s14, 3
    %p263 = pnand %p261, %p262
    %p264 = pneg %p263
    // Predicated region
    $region49: #{polarized_self_attention.1} parent=5 // pred_check
      _
    $region50: #{polarized_self_attention.1} parent=5 // pred_check_branch
      %266 = sbr.rel (%p263) target = $region52
    $region51: #{polarized_self_attention.1} parent=5 // pred_region
      %s267 = ssub.s32 %s14, 1
      %p268 = scmp.lt.s32.totalorder %s19, 1
      %s269 = scalar_select %p268, %s19, 1
      %s270 = smul.addr %s269, 16
      %s271 = smul.addr %s270, 8
      %s272 = scalar_lea.vmem %s0, %s271
      %p273 = pneg %p40
      %p274 = pneg %p37
      %p275 = pneg %p61
      %p276 = pneg %p58
      %p277 = pneg %p82
      %p278 = pneg %p79
      %p279 = pneg %p103
      %p280 = pneg %p100
      %p281 = pneg %p124
      %p282 = pneg %p121
      %p283 = pneg %p145
      %p284 = pneg %p142
      %p285 = pneg %p166
      %p286 = pneg %p163
      %p287 = pneg %p187
      %p288 = pneg %p184
      %p289 = pneg %p213
      %p290 = pneg %p210
      %p291 = scmp.lt.s32.totalorder %s19, 1
      %s292 = scalar_select %p291, %s19, 1
      %s293 = smul.addr %s292, 16
      %s294 = smul.addr %s293, 8
      %s295 = scalar_lea.vmem %s8, %s294
      %p296 = scmp.lt.s32.totalorder %s19, 1
      %s297 = scalar_select %p296, %s19, 1
      %s298 = smul.addr %s297, 16
      %s299 = smul.addr %s298, 8
      %s300 = scalar_lea.vmem %s0, %s299
      %p301 = scmp.lt.s32.totalorder %s19, 1
      %s302 = scalar_select %p301, %s19, 1
      %s303 = smul.addr %s302, 16
      %s304 = smul.addr %s303, 8
      %s305 = scalar_lea.vmem %s8, %s304
      %v306 = vld [vmem:[%s300] sm:$0xff]
      %v307 = vld [vmem:[%s300 + $0x8] sm:$0xff]
      %v308 = vld [vmem:[%s300 + $0x10] sm:$0xff]
      %v309 = vld [vmem:[%s300 + $0x18] sm:$0xff]
      %v310 = vld [vmem:[%s300 + $0x20] sm:$0xff]
      %v311 = vld [vmem:[%s300 + $0x28] sm:$0xff]
      %v312 = vld [vmem:[%s300 + $0x30] sm:$0xff]
      %v313 = vld [vmem:[%s300 + $0x38] sm:$0xff]
      %v314 = vld [vmem:[%s300 + $0x40] sm:$0xff]
      %v315 = vld [vmem:[%s300 + $0x48] sm:$0xff]
      %v316 = vld [vmem:[%s300 + $0x50] sm:$0xff]
      %v317 = vld [vmem:[%s300 + $0x58] sm:$0xff]
      %v318 = vld [vmem:[%s300 + $0x60] sm:$0xff]
      %v319 = vld [vmem:[%s300 + $0x68] sm:$0xff]
      %v320 = vld [vmem:[%s300 + $0x70] sm:$0xff]
      %v321 = vld [vmem:[%s300 + $0x78] sm:$0xff]
      %v322 = vld [vmem:[%s1] sm:$0x1]
      %vm323 = vcmask 523264
      %v325 = vsel %vm323, %v322, 0
      %v327 = vand.u32 %v307, 4294901760
      %328 = vmatprep.subr.mxu0 %v327
      %v329 = vand.u32 %v306, 4294901760
      %330 = vmatpush1.msra.mxu0 %v329
      %v331 = vand.u32 %v309, 4294901760
      %332 = vmatprep.subr.mxu0 %v331
      %v333 = vand.u32 %v308, 4294901760
      %334 = vmatpush1.msra.mxu0 %v333
      %v335 = vand.u32 %v311, 4294901760
      %336 = vmatprep.subr.mxu0 %v335
      %v337 = vand.u32 %v310, 4294901760
      %338 = vmatpush1.msra.mxu0 %v337
      %v339 = vand.u32 %v313, 4294901760
      %340 = vmatprep.subr.mxu0 %v339
      %v341 = vand.u32 %v312, 4294901760
      %342 = vmatpush1.msra.mxu0 %v341
      %v343 = vand.u32 %v315, 4294901760
      %344 = vmatprep.subr.mxu0 %v343
      %v345 = vand.u32 %v314, 4294901760
      %346 = vmatpush1.msra.mxu0 %v345
      %v347 = vand.u32 %v317, 4294901760
      %348 = vmatprep.subr.mxu0 %v347
      %v349 = vand.u32 %v316, 4294901760
      %350 = vmatpush1.msra.mxu0 %v349
      %v351 = vand.u32 %v319, 4294901760
      %352 = vmatprep.subr.mxu0 %v351
      %v353 = vand.u32 %v318, 4294901760
      %354 = vmatpush1.msra.mxu0 %v353
      %v355 = vand.u32 %v321, 4294901760
      %356 = vmatprep.subr.mxu0 %v355
      %v357 = vand.u32 %v320, 4294901760
      %358 = vmatpush1.msra.mxu0 %v357
      %359 = vmatprep.subr.mxu0 0.0
      %360 = vmatpush1.msra.mxu0 0.0
      %361 = vmatprep.subr.mxu0 0.0
      %362 = vmatpush1.msra.mxu0 0.0
      %363 = vmatprep.subr.mxu0 0.0
      %364 = vmatpush1.msra.mxu0 0.0
      %365 = vmatprep.subr.mxu0 0.0
      %366 = vmatpush1.msra.mxu0 0.0
      %367 = vmatprep.subr.mxu0 0.0
      %368 = vmatpush1.msra.mxu0 0.0
      %369 = vmatprep.subr.mxu0 0.0
      %370 = vmatpush1.msra.mxu0 0.0
      %371 = vmatprep.subr.mxu0 0.0
      %372 = vmatpush1.msra.mxu0 0.0
      %373 = vmatprep.subr.mxu0 0.0
      %374 = vmatpush1.msra.mxu0 0.0
      %375 = vmatprep.subr.mxu0 0.0
      %376 = vmatpush1.msra.mxu0 0.0
      %377 = vmatprep.subr.mxu0 0.0
      %378 = vmatpush1.msra.mxu0 0.0
      %379 = vmatprep.subr.mxu0 0.0
      %380 = vmatpush1.msra.mxu0 0.0
      %381 = vmatprep.subr.mxu0 0.0
      %382 = vmatpush1.msra.mxu0 0.0
      %383 = vmatprep.subr.mxu0 0.0
      %384 = vmatpush1.msra.mxu0 0.0
      %385 = vmatprep.subr.mxu0 0.0
      %386 = vmatpush1.msra.mxu0 0.0
      %387 = vmatprep.subr.mxu0 0.0
      %388 = vmatpush1.msra.mxu0 0.0
      %389 = vmatprep.subr.mxu0 0.0
      %390 = vmatpush1.msra.mxu0 0.0
      %391 = vmatprep.subr.mxu0 0.0
      %392 = vmatpush1.msra.mxu0 0.0
      %393 = vmatprep.subr.mxu0 0.0
      %394 = vmatpush1.msra.mxu0 0.0
      %395 = vmatprep.subr.mxu0 0.0
      %396 = vmatpush1.msra.mxu0 0.0
      %397 = vmatprep.subr.mxu0 0.0
      %398 = vmatpush1.msra.mxu0 0.0
      %399 = vmatprep.subr.mxu0 0.0
      %400 = vmatpush1.msra.mxu0 0.0
      %401 = vmatprep.subr.mxu0 0.0
      %402 = vmatpush1.msra.mxu0 0.0
      %403 = vmatprep.subr.mxu0 0.0
      %404 = vmatpush1.msra.mxu0 0.0
      %405 = vmatprep.subr.mxu0 0.0
      %406 = vmatpush1.msra.mxu0 0.0
      %407 = vmatprep.mubr.f32.mxu0 0.0
      %v408 = vand.u32 %v325, 4294901760
      %v409 = vsub.f32 %v325, %v408
      %v410 = vand.u32 %v409, 4294901760
      %v411 = vsub.f32 %v409, %v410
      %v412 = vand.u32 %v411, 4294901760
      %413 = vmatmul.mubr.f32.gmra.mrb[0].mxu0 %v412
      %v414 = vpop.f32.mrb[0].mxu0
      %v415 = vadd.f32 0.0, %v414
      %v416 = vpop.f32.mrb[0].mxu0
      %v417 = vadd.f32 0.0, %v416
      %418 = vdwg.mxu0
      %v419 = vand.u32 %v307, 4294901760
      %v420 = vsub.f32 %v307, %v419
      %v421 = vand.u32 %v420, 4294901760
      %v422 = vsub.f32 %v420, %v421
      %v423 = vand.u32 %v422, 4294901760
      %424 = vmatprep.subr.mxu0 %v423
      %v425 = vand.u32 %v306, 4294901760
      %v426 = vsub.f32 %v306, %v425
      %v427 = vand.u32 %v426, 4294901760
      %v428 = vsub.f32 %v426, %v427
      %v429 = vand.u32 %v428, 4294901760
      %430 = vmatpush1.msra.mxu0 %v429
      %v431 = vand.u32 %v309, 4294901760
      %v432 = vsub.f32 %v309, %v431
      %v433 = vand.u32 %v432, 4294901760
      %v434 = vsub.f32 %v432, %v433
      %v435 = vand.u32 %v434, 4294901760
      %436 = vmatprep.subr.mxu0 %v435
      %v437 = vand.u32 %v308, 4294901760
      %v438 = vsub.f32 %v308, %v437
      %v439 = vand.u32 %v438, 4294901760
      %v440 = vsub.f32 %v438, %v439
      %v441 = vand.u32 %v440, 4294901760
      %442 = vmatpush1.msra.mxu0 %v441
      %v443 = vand.u32 %v311, 4294901760
      %v444 = vsub.f32 %v311, %v443
      %v445 = vand.u32 %v444, 4294901760
      %v446 = vsub.f32 %v444, %v445
      %v447 = vand.u32 %v446, 4294901760
      %448 = vmatprep.subr.mxu0 %v447
      %v449 = vand.u32 %v310, 4294901760
      %v450 = vsub.f32 %v310, %v449
      %v451 = vand.u32 %v450, 4294901760
      %v452 = vsub.f32 %v450, %v451
      %v453 = vand.u32 %v452, 4294901760
      %454 = vmatpush1.msra.mxu0 %v453
      %v455 = vand.u32 %v313, 4294901760
      %v456 = vsub.f32 %v313, %v455
      %v457 = vand.u32 %v456, 4294901760
      %v458 = vsub.f32 %v456, %v457
      %v459 = vand.u32 %v458, 4294901760
      %460 = vmatprep.subr.mxu0 %v459
      %v461 = vand.u32 %v312, 4294901760
      %v462 = vsub.f32 %v312, %v461
      %v463 = vand.u32 %v462, 4294901760
      %v464 = vsub.f32 %v462, %v463
      %v465 = vand.u32 %v464, 4294901760
      %466 = vmatpush1.msra.mxu0 %v465
      %v467 = vand.u32 %v315, 4294901760
      %v468 = vsub.f32 %v315, %v467
      %v469 = vand.u32 %v468, 4294901760
      %v470 = vsub.f32 %v468, %v469
      %v471 = vand.u32 %v470, 4294901760
      %472 = vmatprep.subr.mxu0 %v471
      %v473 = vand.u32 %v314, 4294901760
      %v474 = vsub.f32 %v314, %v473
      %v475 = vand.u32 %v474, 4294901760
      %v476 = vsub.f32 %v474, %v475
      %v477 = vand.u32 %v476, 4294901760
      %478 = vmatpush1.msra.mxu0 %v477
      %v479 = vand.u32 %v317, 4294901760
      %v480 = vsub.f32 %v317, %v479
      %v481 = vand.u32 %v480, 4294901760
      %v482 = vsub.f32 %v480, %v481
      %v483 = vand.u32 %v482, 4294901760
      %484 = vmatprep.subr.mxu0 %v483
      %v485 = vand.u32 %v316, 4294901760
      %v486 = vsub.f32 %v316, %v485
      %v487 = vand.u32 %v486, 4294901760
      %v488 = vsub.f32 %v486, %v487
      %v489 = vand.u32 %v488, 4294901760
      %490 = vmatpush1.msra.mxu0 %v489
      %v491 = vand.u32 %v319, 4294901760
      %v492 = vsub.f32 %v319, %v491
      %v493 = vand.u32 %v492, 4294901760
      %v494 = vsub.f32 %v492, %v493
      %v495 = vand.u32 %v494, 4294901760
      %496 = vmatprep.subr.mxu0 %v495
      %v497 = vand.u32 %v318, 4294901760
      %v498 = vsub.f32 %v318, %v497
      %v499 = vand.u32 %v498, 4294901760
      %v500 = vsub.f32 %v498, %v499
      %v501 = vand.u32 %v500, 4294901760
      %502 = vmatpush1.msra.mxu0 %v501
      %v503 = vand.u32 %v321, 4294901760
      %v504 = vsub.f32 %v321, %v503
      %v505 = vand.u32 %v504, 4294901760
      %v506 = vsub.f32 %v504, %v505
      %v507 = vand.u32 %v506, 4294901760
      %508 = vmatprep.subr.mxu0 %v507
      %v509 = vand.u32 %v320, 4294901760
      %v510 = vsub.f32 %v320, %v509
      %v511 = vand.u32 %v510, 4294901760
      %v512 = vsub.f32 %v510, %v511
      %v513 = vand.u32 %v512, 4294901760
      %514 = vmatpush1.msra.mxu0 %v513
      %515 = vmatprep.subr.mxu0 0.0
      %516 = vmatpush1.msra.mxu0 0.0
      %517 = vmatprep.subr.mxu0 0.0
      %518 = vmatpush1.msra.mxu0 0.0
      %519 = vmatprep.subr.mxu0 0.0
      %520 = vmatpush1.msra.mxu0 0.0
      %521 = vmatprep.subr.mxu0 0.0
      %522 = vmatpush1.msra.mxu0 0.0
      %523 = vmatprep.subr.mxu0 0.0
      %524 = vmatpush1.msra.mxu0 0.0
      %525 = vmatprep.subr.mxu0 0.0
      %526 = vmatpush1.msra.mxu0 0.0
      %527 = vmatprep.subr.mxu0 0.0
      %528 = vmatpush1.msra.mxu0 0.0
      %529 = vmatprep.subr.mxu0 0.0
      %530 = vmatpush1.msra.mxu0 0.0
      %531 = vmatprep.subr.mxu0 0.0
      %532 = vmatpush1.msra.mxu0 0.0
      %533 = vmatprep.subr.mxu0 0.0
      %534 = vmatpush1.msra.mxu0 0.0
      %535 = vmatprep.subr.mxu0 0.0
      %536 = vmatpush1.msra.mxu0 0.0
      %537 = vmatprep.subr.mxu0 0.0
      %538 = vmatpush1.msra.mxu0 0.0
      %539 = vmatprep.subr.mxu0 0.0
      %540 = vmatpush1.msra.mxu0 0.0
      %541 = vmatprep.subr.mxu0 0.0
      %542 = vmatpush1.msra.mxu0 0.0
      %543 = vmatprep.subr.mxu0 0.0
      %544 = vmatpush1.msra.mxu0 0.0
      %545 = vmatprep.subr.mxu0 0.0
      %546 = vmatpush1.msra.mxu0 0.0
      %547 = vmatprep.subr.mxu0 0.0
      %548 = vmatpush1.msra.mxu0 0.0
      %549 = vmatprep.subr.mxu0 0.0
      %550 = vmatpush1.msra.mxu0 0.0
      %551 = vmatprep.subr.mxu0 0.0
      %552 = vmatpush1.msra.mxu0 0.0
      %553 = vmatprep.subr.mxu0 0.0
      %554 = vmatpush1.msra.mxu0 0.0
      %555 = vmatprep.subr.mxu0 0.0
      %556 = vmatpush1.msra.mxu0 0.0
      %557 = vmatprep.subr.mxu0 0.0
      %558 = vmatpush1.msra.mxu0 0.0
      %559 = vmatprep.subr.mxu0 0.0
      %560 = vmatpush1.msra.mxu0 0.0
      %561 = vmatprep.subr.mxu0 0.0
      %562 = vmatpush1.msra.mxu0 0.0
      %563 = vmatprep.mubr.f32.mxu0 0.0
      %v564 = vand.u32 %v325, 4294901760
      %565 = vmatmul.mubr.f32.gmra.mrb[0].mxu0 %v564
      %v566 = vpop.f32.mrb[0].mxu0
      %v567 = vadd.f32 %v415, %v566
      %v568 = vpop.f32.mrb[0].mxu0
      %v569 = vadd.f32 %v417, %v568
      %570 = vdwg.mxu0
      %v571 = vand.u32 %v307, 4294901760
      %v572 = vsub.f32 %v307, %v571
      %573 = vmatprep.subr.mxu0 %v572
      %v574 = vand.u32 %v306, 4294901760
      %v575 = vsub.f32 %v306, %v574
      %576 = vmatpush1.msra.mxu0 %v575
      %v577 = vand.u32 %v309, 4294901760
      %v578 = vsub.f32 %v309, %v577
      %579 = vmatprep.subr.mxu0 %v578
      %v580 = vand.u32 %v308, 4294901760
      %v581 = vsub.f32 %v308, %v580
      %582 = vmatpush1.msra.mxu0 %v581
      %v583 = vand.u32 %v311, 4294901760
      %v584 = vsub.f32 %v311, %v583
      %585 = vmatprep.subr.mxu0 %v584
      %v586 = vand.u32 %v310, 4294901760
      %v587 = vsub.f32 %v310, %v586
      %588 = vmatpush1.msra.mxu0 %v587
      %v589 = vand.u32 %v313, 4294901760
      %v590 = vsub.f32 %v313, %v589
      %591 = vmatprep.subr.mxu0 %v590
      %v592 = vand.u32 %v312, 4294901760
      %v593 = vsub.f32 %v312, %v592
      %594 = vmatpush1.msra.mxu0 %v593
      %v595 = vand.u32 %v315, 4294901760
      %v596 = vsub.f32 %v315, %v595
      %597 = vmatprep.subr.mxu0 %v596
      %v598 = vand.u32 %v314, 4294901760
      %v599 = vsub.f32 %v314, %v598
      %600 = vmatpush1.msra.mxu0 %v599
      %v601 = vand.u32 %v317, 4294901760
      %v602 = vsub.f32 %v317, %v601
      %603 = vmatprep.subr.mxu0 %v602
      %v604 = vand.u32 %v316, 4294901760
      %v605 = vsub.f32 %v316, %v604
      %606 = vmatpush1.msra.mxu0 %v605
      %v607 = vand.u32 %v319, 4294901760
      %v608 = vsub.f32 %v319, %v607
      %609 = vmatprep.subr.mxu0 %v608
      %v610 = vand.u32 %v318, 4294901760
      %v611 = vsub.f32 %v318, %v610
      %612 = vmatpush1.msra.mxu0 %v611
      %v613 = vand.u32 %v321, 4294901760
      %v614 = vsub.f32 %v321, %v613
      %615 = vmatprep.subr.mxu0 %v614
      %v616 = vand.u32 %v320, 4294901760
      %v617 = vsub.f32 %v320, %v616
      %618 = vmatpush1.msra.mxu0 %v617
      %619 = vmatprep.subr.mxu0 0.0
      %620 = vmatpush1.msra.mxu0 0.0
      %621 = vmatprep.subr.mxu0 0.0
      %622 = vmatpush1.msra.mxu0 0.0
      %623 = vmatprep.subr.mxu0 0.0
      %624 = vmatpush1.msra.mxu0 0.0
      %625 = vmatprep.subr.mxu0 0.0
      %626 = vmatpush1.msra.mxu0 0.0
      %627 = vmatprep.subr.mxu0 0.0
      %628 = vmatpush1.msra.mxu0 0.0
      %629 = vmatprep.subr.mxu0 0.0
      %630 = vmatpush1.msra.mxu0 0.0
      %631 = vmatprep.subr.mxu0 0.0
      %632 = vmatpush1.msra.mxu0 0.0
      %633 = vmatprep.subr.mxu0 0.0
      %634 = vmatpush1.msra.mxu0 0.0
      %635 = vmatprep.subr.mxu0 0.0
      %636 = vmatpush1.msra.mxu0 0.0
      %637 = vmatprep.subr.mxu0 0.0
      %638 = vmatpush1.msra.mxu0 0.0
      %639 = vmatprep.subr.mxu0 0.0
      %640 = vmatpush1.msra.mxu0 0.0
      %641 = vmatprep.subr.mxu0 0.0
      %642 = vmatpush1.msra.mxu0 0.0
      %643 = vmatprep.subr.mxu0 0.0
      %644 = vmatpush1.msra.mxu0 0.0
      %645 = vmatprep.subr.mxu0 0.0
      %646 = vmatpush1.msra.mxu0 0.0
      %647 = vmatprep.subr.mxu0 0.0
      %648 = vmatpush1.msra.mxu0 0.0
      %649 = vmatprep.subr.mxu0 0.0
      %650 = vmatpush1.msra.mxu0 0.0
      %651 = vmatprep.subr.mxu0 0.0
      %652 = vmatpush1.msra.mxu0 0.0
      %653 = vmatprep.subr.mxu0 0.0
      %654 = vmatpush1.msra.mxu0 0.0
      %655 = vmatprep.subr.mxu0 0.0
      %656 = vmatpush1.msra.mxu0 0.0
      %657 = vmatprep.subr.mxu0 0.0
      %658 = vmatpush1.msra.mxu0 0.0
      %659 = vmatprep.subr.mxu0 0.0
      %660 = vmatpush1.msra.mxu0 0.0
      %661 = vmatprep.subr.mxu0 0.0
      %662 = vmatpush1.msra.mxu0 0.0
      %663 = vmatprep.subr.mxu0 0.0
      %664 = vmatpush1.msra.mxu0 0.0
      %665 = vmatprep.subr.mxu0 0.0
      %666 = vmatpush1.msra.mxu0 0.0
      %667 = vmatprep.mubr.f32.mxu0 0.0
      %v668 = vand.u32 %v325, 4294901760
      %v669 = vsub.f32 %v325, %v668
      %670 = vmatmul.mubr.f32.gmra.mrb[0].mxu0 %v669
      %v671 = vpop.f32.mrb[0].mxu0
      %v672 = vadd.f32 %v567, %v671
      %v673 = vpop.f32.mrb[0].mxu0
      %v674 = vadd.f32 %v569, %v673
      %675 = vdwg.mxu0
      %v676 = vand.u32 %v307, 4294901760
      %677 = vmatprep.subr.mxu0 %v676
      %v678 = vand.u32 %v306, 4294901760
      %679 = vmatpush1.msra.mxu0 %v678
      %v680 = vand.u32 %v309, 4294901760
      %681 = vmatprep.subr.mxu0 %v680
      %v682 = vand.u32 %v308, 4294901760
      %683 = vmatpush1.msra.mxu0 %v682
      %v684 = vand.u32 %v311, 4294901760
      %685 = vmatprep.subr.mxu0 %v684
      %v686 = vand.u32 %v310, 4294901760
      %687 = vmatpush1.msra.mxu0 %v686
      %v688 = vand.u32 %v313, 4294901760
      %689 = vmatprep.subr.mxu0 %v688
      %v690 = vand.u32 %v312, 4294901760
      %691 = vmatpush1.msra.mxu0 %v690
      %v692 = vand.u32 %v315, 4294901760
      %693 = vmatprep.subr.mxu0 %v692
      %v694 = vand.u32 %v314, 4294901760
      %695 = vmatpush1.msra.mxu0 %v694
      %v696 = vand.u32 %v317, 4294901760
      %697 = vmatprep.subr.mxu0 %v696
      %v698 = vand.u32 %v316, 4294901760
      %699 = vmatpush1.msra.mxu0 %v698
      %v700 = vand.u32 %v319, 4294901760
      %701 = vmatprep.subr.mxu0 %v700
      %v702 = vand.u32 %v318, 4294901760
      %703 = vmatpush1.msra.mxu0 %v702
      %v704 = vand.u32 %v321, 4294901760
      %705 = vmatprep.subr.mxu0 %v704
      %v706 = vand.u32 %v320, 4294901760
      %707 = vmatpush1.msra.mxu0 %v706
      %708 = vmatprep.subr.mxu0 0.0
      %709 = vmatpush1.msra.mxu0 0.0
      %710 = vmatprep.subr.mxu0 0.0
      %711 = vmatpush1.msra.mxu0 0.0
      %712 = vmatprep.subr.mxu0 0.0
      %713 = vmatpush1.msra.mxu0 0.0
      %714 = vmatprep.subr.mxu0 0.0
      %715 = vmatpush1.msra.mxu0 0.0
      %716 = vmatprep.subr.mxu0 0.0
      %717 = vmatpush1.msra.mxu0 0.0
      %718 = vmatprep.subr.mxu0 0.0
      %719 = vmatpush1.msra.mxu0 0.0
      %720 = vmatprep.subr.mxu0 0.0
      %721 = vmatpush1.msra.mxu0 0.0
      %722 = vmatprep.subr.mxu0 0.0
      %723 = vmatpush1.msra.mxu0 0.0
      %724 = vmatprep.subr.mxu0 0.0
      %725 = vmatpush1.msra.mxu0 0.0
      %726 = vmatprep.subr.mxu0 0.0
      %727 = vmatpush1.msra.mxu0 0.0
      %728 = vmatprep.subr.mxu0 0.0
      %729 = vmatpush1.msra.mxu0 0.0
      %730 = vmatprep.subr.mxu0 0.0
      %731 = vmatpush1.msra.mxu0 0.0
      %732 = vmatprep.subr.mxu0 0.0
      %733 = vmatpush1.msra.mxu0 0.0
      %734 = vmatprep.subr.mxu0 0.0
      %735 = vmatpush1.msra.mxu0 0.0
      %736 = vmatprep.subr.mxu0 0.0
      %737 = vmatpush1.msra.mxu0 0.0
      %738 = vmatprep.subr.mxu0 0.0
      %739 = vmatpush1.msra.mxu0 0.0
      %740 = vmatprep.subr.mxu0 0.0
      %741 = vmatpush1.msra.mxu0 0.0
      %742 = vmatprep.subr.mxu0 0.0
      %743 = vmatpush1.msra.mxu0 0.0
      %744 = vmatprep.subr.mxu0 0.0
      %745 = vmatpush1.msra.mxu0 0.0
      %746 = vmatprep.subr.mxu0 0.0
      %747 = vmatpush1.msra.mxu0 0.0
      %748 = vmatprep.subr.mxu0 0.0
      %749 = vmatpush1.msra.mxu0 0.0
      %750 = vmatprep.subr.mxu0 0.0
      %751 = vmatpush1.msra.mxu0 0.0
      %752 = vmatprep.subr.mxu0 0.0
      %753 = vmatpush1.msra.mxu0 0.0
      %754 = vmatprep.subr.mxu0 0.0
      %755 = vmatpush1.msra.mxu0 0.0
      %756 = vmatprep.mubr.f32.mxu0 0.0
      %v757 = vand.u32 %v325, 4294901760
      %v758 = vsub.f32 %v325, %v757
      %v759 = vand.u32 %v758, 4294901760
      %760 = vmatmul.mubr.f32.gmra.mrb[0].mxu0 %v759
      %v761 = vpop.f32.mrb[0].mxu0
      %v762 = vadd.f32 %v672, %v761
      %v763 = vpop.f32.mrb[0].mxu0
      %v764 = vadd.f32 %v674, %v763
      %765 = vdwg.mxu0
      %v766 = vand.u32 %v307, 4294901760
      %v767 = vsub.f32 %v307, %v766
      %v768 = vand.u32 %v767, 4294901760
      %769 = vmatprep.subr.mxu0 %v768
      %v770 = vand.u32 %v306, 4294901760
      %v771 = vsub.f32 %v306, %v770
      %v772 = vand.u32 %v771, 4294901760
      %773 = vmatpush1.msra.mxu0 %v772
      %v774 = vand.u32 %v309, 4294901760
      %v775 = vsub.f32 %v309, %v774
      %v776 = vand.u32 %v775, 4294901760
      %777 = vmatprep.subr.mxu0 %v776
      %v778 = vand.u32 %v308, 4294901760
      %v779 = vsub.f32 %v308, %v778
      %v780 = vand.u32 %v779, 4294901760
      %781 = vmatpush1.msra.mxu0 %v780
      %v782 = vand.u32 %v311, 4294901760
      %v783 = vsub.f32 %v311, %v782
      %v784 = vand.u32 %v783, 4294901760
      %785 = vmatprep.subr.mxu0 %v784
      %v786 = vand.u32 %v310, 4294901760
      %v787 = vsub.f32 %v310, %v786
      %v788 = vand.u32 %v787, 4294901760
      %789 = vmatpush1.msra.mxu0 %v788
      %v790 = vand.u32 %v313, 4294901760
      %v791 = vsub.f32 %v313, %v790
      %v792 = vand.u32 %v791, 4294901760
      %793 = vmatprep.subr.mxu0 %v792
      %v794 = vand.u32 %v312, 4294901760
      %v795 = vsub.f32 %v312, %v794
      %v796 = vand.u32 %v795, 4294901760
      %797 = vmatpush1.msra.mxu0 %v796
      %v798 = vand.u32 %v315, 4294901760
      %v799 = vsub.f32 %v315, %v798
      %v800 = vand.u32 %v799, 4294901760
      %801 = vmatprep.subr.mxu0 %v800
      %v802 = vand.u32 %v314, 4294901760
      %v803 = vsub.f32 %v314, %v802
      %v804 = vand.u32 %v803, 4294901760
      %805 = vmatpush1.msra.mxu0 %v804
      %v806 = vand.u32 %v317, 4294901760
      %v807 = vsub.f32 %v317, %v806
      %v808 = vand.u32 %v807, 4294901760
      %809 = vmatprep.subr.mxu0 %v808
      %v810 = vand.u32 %v316, 4294901760
      %v811 = vsub.f32 %v316, %v810
      %v812 = vand.u32 %v811, 4294901760
      %813 = vmatpush1.msra.mxu0 %v812
      %v814 = vand.u32 %v319, 4294901760
      %v815 = vsub.f32 %v319, %v814
      %v816 = vand.u32 %v815, 4294901760
      %817 = vmatprep.subr.mxu0 %v816
      %v818 = vand.u32 %v318, 4294901760
      %v819 = vsub.f32 %v318, %v818
      %v820 = vand.u32 %v819, 4294901760
      %821 = vmatpush1.msra.mxu0 %v820
      %v822 = vand.u32 %v321, 4294901760
      %v823 = vsub.f32 %v321, %v822
      %v824 = vand.u32 %v823, 4294901760
      %825 = vmatprep.subr.mxu0 %v824
      %v826 = vand.u32 %v320, 4294901760
      %v827 = vsub.f32 %v320, %v826
      %v828 = vand.u32 %v827, 4294901760
      %829 = vmatpush1.msra.mxu0 %v828
      %830 = vmatprep.subr.mxu0 0.0
      %831 = vmatpush1.msra.mxu0 0.0
      %832 = vmatprep.subr.mxu0 0.0
      %833 = vmatpush1.msra.mxu0 0.0
      %834 = vmatprep.subr.mxu0 0.0
      %835 = vmatpush1.msra.mxu0 0.0
      %836 = vmatprep.subr.mxu0 0.0
      %837 = vmatpush1.msra.mxu0 0.0
      %838 = vmatprep.subr.mxu0 0.0
      %839 = vmatpush1.msra.mxu0 0.0
      %840 = vmatprep.subr.mxu0 0.0
      %841 = vmatpush1.msra.mxu0 0.0
      %842 = vmatprep.subr.mxu0 0.0
      %843 = vmatpush1.msra.mxu0 0.0
      %844 = vmatprep.subr.mxu0 0.0
      %845 = vmatpush1.msra.mxu0 0.0
      %846 = vmatprep.subr.mxu0 0.0
      %847 = vmatpush1.msra.mxu0 0.0
      %848 = vmatprep.subr.mxu0 0.0
      %849 = vmatpush1.msra.mxu0 0.0
      %850 = vmatprep.subr.mxu0 0.0
      %851 = vmatpush1.msra.mxu0 0.0
      %852 = vmatprep.subr.mxu0 0.0
      %853 = vmatpush1.msra.mxu0 0.0
      %854 = vmatprep.subr.mxu0 0.0
      %855 = vmatpush1.msra.mxu0 0.0
      %856 = vmatprep.subr.mxu0 0.0
      %857 = vmatpush1.msra.mxu0 0.0
      %858 = vmatprep.subr.mxu0 0.0
      %859 = vmatpush1.msra.mxu0 0.0
      %860 = vmatprep.subr.mxu0 0.0
      %861 = vmatpush1.msra.mxu0 0.0
      %862 = vmatprep.subr.mxu0 0.0
      %863 = vmatpush1.msra.mxu0 0.0
      %864 = vmatprep.subr.mxu0 0.0
      %865 = vmatpush1.msra.mxu0 0.0
      %866 = vmatprep.subr.mxu0 0.0
      %867 = vmatpush1.msra.mxu0 0.0
      %868 = vmatprep.subr.mxu0 0.0
      %869 = vmatpush1.msra.mxu0 0.0
      %870 = vmatprep.subr.mxu0 0.0
      %871 = vmatpush1.msra.mxu0 0.0
      %872 = vmatprep.subr.mxu0 0.0
      %873 = vmatpush1.msra.mxu0 0.0
      %874 = vmatprep.subr.mxu0 0.0
      %875 = vmatpush1.msra.mxu0 0.0
      %876 = vmatprep.subr.mxu0 0.0
      %877 = vmatpush1.msra.mxu0 0.0
      %878 = vmatprep.mubr.f32.mxu0 0.0
      %v879 = vand.u32 %v325, 4294901760
      %880 = vmatmul.mubr.f32.gmra.mrb[0].mxu0 %v879
      %v881 = vpop.f32.mrb[0].mxu0
      %v882 = vadd.f32 %v762, %v881
      %v883 = vpop.f32.mrb[0].mxu0
      %v884 = vadd.f32 %v764, %v883
      %885 = vdwg.mxu0
      %v886 = vand.u32 %v307, 4294901760
      %887 = vmatprep.subr.mxu0 %v886
      %v888 = vand.u32 %v306, 4294901760
      %889 = vmatpush1.msra.mxu0 %v888
      %v890 = vand.u32 %v309, 4294901760
      %891 = vmatprep.subr.mxu0 %v890
      %v892 = vand.u32 %v308, 4294901760
      %893 = vmatpush1.msra.mxu0 %v892
      %v894 = vand.u32 %v311, 4294901760
      %895 = vmatprep.subr.mxu0 %v894
      %v896 = vand.u32 %v310, 4294901760
      %897 = vmatpush1.msra.mxu0 %v896
      %v898 = vand.u32 %v313, 4294901760
      %899 = vmatprep.subr.mxu0 %v898
      %v900 = vand.u32 %v312, 4294901760
      %901 = vmatpush1.msra.mxu0 %v900
      %v902 = vand.u32 %v315, 4294901760
      %903 = vmatprep.subr.mxu0 %v902
      %v904 = vand.u32 %v314, 4294901760
      %905 = vmatpush1.msra.mxu0 %v904
      %v906 = vand.u32 %v317, 4294901760
      %907 = vmatprep.subr.mxu0 %v906
      %v908 = vand.u32 %v316, 4294901760
      %909 = vmatpush1.msra.mxu0 %v908
      %v910 = vand.u32 %v319, 4294901760
      %911 = vmatprep.subr.mxu0 %v910
      %v912 = vand.u32 %v318, 4294901760
      %913 = vmatpush1.msra.mxu0 %v912
      %v914 = vand.u32 %v321, 4294901760
      %915 = vmatprep.subr.mxu0 %v914
      %v916 = vand.u32 %v320, 4294901760
      %917 = vmatpush1.msra.mxu0 %v916
      %918 = vmatprep.subr.mxu0 0.0
      %919 = vmatpush1.msra.mxu0 0.0
      %920 = vmatprep.subr.mxu0 0.0
      %921 = vmatpush1.msra.mxu0 0.0
      %922 = vmatprep.subr.mxu0 0.0
      %923 = vmatpush1.msra.mxu0 0.0
      %924 = vmatprep.subr.mxu0 0.0
      %925 = vmatpush1.msra.mxu0 0.0
      %926 = vmatprep.subr.mxu0 0.0
      %927 = vmatpush1.msra.mxu0 0.0
      %928 = vmatprep.subr.mxu0 0.0
      %929 = vmatpush1.msra.mxu0 0.0
      %930 = vmatprep.subr.mxu0 0.0
      %931 = vmatpush1.msra.mxu0 0.0
      %932 = vmatprep.subr.mxu0 0.0
      %933 = vmatpush1.msra.mxu0 0.0
      %934 = vmatprep.subr.mxu0 0.0
      %935 = vmatpush1.msra.mxu0 0.0
      %936 = vmatprep.subr.mxu0 0.0
      %937 = vmatpush1.msra.mxu0 0.0
      %938 = vmatprep.subr.mxu0 0.0
      %939 = vmatpush1.msra.mxu0 0.0
      %940 = vmatprep.subr.mxu0 0.0
      %941 = vmatpush1.msra.mxu0 0.0
      %942 = vmatprep.subr.mxu0 0.0
      %943 = vmatpush1.msra.mxu0 0.0
      %944 = vmatprep.subr.mxu0 0.0
      %945 = vmatpush1.msra.mxu0 0.0
      %946 = vmatprep.subr.mxu0 0.0
      %947 = vmatpush1.msra.mxu0 0.0
      %948 = vmatprep.subr.mxu0 0.0
      %949 = vmatpush1.msra.mxu0 0.0
      %950 = vmatprep.subr.mxu0 0.0
      %951 = vmatpush1.msra.mxu0 0.0
      %952 = vmatprep.subr.mxu0 0.0
      %953 = vmatpush1.msra.mxu0 0.0
      %954 = vmatprep.subr.mxu0 0.0
      %955 = vmatpush1.msra.mxu0 0.0
      %956 = vmatprep.subr.mxu0 0.0
      %957 = vmatpush1.msra.mxu0 0.0
      %958 = vmatprep.subr.mxu0 0.0
      %959 = vmatpush1.msra.mxu0 0.0
      %960 = vmatprep.subr.mxu0 0.0
      %961 = vmatpush1.msra.mxu0 0.0
      %962 = vmatprep.subr.mxu0 0.0
      %963 = vmatpush1.msra.mxu0 0.0
      %964 = vmatprep.subr.mxu0 0.0
      %965 = vmatpush1.msra.mxu0 0.0
      %966 = vmatprep.mubr.f32.mxu0 0.0
      %v967 = vand.u32 %v325, 4294901760
      %968 = vmatmul.mubr.f32.gmra.mrb[0].mxu0 %v967
      %v969 = vpop.f32.mrb[0].mxu0
      %v970 = vadd.f32 %v882, %v969
      %v971 = vpop.f32.mrb[0].mxu0
      %v972 = vadd.f32 %v884, %v971
      %973 = vdwg.mxu0
      %vm974 = vcmask 1040384
      %v975 = vsel %vm974, %v970, -inf
      %v976 = vsel %vm974, %v972, -inf
      %v977 = vmax.f32 %v975, %v976
      %978 = vmax.xlane.f32.xlu0 %v977
      %v979 = vpop.xlane.xlu0 %978
      %v980 = vsub.f32 %v970, %v979
      %v981 = vsub.f32 %v972, %v979
      %v982 = vmul.f32 %v980, 1.442695
      %v983 = vpow.pop %v982
      %v984 = vmul.f32 %v981, 1.442695
      %v985 = vpow.pop %v984
      %v986 = vsel %vm974, %v983, 0.0
      %v987 = vsel %vm974, %v985, 0.0
      %v988 = vadd.f32 %v986, %v987
      %989 = vadd.xlane.f32.xlu0 %v988
      %v990 = vpop.xlane.xlu0 %989
      %v991 = vlaneseq
      %v992 = vshrl.u32 %v991, 7
      %v993 = vsub.s32 0, %v992
      %v994 = vrot.slane %v983, %v993
      %v995 = vlaneseq
      %v996 = vshrl.u32 %v995, 7
      %v997 = vsub.s32 0, %v996
      %v998 = vrot.slane %v985, %v997
      %v999 = vmul.f32 %v306, %v994
      %v1000 = vmul.f32 %v307, %v998
      %v1001 = vmul.f32 %v308, %v994
      %v1002 = vmul.f32 %v309, %v998
      %v1003 = vmul.f32 %v310, %v994
      %v1004 = vmul.f32 %v311, %v998
      %v1005 = vmul.f32 %v312, %v994
      %v1006 = vmul.f32 %v313, %v998
      %v1007 = vmul.f32 %v314, %v994
      %v1008 = vmul.f32 %v315, %v998
      %v1009 = vmul.f32 %v316, %v994
      %v1010 = vmul.f32 %v317, %v998
      %v1011 = vmul.f32 %v318, %v994
      %v1012 = vmul.f32 %v319, %v998
      %v1013 = vmul.f32 %v320, %v994
      %v1014 = vmul.f32 %v321, %v998
      %v1015 = vadd.f32 %v999, %v1000
      %1016 = vadd.xlane.f32.xlu0 %v1015
      %v1017 = vpop.xlane.xlu0 %1016
      %v1018 = vadd.f32 %v1001, %v1002
      %1019 = vadd.xlane.f32.xlu0 %v1018
      %v1020 = vpop.xlane.xlu0 %1019
      %v1021 = vadd.f32 %v1003, %v1004
      %1022 = vadd.xlane.f32.xlu0 %v1021
      %v1023 = vpop.xlane.xlu0 %1022
      %v1024 = vadd.f32 %v1005, %v1006
      %1025 = vadd.xlane.f32.xlu0 %v1024
      %v1026 = vpop.xlane.xlu0 %1025
      %v1027 = vadd.f32 %v1007, %v1008
      %1028 = vadd.xlane.f32.xlu0 %v1027
      %v1029 = vpop.xlane.xlu0 %1028
      %v1030 = vadd.f32 %v1009, %v1010
      %1031 = vadd.xlane.f32.xlu0 %v1030
      %v1032 = vpop.xlane.xlu0 %1031
      %v1033 = vadd.f32 %v1011, %v1012
      %1034 = vadd.xlane.f32.xlu0 %v1033
      %v1035 = vpop.xlane.xlu0 %1034
      %v1036 = vadd.f32 %v1013, %v1014
      %1037 = vadd.xlane.f32.xlu0 %v1036
      %v1038 = vpop.xlane.xlu0 %1037
      %v1039 = vlaneseq
      %v1040 = vshrl.u32 %v1039, 7
      %v1041 = vsub.s32 0, %v1040
      %v1042 = vrot.slane %v990, %v1041
      %v1043 = vrcp.pop %v1042
      %v1044 = vmul.f32 %v1017, %v1043
      %v1045 = vmul.f32 %v1020, %v1043
      %v1046 = vmul.f32 %v1023, %v1043
      %v1047 = vmul.f32 %v1026, %v1043
      %v1048 = vmul.f32 %v1029, %v1043
      %v1049 = vmul.f32 %v1032, %v1043
      %v1050 = vmul.f32 %v1035, %v1043
      %v1051 = vmul.f32 %v1038, %v1043
      %v1052 = vadd.f32 %v306, %v307
      %1053 = vadd.xlane.f32.xlu0 %v1052
      %v1054 = vpop.xlane.xlu0 %1053
      %v1055 = vadd.f32 %v308, %v309
      %1056 = vadd.xlane.f32.xlu0 %v1055
      %v1057 = vpop.xlane.xlu0 %1056
      %v1058 = vadd.f32 %v310, %v311
      %1059 = vadd.xlane.f32.xlu0 %v1058
      %v1060 = vpop.xlane.xlu0 %1059
      %v1061 = vadd.f32 %v312, %v313
      %1062 = vadd.xlane.f32.xlu0 %v1061
      %v1063 = vpop.xlane.xlu0 %1062
      %v1064 = vadd.f32 %v314, %v315
      %1065 = vadd.xlane.f32.xlu0 %v1064
      %v1066 = vpop.xlane.xlu0 %1065
      %v1067 = vadd.f32 %v316, %v317
      %1068 = vadd.xlane.f32.xlu0 %v1067
      %v1069 = vpop.xlane.xlu0 %1068
      %v1070 = vadd.f32 %v318, %v319
      %1071 = vadd.xlane.f32.xlu0 %v1070
      %v1072 = vpop.xlane.xlu0 %1071
      %v1073 = vadd.f32 %v320, %v321
      %1074 = vadd.xlane.f32.xlu0 %v1073
      %v1075 = vpop.xlane.xlu0 %1074
      %v1076 = vmul.f32 %v1054, 0.00390625
      %v1077 = vmul.f32 %v1057, 0.00390625
      %v1078 = vmul.f32 %v1060, 0.00390625
      %v1079 = vmul.f32 %v1063, 0.00390625
      %v1080 = vmul.f32 %v1066, 0.00390625
      %v1081 = vmul.f32 %v1069, 0.00390625
      %v1082 = vmul.f32 %v1072, 0.00390625
      %v1083 = vmul.f32 %v1075, 0.00390625
      %v1084 = vld [vmem:[%s2] sm:$0xff]
      %v1085 = vld [vmem:[%s2 + $0x8] sm:$0xff]
      %v1086 = vld [vmem:[%s2 + $0x10] sm:$0xff]
      %v1087 = vld [vmem:[%s2 + $0x18] sm:$0xff]
      %v1088 = vld [vmem:[%s7] sm:$0xff]
      %v1089 = vld [vmem:[%s7 + $0x8] sm:$0xff]
      %v1090 = vld [vmem:[%s7 + $0x10] sm:$0xff]
      %v1091 = vld [vmem:[%s7 + $0x18] sm:$0xff]
      %v1093 = vsel %vm323, %v1084, 0
      %v1096 = vsel %vm323, %v1085, 0
      %v1099 = vsel %vm323, %v1086, 0
      %v1102 = vsel %vm323, %v1087, 0
      %1104 = vmatprep.subr.mxu0 0.0
      %v1105 = vand.u32 %v1044, 4294901760
      %1106 = vmatpush1.msra.mxu0 %v1105
      %1107 = vmatprep.subr.mxu0 0.0
      %v1108 = vand.u32 %v1045, 4294901760
      %1109 = vmatpush1.msra.mxu0 %v1108
      %1110 = vmatprep.subr.mxu0 0.0
      %v1111 = vand.u32 %v1046, 4294901760
      %1112 = vmatpush1.msra.mxu0 %v1111
      %1113 = vmatprep.subr.mxu0 0.0
      %v1114 = vand.u32 %v1047, 4294901760
      %1115 = vmatpush1.msra.mxu0 %v1114
      %1116 = vmatprep.subr.mxu0 0.0
      %v1117 = vand.u32 %v1048, 4294901760
      %1118 = vmatpush1.msra.mxu0 %v1117
      %1119 = vmatprep.subr.mxu0 0.0
      %v1120 = vand.u32 %v1049, 4294901760
      %1121 = vmatpush1.msra.mxu0 %v1120
      %1122 = vmatprep.subr.mxu0 0.0
      %v1123 = vand.u32 %v1050, 4294901760
      %1124 = vmatpush1.msra.mxu0 %v1123
      %1125 = vmatprep.subr.mxu0 0.0
      %v1126 = vand.u32 %v1051, 4294901760
      %1127 = vmatpush1.msra.mxu0 %v1126
      %1128 = vmatprep.subr.mxu0 0.0
      %1129 = vmatpush1.msra.mxu0 0.0
      %1130 = vmatprep.subr.mxu0 0.0
      %1131 = vmatpush1.msra.mxu0 0.0
      %1132 = vmatprep.subr.mxu0 0.0
      %1133 = vmatpush1.msra.mxu0 0.0
      %1134 = vmatprep.subr.mxu0 0.0
      %1135 = vmatpush1.msra.mxu0 0.0
      %1136 = vmatprep.subr.mxu0 0.0
      %1137 = vmatpush1.msra.mxu0 0.0
      %1138 = vmatprep.subr.mxu0 0.0
      %1139 = vmatpush1.msra.mxu0 0.0
      %1140 = vmatprep.subr.mxu0 0.0
      %1141 = vmatpush1.msra.mxu0 0.0
      %1142 = vmatprep.subr.mxu0 0.0
      %1143 = vmatpush1.msra.mxu0 0.0
      %1144 = vmatprep.subr.mxu0 0.0
      %1145 = vmatpush1.msra.mxu0 0.0
      %1146 = vmatprep.subr.mxu0 0.0
      %1147 = vmatpush1.msra.mxu0 0.0
      %1148 = vmatprep.subr.mxu0 0.0
      %1149 = vmatpush1.msra.mxu0 0.0
      %1150 = vmatprep.subr.mxu0 0.0
      %1151 = vmatpush1.msra.mxu0 0.0
      %1152 = vmatprep.subr.mxu0 0.0
      %1153 = vmatpush1.msra.mxu0 0.0
      %1154 = vmatprep.subr.mxu0 0.0
      %1155 = vmatpush1.msra.mxu0 0.0
      %1156 = vmatprep.subr.mxu0 0.0
      %1157 = vmatpush1.msra.mxu0 0.0
      %1158 = vmatprep.subr.mxu0 0.0
      %1159 = vmatpush1.msra.mxu0 0.0
      %1160 = vmatprep.subr.mxu0 0.0
      %1161 = vmatpush1.msra.mxu0 0.0
      %1162 = vmatprep.subr.mxu0 0.0
      %1163 = vmatpush1.msra.mxu0 0.0
      %1164 = vmatprep.subr.mxu0 0.0
      %1165 = vmatpush1.msra.mxu0 0.0
      %1166 = vmatprep.subr.mxu0 0.0
      %1167 = vmatpush1.msra.mxu0 0.0
      %1168 = vmatprep.subr.mxu0 0.0
      %1169 = vmatpush1.msra.mxu0 0.0
      %1170 = vmatprep.subr.mxu0 0.0
      %1171 = vmatpush1.msra.mxu0 0.0
      %1172 = vmatprep.subr.mxu0 0.0
      %1173 = vmatpush1.msra.mxu0 0.0
      %1174 = vmatprep.subr.mxu0 0.0
      %1175 = vmatpush1.msra.mxu0 0.0
      %1176 = vmatprep.mubr.f32.mxu0 0.0
      %v1177 = vand.u32 %v1093, 4294901760
      %v1178 = vsub.f32 %v1093, %v1177
      %v1179 = vand.u32 %v1178, 4294901760
      %v1180 = vsub.f32 %v1178, %v1179
      %v1181 = vand.u32 %v1180, 4294901760
      %1182 = vmatmul.mubr.f32.gmra.mrb[0].mxu0 %v1181
      %v1183 = vpop.f32.mrb[0].mxu0
      %v1184 = vadd.f32 %v1088, %v1183
      %v1185 = vpop.f32.mrb[0].mxu0
      %1186 = vmatprep.mubr.f32.mxu0 0.0
      %v1187 = vand.u32 %v1096, 4294901760
      %v1188 = vsub.f32 %v1096, %v1187
      %v1189 = vand.u32 %v1188, 4294901760
      %v1190 = vsub.f32 %v1188, %v1189
      %v1191 = vand.u32 %v1190, 4294901760
      %1192 = vmatmul.mubr.f32.gmra.mrb[0].mxu0 %v1191
      %v1193 = vpop.f32.mrb[0].mxu0
      %v1194 = vadd.f32 %v1089, %v1193
      %v1195 = vpop.f32.mrb[0].mxu0
      %1196 = vmatprep.mubr.f32.mxu0 0.0
      %v1197 = vand.u32 %v1099, 4294901760
      %v1198 = vsub.f32 %v1099, %v1197
      %v1199 = vand.u32 %v1198, 4294901760
      %v1200 = vsub.f32 %v1198, %v1199
      %v1201 = vand.u32 %v1200, 4294901760
      %1202 = vmatmul.mubr.f32.gmra.mrb[0].mxu0 %v1201
      %v1203 = vpop.f32.mrb[0].mxu0
      %v1204 = vadd.f32 %v1090, %v1203
      %v1205 = vpop.f32.mrb[0].mxu0
      %1206 = vmatprep.mubr.f32.mxu0 0.0
      %v1207 = vand.u32 %v1102, 4294901760
      %v1208 = vsub.f32 %v1102, %v1207
      %v1209 = vand.u32 %v1208, 4294901760
      %v1210 = vsub.f32 %v1208, %v1209
      %v1211 = vand.u32 %v1210, 4294901760
      %1212 = vmatmul.mubr.f32.gmra.mrb[0].mxu0 %v1211
      %v1213 = vpop.f32.mrb[0].mxu0
      %v1214 = vadd.f32 %v1091, %v1213
      %v1215 = vpop.f32.mrb[0].mxu0
      %1216 = vdwg.mxu0
      %1217 = vmatprep.subr.mxu0 0.0
      %v1218 = vand.u32 %v1044, 4294901760
      %v1219 = vsub.f32 %v1044, %v1218
      %v1220 = vand.u32 %v1219, 4294901760
      %v1221 = vsub.f32 %v1219, %v1220
      %v1222 = vand.u32 %v1221, 4294901760
      %1223 = vmatpush1.msra.mxu0 %v1222
      %1224 = vmatprep.subr.mxu0 0.0
      %v1225 = vand.u32 %v1045, 4294901760
      %v1226 = vsub.f32 %v1045, %v1225
      %v1227 = vand.u32 %v1226, 4294901760
      %v1228 = vsub.f32 %v1226, %v1227
      %v1229 = vand.u32 %v1228, 4294901760
      %1230 = vmatpush1.msra.mxu0 %v1229
      %1231 = vmatprep.subr.mxu0 0.0
      %v1232 = vand.u32 %v1046, 4294901760
      %v1233 = vsub.f32 %v1046, %v1232
      %v1234 = vand.u32 %v1233, 4294901760
      %v1235 = vsub.f32 %v1233, %v1234
      %v1236 = vand.u32 %v1235, 4294901760
      %1237 = vmatpush1.msra.mxu0 %v1236
      %1238 = vmatprep.subr.mxu0 0.0
      %v1239 = vand.u32 %v1047, 4294901760
      %v1240 = vsub.f32 %v1047, %v1239
      %v1241 = vand.u32 %v1240, 4294901760
      %v1242 = vsub.f32 %v1240, %v1241
      %v1243 = vand.u32 %v1242, 4294901760
      %1244 = vmatpush1.msra.mxu0 %v1243
      %1245 = vmatprep.subr.mxu0 0.0
      %v1246 = vand.u32 %v1048, 4294901760
      %v1247 = vsub.f32 %v1048, %v1246
      %v1248 = vand.u32 %v1247, 4294901760
      %v1249 = vsub.f32 %v1247, %v1248
      %v1250 = vand.u32 %v1249, 4294901760
      %1251 = vmatpush1.msra.mxu0 %v1250
      %1252 = vmatprep.subr.mxu0 0.0
      %v1253 = vand.u32 %v1049, 4294901760
      %v1254 = vsub.f32 %v1049, %v1253
      %v1255 = vand.u32 %v1254, 4294901760
      %v1256 = vsub.f32 %v1254, %v1255
      %v1257 = vand.u32 %v1256, 4294901760
      %1258 = vmatpush1.msra.mxu0 %v1257
      %1259 = vmatprep.subr.mxu0 0.0
      %v1260 = vand.u32 %v1050, 4294901760
      %v1261 = vsub.f32 %v1050, %v1260
      %v1262 = vand.u32 %v1261, 4294901760
      %v1263 = vsub.f32 %v1261, %v1262
      %v1264 = vand.u32 %v1263, 4294901760
      %1265 = vmatpush1.msra.mxu0 %v1264
      %1266 = vmatprep.subr.mxu0 0.0
      %v1267 = vand.u32 %v1051, 4294901760
      %v1268 = vsub.f32 %v1051, %v1267
      %v1269 = vand.u32 %v1268, 4294901760
      %v1270 = vsub.f32 %v1268, %v1269
      %v1271 = vand.u32 %v1270, 4294901760
      %1272 = vmatpush1.msra.mxu0 %v1271
      %1273 = vmatprep.subr.mxu0 0.0
      %1274 = vmatpush1.msra.mxu0 0.0
      %1275 = vmatprep.subr.mxu0 0.0
      %1276 = vmatpush1.msra.mxu0 0.0
      %1277 = vmatprep.subr.mxu0 0.0
      %1278 = vmatpush1.msra.mxu0 0.0
      %1279 = vmatprep.subr.mxu0 0.0
      %1280 = vmatpush1.msra.mxu0 0.0
      %1281 = vmatprep.subr.mxu0 0.0
      %1282 = vmatpush1.msra.mxu0 0.0
      %1283 = vmatprep.subr.mxu0 0.0
      %1284 = vmatpush1.msra.mxu0 0.0
      %1285 = vmatprep.subr.mxu0 0.0
      %1286 = vmatpush1.msra.mxu0 0.0
      %1287 = vmatprep.subr.mxu0 0.0
      %1288 = vmatpush1.msra.mxu0 0.0
      %1289 = vmatprep.subr.mxu0 0.0
      %1290 = vmatpush1.msra.mxu0 0.0
      %1291 = vmatprep.subr.mxu0 0.0
      %1292 = vmatpush1.msra.mxu0 0.0
      %1293 = vmatprep.subr.mxu0 0.0
      %1294 = vmatpush1.msra.mxu0 0.0
      %1295 = vmatprep.subr.mxu0 0.0
      %1296 = vmatpush1.msra.mxu0 0.0
      %1297 = vmatprep.subr.mxu0 0.0
      %1298 = vmatpush1.msra.mxu0 0.0
      %1299 = vmatprep.subr.mxu0 0.0
      %1300 = vmatpush1.msra.mxu0 0.0
      %1301 = vmatprep.subr.mxu0 0.0
      %1302 = vmatpush1.msra.mxu0 0.0
      %1303 = vmatprep.subr.mxu0 0.0
      %1304 = vmatpush1.msra.mxu0 0.0
      %1305 = vmatprep.subr.mxu0 0.0
      %1306 = vmatpush1.msra.mxu0 0.0
      %1307 = vmatprep.subr.mxu0 0.0
      %1308 = vmatpush1.msra.mxu0 0.0
      %1309 = vmatprep.subr.mxu0 0.0
      %1310 = vmatpush1.msra.mxu0 0.0
      %1311 = vmatprep.subr.mxu0 0.0
      %1312 = vmatpush1.msra.mxu0 0.0
      %1313 = vmatprep.subr.mxu0 0.0
      %1314 = vmatpush1.msra.mxu0 0.0
      %1315 = vmatprep.subr.mxu0 0.0
      %1316 = vmatpush1.msra.mxu0 0.0
      %1317 = vmatprep.subr.mxu0 0.0
      %1318 = vmatpush1.msra.mxu0 0.0
      %1319 = vmatprep.subr.mxu0 0.0
      %1320 = vmatpush1.msra.mxu0 0.0
      %1321 = vmatprep.mubr.f32.mxu0 0.0
      %v1322 = vand.u32 %v1093, 4294901760
      %1323 = vmatmul.mubr.f32.gmra.mrb[0].mxu0 %v1322
      %v1324 = vpop.f32.mrb[0].mxu0
      %v1325 = vadd.f32 %v1184, %v1324
      %v1326 = vpop.f32.mrb[0].mxu0
      %1327 = vmatprep.mubr.f32.mxu0 0.0
      %v1328 = vand.u32 %v1096, 4294901760
      %1329 = vmatmul.mubr.f32.gmra.mrb[0].mxu0 %v1328
      %v1330 = vpop.f32.mrb[0].mxu0
      %v1331 = vadd.f32 %v1194, %v1330
      %v1332 = vpop.f32.mrb[0].mxu0
      %1333 = vmatprep.mubr.f32.mxu0 0.0
      %v1334 = vand.u32 %v1099, 4294901760
      %1335 = vmatmul.mubr.f32.gmra.mrb[0].mxu0 %v1334
      %v1336 = vpop.f32.mrb[0].mxu0
      %v1337 = vadd.f32 %v1204, %v1336
      %v1338 = vpop.f32.mrb[0].mxu0
      %1339 = vmatprep.mubr.f32.mxu0 0.0
      %v1340 = vand.u32 %v1102, 4294901760
      %1341 = vmatmul.mubr.f32.gmra.mrb[0].mxu0 %v1340
      %v1342 = vpop.f32.mrb[0].mxu0
      %v1343 = vadd.f32 %v1214, %v1342
      %v1344 = vpop.f32.mrb[0].mxu0
      %1345 = vdwg.mxu0
      %1346 = vmatprep.subr.mxu0 0.0
      %v1347 = vand.u32 %v1044, 4294901760
      %v1348 = vsub.f32 %v1044, %v1347
      %1349 = vmatpush1.msra.mxu0 %v1348
      %1350 = vmatprep.subr.mxu0 0.0
      %v1351 = vand.u32 %v1045, 4294901760
      %v1352 = vsub.f32 %v1045, %v1351
      %1353 = vmatpush1.msra.mxu0 %v1352
      %1354 = vmatprep.subr.mxu0 0.0
      %v1355 = vand.u32 %v1046, 4294901760
      %v1356 = vsub.f32 %v1046, %v1355
      %1357 = vmatpush1.msra.mxu0 %v1356
      %1358 = vmatprep.subr.mxu0 0.0
      %v1359 = vand.u32 %v1047, 4294901760
      %v1360 = vsub.f32 %v1047, %v1359
      %1361 = vmatpush1.msra.mxu0 %v1360
      %1362 = vmatprep.subr.mxu0 0.0
      %v1363 = vand.u32 %v1048, 4294901760
      %v1364 = vsub.f32 %v1048, %v1363
      %1365 = vmatpush1.msra.mxu0 %v1364
      %1366 = vmatprep.subr.mxu0 0.0
      %v1367 = vand.u32 %v1049, 4294901760
      %v1368 = vsub.f32 %v1049, %v1367
      %1369 = vmatpush1.msra.mxu0 %v1368
      %1370 = vmatprep.subr.mxu0 0.0
      %v1371 = vand.u32 %v1050, 4294901760
      %v1372 = vsub.f32 %v1050, %v1371
      %1373 = vmatpush1.msra.mxu0 %v1372
      %1374 = vmatprep.subr.mxu0 0.0
      %v1375 = vand.u32 %v1051, 4294901760
      %v1376 = vsub.f32 %v1051, %v1375
      %1377 = vmatpush1.msra.mxu0 %v1376
      %1378 = vmatprep.subr.mxu0 0.0
      %1379 = vmatpush1.msra.mxu0 0.0
      %1380 = vmatprep.subr.mxu0 0.0
      %1381 = vmatpush1.msra.mxu0 0.0
      %1382 = vmatprep.subr.mxu0 0.0
      %1383 = vmatpush1.msra.mxu0 0.0
      %1384 = vmatprep.subr.mxu0 0.0
      %1385 = vmatpush1.msra.mxu0 0.0
      %1386 = vmatprep.subr.mxu0 0.0
      %1387 = vmatpush1.msra.mxu0 0.0
      %1388 = vmatprep.subr.mxu0 0.0
      %1389 = vmatpush1.msra.mxu0 0.0
      %1390 = vmatprep.subr.mxu0 0.0
      %1391 = vmatpush1.msra.mxu0 0.0
      %1392 = vmatprep.subr.mxu0 0.0
      %1393 = vmatpush1.msra.mxu0 0.0
      %1394 = vmatprep.subr.mxu0 0.0
      %1395 = vmatpush1.msra.mxu0 0.0
      %1396 = vmatprep.subr.mxu0 0.0
      %1397 = vmatpush1.msra.mxu0 0.0
      %1398 = vmatprep.subr.mxu0 0.0
      %1399 = vmatpush1.msra.mxu0 0.0
      %1400 = vmatprep.subr.mxu0 0.0
      %1401 = vmatpush1.msra.mxu0 0.0
      %1402 = vmatprep.subr.mxu0 0.0
      %1403 = vmatpush1.msra.mxu0 0.0
      %1404 = vmatprep.subr.mxu0 0.0
      %1405 = vmatpush1.msra.mxu0 0.0
      %1406 = vmatprep.subr.mxu0 0.0
      %1407 = vmatpush1.msra.mxu0 0.0
      %1408 = vmatprep.subr.mxu0 0.0
      %1409 = vmatpush1.msra.mxu0 0.0
      %1410 = vmatprep.subr.mxu0 0.0
      %1411 = vmatpush1.msra.mxu0 0.0
      %1412 = vmatprep.subr.mxu0 0.0
      %1413 = vmatpush1.msra.mxu0 0.0
      %1414 = vmatprep.subr.mxu0 0.0
      %1415 = vmatpush1.msra.mxu0 0.0
      %1416 = vmatprep.subr.mxu0 0.0
      %1417 = vmatpush1.msra.mxu0 0.0
      %1418 = vmatprep.subr.mxu0 0.0
      %1419 = vmatpush1.msra.mxu0 0.0
      %1420 = vmatprep.subr.mxu0 0.0
      %1421 = vmatpush1.msra.mxu0 0.0
      %1422 = vmatprep.subr.mxu0 0.0
      %1423 = vmatpush1.msra.mxu0 0.0
      %1424 = vmatprep.subr.mxu0 0.0
      %1425 = vmatpush1.msra.mxu0 0.0
      %1426 = vmatprep.mubr.f32.mxu0 0.0
      %v1427 = vand.u32 %v1093, 4294901760
      %v1428 = vsub.f32 %v1093, %v1427
      %1429 = vmatmul.mubr.f32.gmra.mrb[0].mxu0 %v1428
      %v1430 = vpop.f32.mrb[0].mxu0
      %v1431 = vadd.f32 %v1325, %v1430
      %v1432 = vpop.f32.mrb[0].mxu0
      %1433 = vmatprep.mubr.f32.mxu0 0.0
      %v1434 = vand.u32 %v1096, 4294901760
      %v1435 = vsub.f32 %v1096, %v1434
      %1436 = vmatmul.mubr.f32.gmra.mrb[0].mxu0 %v1435
      %v1437 = vpop.f32.mrb[0].mxu0
      %v1438 = vadd.f32 %v1331, %v1437
      %v1439 = vpop.f32.mrb[0].mxu0
      %1440 = vmatprep.mubr.f32.mxu0 0.0
      %v1441 = vand.u32 %v1099, 4294901760
      %v1442 = vsub.f32 %v1099, %v1441
      %1443 = vmatmul.mubr.f32.gmra.mrb[0].mxu0 %v1442
      %v1444 = vpop.f32.mrb[0].mxu0
      %v1445 = vadd.f32 %v1337, %v1444
      %v1446 = vpop.f32.mrb[0].mxu0
      %1447 = vmatprep.mubr.f32.mxu0 0.0
      %v1448 = vand.u32 %v1102, 4294901760
      %v1449 = vsub.f32 %v1102, %v1448
      %1450 = vmatmul.mubr.f32.gmra.mrb[0].mxu0 %v1449
      %v1451 = vpop.f32.mrb[0].mxu0
      %v1452 = vadd.f32 %v1343, %v1451
      %v1453 = vpop.f32.mrb[0].mxu0
      %1454 = vdwg.mxu0
      %1455 = vmatprep.subr.mxu0 0.0
      %v1456 = vand.u32 %v1044, 4294901760
      %1457 = vmatpush1.msra.mxu0 %v1456
      %1458 = vmatprep.subr.mxu0 0.0
      %v1459 = vand.u32 %v1045, 4294901760
      %1460 = vmatpush1.msra.mxu0 %v1459
      %1461 = vmatprep.subr.mxu0 0.0
      %v1462 = vand.u32 %v1046, 4294901760
      %1463 = vmatpush1.msra.mxu0 %v1462
      %1464 = vmatprep.subr.mxu0 0.0
      %v1465 = vand.u32 %v1047, 4294901760
      %1466 = vmatpush1.msra.mxu0 %v1465
      %1467 = vmatprep.subr.mxu0 0.0
      %v1468 = vand.u32 %v1048, 4294901760
      %1469 = vmatpush1.msra.mxu0 %v1468
      %1470 = vmatprep.subr.mxu0 0.0
      %v1471 = vand.u32 %v1049, 4294901760
      %1472 = vmatpush1.msra.mxu0 %v1471
      %1473 = vmatprep.subr.mxu0 0.0
      %v1474 = vand.u32 %v1050, 4294901760
      %1475 = vmatpush1.msra.mxu0 %v1474
      %1476 = vmatprep.subr.mxu0 0.0
      %v1477 = vand.u32 %v1051, 4294901760
      %1478 = vmatpush1.msra.mxu0 %v1477
      %1479 = vmatprep.subr.mxu0 0.0
      %1480 = vmatpush1.msra.mxu0 0.0
      %1481 = vmatprep.subr.mxu0 0.0
      %1482 = vmatpush1.msra.mxu0 0.0
      %1483 = vmatprep.subr.mxu0 0.0
      %1484 = vmatpush1.msra.mxu0 0.0
      %1485 = vmatprep.subr.mxu0 0.0
      %1486 = vmatpush1.msra.mxu0 0.0
      %1487 = vmatprep.subr.mxu0 0.0
      %1488 = vmatpush1.msra.mxu0 0.0
      %1489 = vmatprep.subr.mxu0 0.0
      %1490 = vmatpush1.msra.mxu0 0.0
      %1491 = vmatprep.subr.mxu0 0.0
      %1492 = vmatpush1.msra.mxu0 0.0
      %1493 = vmatprep.subr.mxu0 0.0
      %1494 = vmatpush1.msra.mxu0 0.0
      %1495 = vmatprep.subr.mxu0 0.0
      %1496 = vmatpush1.msra.mxu0 0.0
      %1497 = vmatprep.subr.mxu0 0.0
      %1498 = vmatpush1.msra.mxu0 0.0
      %1499 = vmatprep.subr.mxu0 0.0
      %1500 = vmatpush1.msra.mxu0 0.0
      %1501 = vmatprep.subr.mxu0 0.0
      %1502 = vmatpush1.msra.mxu0 0.0
      %1503 = vmatprep.subr.mxu0 0.0
      %1504 = vmatpush1.msra.mxu0 0.0
      %1505 = vmatprep.subr.mxu0 0.0
      %1506 = vmatpush1.msra.mxu0 0.0
      %1507 = vmatprep.subr.mxu0 0.0
      %1508 = vmatpush1.msra.mxu0 0.0
      %1509 = vmatprep.subr.mxu0 0.0
      %1510 = vmatpush1.msra.mxu0 0.0
      %1511 = vmatprep.subr.mxu0 0.0
      %1512 = vmatpush1.msra.mxu0 0.0
      %1513 = vmatprep.subr.mxu0 0.0
      %1514 = vmatpush1.msra.mxu0 0.0
      %1515 = vmatprep.subr.mxu0 0.0
      %1516 = vmatpush1.msra.mxu0 0.0
      %1517 = vmatprep.subr.mxu0 0.0
      %1518 = vmatpush1.msra.mxu0 0.0
      %1519 = vmatprep.subr.mxu0 0.0
      %1520 = vmatpush1.msra.mxu0 0.0
      %1521 = vmatprep.subr.mxu0 0.0
      %1522 = vmatpush1.msra.mxu0 0.0
      %1523 = vmatprep.subr.mxu0 0.0
      %1524 = vmatpush1.msra.mxu0 0.0
      %1525 = vmatprep.subr.mxu0 0.0
      %1526 = vmatpush1.msra.mxu0 0.0
      %1527 = vmatprep.mubr.f32.mxu0 0.0
      %v1528 = vand.u32 %v1093, 4294901760
      %v1529 = vsub.f32 %v1093, %v1528
      %v1530 = vand.u32 %v1529, 4294901760
      %1531 = vmatmul.mubr.f32.gmra.mrb[0].mxu0 %v1530
      %v1532 = vpop.f32.mrb[0].mxu0
      %v1533 = vadd.f32 %v1431, %v1532
      %v1534 = vpop.f32.mrb[0].mxu0
      %1535 = vmatprep.mubr.f32.mxu0 0.0
      %v1536 = vand.u32 %v1096, 4294901760
      %v1537 = vsub.f32 %v1096, %v1536
      %v1538 = vand.u32 %v1537, 4294901760
      %1539 = vmatmul.mubr.f32.gmra.mrb[0].mxu0 %v1538
      %v1540 = vpop.f32.mrb[0].mxu0
      %v1541 = vadd.f32 %v1438, %v1540
      %v1542 = vpop.f32.mrb[0].mxu0
      %1543 = vmatprep.mubr.f32.mxu0 0.0
      %v1544 = vand.u32 %v1099, 4294901760
      %v1545 = vsub.f32 %v1099, %v1544
      %v1546 = vand.u32 %v1545, 4294901760
      %1547 = vmatmul.mubr.f32.gmra.mrb[0].mxu0 %v1546
      %v1548 = vpop.f32.mrb[0].mxu0
      %v1549 = vadd.f32 %v1445, %v1548
      %v1550 = vpop.f32.mrb[0].mxu0
      %1551 = vmatprep.mubr.f32.mxu0 0.0
      %v1552 = vand.u32 %v1102, 4294901760
      %v1553 = vsub.f32 %v1102, %v1552
      %v1554 = vand.u32 %v1553, 4294901760
      %1555 = vmatmul.mubr.f32.gmra.mrb[0].mxu0 %v1554
      %v1556 = vpop.f32.mrb[0].mxu0
      %v1557 = vadd.f32 %v1452, %v1556
      %v1558 = vpop.f32.mrb[0].mxu0
      %1559 = vdwg.mxu0
      %1560 = vmatprep.subr.mxu0 0.0
      %v1561 = vand.u32 %v1044, 4294901760
      %v1562 = vsub.f32 %v1044, %v1561
      %v1563 = vand.u32 %v1562, 4294901760
      %1564 = vmatpush1.msra.mxu0 %v1563
      %1565 = vmatprep.subr.mxu0 0.0
      %v1566 = vand.u32 %v1045, 4294901760
      %v1567 = vsub.f32 %v1045, %v1566
      %v1568 = vand.u32 %v1567, 4294901760
      %1569 = vmatpush1.msra.mxu0 %v1568
      %1570 = vmatprep.subr.mxu0 0.0
      %v1571 = vand.u32 %v1046, 4294901760
      %v1572 = vsub.f32 %v1046, %v1571
      %v1573 = vand.u32 %v1572, 4294901760
      %1574 = vmatpush1.msra.mxu0 %v1573
      %1575 = vmatprep.subr.mxu0 0.0
      %v1576 = vand.u32 %v1047, 4294901760
      %v1577 = vsub.f32 %v1047, %v1576
      %v1578 = vand.u32 %v1577, 4294901760
      %1579 = vmatpush1.msra.mxu0 %v1578
      %1580 = vmatprep.subr.mxu0 0.0
      %v1581 = vand.u32 %v1048, 4294901760
      %v1582 = vsub.f32 %v1048, %v1581
      %v1583 = vand.u32 %v1582, 4294901760
      %1584 = vmatpush1.msra.mxu0 %v1583
      %1585 = vmatprep.subr.mxu0 0.0
      %v1586 = vand.u32 %v1049, 4294901760
      %v1587 = vsub.f32 %v1049, %v1586
      %v1588 = vand.u32 %v1587, 4294901760
      %1589 = vmatpush1.msra.mxu0 %v1588
      %1590 = vmatprep.subr.mxu0 0.0
      %v1591 = vand.u32 %v1050, 4294901760
      %v1592 = vsub.f32 %v1050, %v1591
      %v1593 = vand.u32 %v1592, 4294901760
      %1594 = vmatpush1.msra.mxu0 %v1593
      %1595 = vmatprep.subr.mxu0 0.0
      %v1596 = vand.u32 %v1051, 4294901760
      %v1597 = vsub.f32 %v1051, %v1596
      %v1598 = vand.u32 %v1597, 4294901760
      %1599 = vmatpush1.msra.mxu0 %v1598
      %1600 = vmatprep.subr.mxu0 0.0
      %1601 = vmatpush1.msra.mxu0 0.0
      %1602 = vmatprep.subr.mxu0 0.0
      %1603 = vmatpush1.msra.mxu0 0.0
      %1604 = vmatprep.subr.mxu0 0.0
      %1605 = vmatpush1.msra.mxu0 0.0
      %1606 = vmatprep.subr.mxu0 0.0
      %1607 = vmatpush1.msra.mxu0 0.0
      %1608 = vmatprep.subr.mxu0 0.0
      %1609 = vmatpush1.msra.mxu0 0.0
      %1610 = vmatprep.subr.mxu0 0.0
      %1611 = vmatpush1.msra.mxu0 0.0
      %1612 = vmatprep.subr.mxu0 0.0
      %1613 = vmatpush1.msra.mxu0 0.0
      %1614 = vmatprep.subr.mxu0 0.0
      %1615 = vmatpush1.msra.mxu0 0.0
      %1616 = vmatprep.subr.mxu0 0.0
      %1617 = vmatpush1.msra.mxu0 0.0
      %1618 = vmatprep.subr.mxu0 0.0
      %1619 = vmatpush1.msra.mxu0 0.0
      %1620 = vmatprep.subr.mxu0 0.0
      %1621 = vmatpush1.msra.mxu0 0.0
      %1622 = vmatprep.subr.mxu0 0.0
      %1623 = vmatpush1.msra.mxu0 0.0
      %1624 = vmatprep.subr.mxu0 0.0
      %1625 = vmatpush1.msra.mxu0 0.0
      %1626 = vmatprep.subr.mxu0 0.0
      %1627 = vmatpush1.msra.mxu0 0.0
      %1628 = vmatprep.subr.mxu0 0.0
      %1629 = vmatpush1.msra.mxu0 0.0
      %1630 = vmatprep.subr.mxu0 0.0
      %1631 = vmatpush1.msra.mxu0 0.0
      %1632 = vmatprep.subr.mxu0 0.0
      %1633 = vmatpush1.msra.mxu0 0.0
      %1634 = vmatprep.subr.mxu0 0.0
      %1635 = vmatpush1.msra.mxu0 0.0
      %1636 = vmatprep.subr.mxu0 0.0
      %1637 = vmatpush1.msra.mxu0 0.0
      %1638 = vmatprep.subr.mxu0 0.0
      %1639 = vmatpush1.msra.mxu0 0.0
      %1640 = vmatprep.subr.mxu0 0.0
      %1641 = vmatpush1.msra.mxu0 0.0
      %1642 = vmatprep.subr.mxu0 0.0
      %1643 = vmatpush1.msra.mxu0 0.0
      %1644 = vmatprep.subr.mxu0 0.0
      %1645 = vmatpush1.msra.mxu0 0.0
      %1646 = vmatprep.subr.mxu0 0.0
      %1647 = vmatpush1.msra.mxu0 0.0
      %1648 = vmatprep.mubr.f32.mxu0 0.0
      %v1649 = vand.u32 %v1093, 4294901760
      %1650 = vmatmul.mubr.f32.gmra.mrb[0].mxu0 %v1649
      %v1651 = vpop.f32.mrb[0].mxu0
      %v1652 = vadd.f32 %v1533, %v1651
      %v1653 = vpop.f32.mrb[0].mxu0
      %1654 = vmatprep.mubr.f32.mxu0 0.0
      %v1655 = vand.u32 %v1096, 4294901760
      %1656 = vmatmul.mubr.f32.gmra.mrb[0].mxu0 %v1655
      %v1657 = vpop.f32.mrb[0].mxu0
      %v1658 = vadd.f32 %v1541, %v1657
      %v1659 = vpop.f32.mrb[0].mxu0
      %1660 = vmatprep.mubr.f32.mxu0 0.0
      %v1661 = vand.u32 %v1099, 4294901760
      %1662 = vmatmul.mubr.f32.gmra.mrb[0].mxu0 %v1661
      %v1663 = vpop.f32.mrb[0].mxu0
      %v1664 = vadd.f32 %v1549, %v1663
      %v1665 = vpop.f32.mrb[0].mxu0
      %1666 = vmatprep.mubr.f32.mxu0 0.0
      %v1667 = vand.u32 %v1102, 4294901760
      %1668 = vmatmul.mubr.f32.gmra.mrb[0].mxu0 %v1667
      %v1669 = vpop.f32.mrb[0].mxu0
      %v1670 = vadd.f32 %v1557, %v1669
      %v1671 = vpop.f32.mrb[0].mxu0
      %1672 = vdwg.mxu0
      %1673 = vmatprep.subr.mxu0 0.0
      %v1674 = vand.u32 %v1044, 4294901760
      %1675 = vmatpush1.msra.mxu0 %v1674
      %1676 = vmatprep.subr.mxu0 0.0
      %v1677 = vand.u32 %v1045, 4294901760
      %1678 = vmatpush1.msra.mxu0 %v1677
      %1679 = vmatprep.subr.mxu0 0.0
      %v1680 = vand.u32 %v1046, 4294901760
      %1681 = vmatpush1.msra.mxu0 %v1680
      %1682 = vmatprep.subr.mxu0 0.0
      %v1683 = vand.u32 %v1047, 4294901760
      %1684 = vmatpush1.msra.mxu0 %v1683
      %1685 = vmatprep.subr.mxu0 0.0
      %v1686 = vand.u32 %v1048, 4294901760
      %1687 = vmatpush1.msra.mxu0 %v1686
      %1688 = vmatprep.subr.mxu0 0.0
      %v1689 = vand.u32 %v1049, 4294901760
      %1690 = vmatpush1.msra.mxu0 %v1689
      %1691 = vmatprep.subr.mxu0 0.0
      %v1692 = vand.u32 %v1050, 4294901760
      %1693 = vmatpush1.msra.mxu0 %v1692
      %1694 = vmatprep.subr.mxu0 0.0
      %v1695 = vand.u32 %v1051, 4294901760
      %1696 = vmatpush1.msra.mxu0 %v1695
      %1697 = vmatprep.subr.mxu0 0.0
      %1698 = vmatpush1.msra.mxu0 0.0
      %1699 = vmatprep.subr.mxu0 0.0
      %1700 = vmatpush1.msra.mxu0 0.0
      %1701 = vmatprep.subr.mxu0 0.0
      %1702 = vmatpush1.msra.mxu0 0.0
      %1703 = vmatprep.subr.mxu0 0.0
      %1704 = vmatpush1.msra.mxu0 0.0
      %1705 = vmatprep.subr.mxu0 0.0
      %1706 = vmatpush1.msra.mxu0 0.0
      %1707 = vmatprep.subr.mxu0 0.0
      %1708 = vmatpush1.msra.mxu0 0.0
      %1709 = vmatprep.subr.mxu0 0.0
      %1710 = vmatpush1.msra.mxu0 0.0
      %1711 = vmatprep.subr.mxu0 0.0
      %1712 = vmatpush1.msra.mxu0 0.0
      %1713 = vmatprep.subr.mxu0 0.0
      %1714 = vmatpush1.msra.mxu0 0.0
      %1715 = vmatprep.subr.mxu0 0.0
      %1716 = vmatpush1.msra.mxu0 0.0
      %1717 = vmatprep.subr.mxu0 0.0
      %1718 = vmatpush1.msra.mxu0 0.0
      %1719 = vmatprep.subr.mxu0 0.0
      %1720 = vmatpush1.msra.mxu0 0.0
      %1721 = vmatprep.subr.mxu0 0.0
      %1722 = vmatpush1.msra.mxu0 0.0
      %1723 = vmatprep.subr.mxu0 0.0
      %1724 = vmatpush1.msra.mxu0 0.0
      %1725 = vmatprep.subr.mxu0 0.0
      %1726 = vmatpush1.msra.mxu0 0.0
      %1727 = vmatprep.subr.mxu0 0.0
      %1728 = vmatpush1.msra.mxu0 0.0
      %1729 = vmatprep.subr.mxu0 0.0
      %1730 = vmatpush1.msra.mxu0 0.0
      %1731 = vmatprep.subr.mxu0 0.0
      %1732 = vmatpush1.msra.mxu0 0.0
      %1733 = vmatprep.subr.mxu0 0.0
      %1734 = vmatpush1.msra.mxu0 0.0
      %1735 = vmatprep.subr.mxu0 0.0
      %1736 = vmatpush1.msra.mxu0 0.0
      %1737 = vmatprep.subr.mxu0 0.0
      %1738 = vmatpush1.msra.mxu0 0.0
      %1739 = vmatprep.subr.mxu0 0.0
      %1740 = vmatpush1.msra.mxu0 0.0
      %1741 = vmatprep.subr.mxu0 0.0
      %1742 = vmatpush1.msra.mxu0 0.0
      %1743 = vmatprep.subr.mxu0 0.0
      %1744 = vmatpush1.msra.mxu0 0.0
      %1745 = vmatprep.mubr.f32.mxu0 0.0
      %v1746 = vand.u32 %v1093, 4294901760
      %1747 = vmatmul.mubr.f32.gmra.mrb[0].mxu0 %v1746
      %v1748 = vpop.f32.mrb[0].mxu0
      %v1749 = vadd.f32 %v1652, %v1748
      %v1750 = vpop.f32.mrb[0].mxu0
      %1751 = vmatprep.mubr.f32.mxu0 0.0
      %v1752 = vand.u32 %v1096, 4294901760
      %1753 = vmatmul.mubr.f32.gmra.mrb[0].mxu0 %v1752
      %v1754 = vpop.f32.mrb[0].mxu0
      %v1755 = vadd.f32 %v1658, %v1754
      %v1756 = vpop.f32.mrb[0].mxu0
      %1757 = vmatprep.mubr.f32.mxu0 0.0
      %v1758 = vand.u32 %v1099, 4294901760
      %1759 = vmatmul.mubr.f32.gmra.mrb[0].mxu0 %v1758
      %v1760 = vpop.f32.mrb[0].mxu0
      %v1761 = vadd.f32 %v1664, %v1760
      %v1762 = vpop.f32.mrb[0].mxu0
      %1763 = vmatprep.mubr.f32.mxu0 0.0
      %v1764 = vand.u32 %v1102, 4294901760
      %1765 = vmatmul.mubr.f32.gmra.mrb[0].mxu0 %v1764
      %v1766 = vpop.f32.mrb[0].mxu0
      %v1767 = vadd.f32 %v1670, %v1766
      %v1768 = vpop.f32.mrb[0].mxu0
      %1769 = vdwg.mxu0
      %v1770 = vld [vmem:[%s3] sm:$0xff]
      %v1771 = vld [vmem:[%s3 + $0x8] sm:$0xff]
      %v1772 = vld [vmem:[%s3 + $0x10] sm:$0xff]
      %v1773 = vld [vmem:[%s3 + $0x18] sm:$0xff]
      %v1774 = vld [vmem:[%s3 + $0x20] sm:$0xff]
      %v1775 = vld [vmem:[%s3 + $0x28] sm:$0xff]
      %v1776 = vld [vmem:[%s3 + $0x30] sm:$0xff]
      %v1777 = vld [vmem:[%s3 + $0x38] sm:$0xff]
      %v1778 = vld [vmem:[%s6] sm:$0xff]
      %v1779 = vld [vmem:[%s6 + $0x8] sm:$0xff]
      %v1780 = vld [vmem:[%s6 + $0x10] sm:$0xff]
      %v1781 = vld [vmem:[%s6 + $0x18] sm:$0xff]
      %v1782 = vld [vmem:[%s6 + $0x20] sm:$0xff]
      %v1783 = vld [vmem:[%s6 + $0x28] sm:$0xff]
      %v1784 = vld [vmem:[%s6 + $0x30] sm:$0xff]
      %v1785 = vld [vmem:[%s6 + $0x38] sm:$0xff]
      %vm1786 = vcmask 261120
      %v1788 = vsel %vm1786, %v1770, 0
      %v1791 = vsel %vm1786, %v1771, 0
      %v1794 = vsel %vm1786, %v1772, 0
      %v1797 = vsel %vm1786, %v1773, 0
      %v1800 = vsel %vm1786, %v1774, 0
      %v1803 = vsel %vm1786, %v1775, 0
      %v1806 = vsel %vm1786, %v1776, 0
      %v1809 = vsel %vm1786, %v1777, 0
      %1811 = vmatprep.subr.mxu0 0.0
      %v1812 = vand.u32 %v1749, 4294901760
      %1813 = vmatpush1.msra.mxu0 %v1812
      %1814 = vmatprep.subr.mxu0 0.0
      %v1815 = vand.u32 %v1755, 4294901760
      %1816 = vmatpush1.msra.mxu0 %v1815
      %1817 = vmatprep.subr.mxu0 0.0
      %v1818 = vand.u32 %v1761, 4294901760
      %1819 = vmatpush1.msra.mxu0 %v1818
      %1820 = vmatprep.subr.mxu0 0.0
      %v1821 = vand.u32 %v1767, 4294901760
      %1822 = vmatpush1.msra.mxu0 %v1821
      %1823 = vmatprep.subr.mxu0 0.0
      %1824 = vmatpush1.msra.mxu0 0.0
      %1825 = vmatprep.subr.mxu0 0.0
      %1826 = vmatpush1.msra.mxu0 0.0
      %1827 = vmatprep.subr.mxu0 0.0
      %1828 = vmatpush1.msra.mxu0 0.0
      %1829 = vmatprep.subr.mxu0 0.0
      %1830 = vmatpush1.msra.mxu0 0.0
      %1831 = vmatprep.subr.mxu0 0.0
      %1832 = vmatpush1.msra.mxu0 0.0
      %1833 = vmatprep.subr.mxu0 0.0
      %1834 = vmatpush1.msra.mxu0 0.0
      %1835 = vmatprep.subr.mxu0 0.0
      %1836 = vmatpush1.msra.mxu0 0.0
      %1837 = vmatprep.subr.mxu0 0.0
      %1838 = vmatpush1.msra.mxu0 0.0
      %1839 = vmatprep.subr.mxu0 0.0
      %1840 = vmatpush1.msra.mxu0 0.0
      %1841 = vmatprep.subr.mxu0 0.0
      %1842 = vmatpush1.msra.mxu0 0.0
      %1843 = vmatprep.subr.mxu0 0.0
      %1844 = vmatpush1.msra.mxu0 0.0
      %1845 = vmatprep.subr.mxu0 0.0
      %1846 = vmatpush1.msra.mxu0 0.0
      %1847 = vmatprep.subr.mxu0 0.0
      %1848 = vmatpush1.msra.mxu0 0.0
      %1849 = vmatprep.subr.mxu0 0.0
      %1850 = vmatpush1.msra.mxu0 0.0
      %1851 = vmatprep.subr.mxu0 0.0
      %1852 = vmatpush1.msra.mxu0 0.0
      %1853 = vmatprep.subr.mxu0 0.0
      %1854 = vmatpush1.msra.mxu0 0.0
      %1855 = vmatprep.subr.mxu0 0.0
      %1856 = vmatpush1.msra.mxu0 0.0
      %1857 = vmatprep.subr.mxu0 0.0
      %1858 = vmatpush1.msra.mxu0 0.0
      %1859 = vmatprep.subr.mxu0 0.0
      %1860 = vmatpush1.msra.mxu0 0.0
      %1861 = vmatprep.subr.mxu0 0.0
      %1862 = vmatpush1.msra.mxu0 0.0
      %1863 = vmatprep.subr.mxu0 0.0
      %1864 = vmatpush1.msra.mxu0 0.0
      %1865 = vmatprep.subr.mxu0 0.0
      %1866 = vmatpush1.msra.mxu0 0.0
      %1867 = vmatprep.subr.mxu0 0.0
      %1868 = vmatpush1.msra.mxu0 0.0
      %1869 = vmatprep.subr.mxu0 0.0
      %1870 = vmatpush1.msra.mxu0 0.0
      %1871 = vmatprep.subr.mxu0 0.0
      %1872 = vmatpush1.msra.mxu0 0.0
      %1873 = vmatprep.subr.mxu0 0.0
      %1874 = vmatpush1.msra.mxu0 0.0
      %1875 = vmatprep.subr.mxu0 0.0
      %1876 = vmatpush1.msra.mxu0 0.0
      %1877 = vmatprep.subr.mxu0 0.0
      %1878 = vmatpush1.msra.mxu0 0.0
      %1879 = vmatprep.mubr.f32.mxu0 0.0
      %v1880 = vand.u32 %v1788, 4294901760
      %v1881 = vsub.f32 %v1788, %v1880
      %v1882 = vand.u32 %v1881, 4294901760
      %v1883 = vsub.f32 %v1881, %v1882
      %v1884 = vand.u32 %v1883, 4294901760
      %1885 = vmatmul.mubr.f32.gmra.mrb[0].mxu0 %v1884
      %v1886 = vpop.f32.mrb[0].mxu0
      %v1887 = vadd.f32 %v1778, %v1886
      %v1888 = vpop.f32.mrb[0].mxu0
      %1889 = vmatprep.mubr.f32.mxu0 0.0
      %v1890 = vand.u32 %v1791, 4294901760
      %v1891 = vsub.f32 %v1791, %v1890
      %v1892 = vand.u32 %v1891, 4294901760
      %v1893 = vsub.f32 %v1891, %v1892
      %v1894 = vand.u32 %v1893, 4294901760
      %1895 = vmatmul.mubr.f32.gmra.mrb[0].mxu0 %v1894
      %v1896 = vpop.f32.mrb[0].mxu0
      %v1897 = vadd.f32 %v1779, %v1896
      %v1898 = vpop.f32.mrb[0].mxu0
      %1899 = vmatprep.mubr.f32.mxu0 0.0
      %v1900 = vand.u32 %v1794, 4294901760
      %v1901 = vsub.f32 %v1794, %v1900
      %v1902 = vand.u32 %v1901, 4294901760
      %v1903 = vsub.f32 %v1901, %v1902
      %v1904 = vand.u32 %v1903, 4294901760
      %1905 = vmatmul.mubr.f32.gmra.mrb[0].mxu0 %v1904
      %v1906 = vpop.f32.mrb[0].mxu0
      %v1907 = vadd.f32 %v1780, %v1906
      %v1908 = vpop.f32.mrb[0].mxu0
      %1909 = vmatprep.mubr.f32.mxu0 0.0
      %v1910 = vand.u32 %v1797, 4294901760
      %v1911 = vsub.f32 %v1797, %v1910
      %v1912 = vand.u32 %v1911, 4294901760
      %v1913 = vsub.f32 %v1911, %v1912
      %v1914 = vand.u32 %v1913, 4294901760
      %1915 = vmatmul.mubr.f32.gmra.mrb[0].mxu0 %v1914
      %v1916 = vpop.f32.mrb[0].mxu0
      %v1917 = vadd.f32 %v1781, %v1916
      %v1918 = vpop.f32.mrb[0].mxu0
      %1919 = vmatprep.mubr.f32.mxu0 0.0
      %v1920 = vand.u32 %v1800, 4294901760
      %v1921 = vsub.f32 %v1800, %v1920
      %v1922 = vand.u32 %v1921, 4294901760
      %v1923 = vsub.f32 %v1921, %v1922
      %v1924 = vand.u32 %v1923, 4294901760
      %1925 = vmatmul.mubr.f32.gmra.mrb[0].mxu0 %v1924
      %v1926 = vpop.f32.mrb[0].mxu0
      %v1927 = vadd.f32 %v1782, %v1926
      %v1928 = vpop.f32.mrb[0].mxu0
      %1929 = vmatprep.mubr.f32.mxu0 0.0
      %v1930 = vand.u32 %v1803, 4294901760
      %v1931 = vsub.f32 %v1803, %v1930
      %v1932 = vand.u32 %v1931, 4294901760
      %v1933 = vsub.f32 %v1931, %v1932
      %v1934 = vand.u32 %v1933, 4294901760
      %1935 = vmatmul.mubr.f32.gmra.mrb[0].mxu0 %v1934
      %v1936 = vpop.f32.mrb[0].mxu0
      %v1937 = vadd.f32 %v1783, %v1936
      %v1938 = vpop.f32.mrb[0].mxu0
      %1939 = vmatprep.mubr.f32.mxu0 0.0
      %v1940 = vand.u32 %v1806, 4294901760
      %v1941 = vsub.f32 %v1806, %v1940
      %v1942 = vand.u32 %v1941, 4294901760
      %v1943 = vsub.f32 %v1941, %v1942
      %v1944 = vand.u32 %v1943, 4294901760
      %1945 = vmatmul.mubr.f32.gmra.mrb[0].mxu0 %v1944
      %v1946 = vpop.f32.mrb[0].mxu0
      %v1947 = vadd.f32 %v1784, %v1946
      %v1948 = vpop.f32.mrb[0].mxu0
      %1949 = vmatprep.mubr.f32.mxu0 0.0
      %v1950 = vand.u32 %v1809, 4294901760
      %v1951 = vsub.f32 %v1809, %v1950
      %v1952 = vand.u32 %v1951, 4294901760
      %v1953 = vsub.f32 %v1951, %v1952
      %v1954 = vand.u32 %v1953, 4294901760
      %1955 = vmatmul.mubr.f32.gmra.mrb[0].mxu0 %v1954
      %v1956 = vpop.f32.mrb[0].mxu0
      %v1957 = vadd.f32 %v1785, %v1956
      %v1958 = vpop.f32.mrb[0].mxu0
      %1959 = vdwg.mxu0
      %1960 = vmatprep.subr.mxu0 0.0
      %v1961 = vand.u32 %v1749, 4294901760
      %v1962 = vsub.f32 %v1749, %v1961
      %v1963 = vand.u32 %v1962, 4294901760
      %v1964 = vsub.f32 %v1962, %v1963
      %v1965 = vand.u32 %v1964, 4294901760
      %1966 = vmatpush1.msra.mxu0 %v1965
      %1967 = vmatprep.subr.mxu0 0.0
      %v1968 = vand.u32 %v1755, 4294901760
      %v1969 = vsub.f32 %v1755, %v1968
      %v1970 = vand.u32 %v1969, 4294901760
      %v1971 = vsub.f32 %v1969, %v1970
      %v1972 = vand.u32 %v1971, 4294901760
      %1973 = vmatpush1.msra.mxu0 %v1972
      %1974 = vmatprep.subr.mxu0 0.0
      %v1975 = vand.u32 %v1761, 4294901760
      %v1976 = vsub.f32 %v1761, %v1975
      %v1977 = vand.u32 %v1976, 4294901760
      %v1978 = vsub.f32 %v1976, %v1977
      %v1979 = vand.u32 %v1978, 4294901760
      %1980 = vmatpush1.msra.mxu0 %v1979
      %1981 = vmatprep.subr.mxu0 0.0
      %v1982 = vand.u32 %v1767, 4294901760
      %v1983 = vsub.f32 %v1767, %v1982
      %v1984 = vand.u32 %v1983, 4294901760
      %v1985 = vsub.f32 %v1983, %v1984
      %v1986 = vand.u32 %v1985, 4294901760
      %1987 = vmatpush1.msra.mxu0 %v1986
      %1988 = vmatprep.subr.mxu0 0.0
      %1989 = vmatpush1.msra.mxu0 0.0
      %1990 = vmatprep.subr.mxu0 0.0
      %1991 = vmatpush1.msra.mxu0 0.0
      %1992 = vmatprep.subr.mxu0 0.0
      %1993 = vmatpush1.msra.mxu0 0.0
      %1994 = vmatprep.subr.mxu0 0.0
      %1995 = vmatpush1.msra.mxu0 0.0
      %1996 = vmatprep.subr.mxu0 0.0
      %1997 = vmatpush1.msra.mxu0 0.0
      %1998 = vmatprep.subr.mxu0 0.0
      %1999 = vmatpush1.msra.mxu0 0.0
      %2000 = vmatprep.subr.mxu0 0.0
      %2001 = vmatpush1.msra.mxu0 0.0
      %2002 = vmatprep.subr.mxu0 0.0
      %2003 = vmatpush1.msra.mxu0 0.0
      %2004 = vmatprep.subr.mxu0 0.0
      %2005 = vmatpush1.msra.mxu0 0.0
      %2006 = vmatprep.subr.mxu0 0.0
      %2007 = vmatpush1.msra.mxu0 0.0
      %2008 = vmatprep.subr.mxu0 0.0
      %2009 = vmatpush1.msra.mxu0 0.0
      %2010 = vmatprep.subr.mxu0 0.0
      %2011 = vmatpush1.msra.mxu0 0.0
      %2012 = vmatprep.subr.mxu0 0.0
      %2013 = vmatpush1.msra.mxu0 0.0
      %2014 = vmatprep.subr.mxu0 0.0
      %2015 = vmatpush1.msra.mxu0 0.0
      %2016 = vmatprep.subr.mxu0 0.0
      %2017 = vmatpush1.msra.mxu0 0.0
      %2018 = vmatprep.subr.mxu0 0.0
      %2019 = vmatpush1.msra.mxu0 0.0
      %2020 = vmatprep.subr.mxu0 0.0
      %2021 = vmatpush1.msra.mxu0 0.0
      %2022 = vmatprep.subr.mxu0 0.0
      %2023 = vmatpush1.msra.mxu0 0.0
      %2024 = vmatprep.subr.mxu0 0.0
      %2025 = vmatpush1.msra.mxu0 0.0
      %2026 = vmatprep.subr.mxu0 0.0
      %2027 = vmatpush1.msra.mxu0 0.0
      %2028 = vmatprep.subr.mxu0 0.0
      %2029 = vmatpush1.msra.mxu0 0.0
      %2030 = vmatprep.subr.mxu0 0.0
      %2031 = vmatpush1.msra.mxu0 0.0
      %2032 = vmatprep.subr.mxu0 0.0
      %2033 = vmatpush1.msra.mxu0 0.0
      %2034 = vmatprep.subr.mxu0 0.0
      %2035 = vmatpush1.msra.mxu0 0.0
      %2036 = vmatprep.subr.mxu0 0.0
      %2037 = vmatpush1.msra.mxu0 0.0
      %2038 = vmatprep.subr.mxu0 0.0
      %2039 = vmatpush1.msra.mxu0 0.0
      %2040 = vmatprep.subr.mxu0 0.0
      %2041 = vmatpush1.msra.mxu0 0.0
      %2042 = vmatprep.subr.mxu0 0.0
      %2043 = vmatpush1.msra.mxu0 0.0
      %2044 = vmatprep.mubr.f32.mxu0 0.0
      %v2045 = vand.u32 %v1788, 4294901760
      %2046 = vmatmul.mubr.f32.gmra.mrb[0].mxu0 %v2045
      %v2047 = vpop.f32.mrb[0].mxu0
      %v2048 = vadd.f32 %v1887, %v2047
      %v2049 = vpop.f32.mrb[0].mxu0
      %2050 = vmatprep.mubr.f32.mxu0 0.0
      %v2051 = vand.u32 %v1791, 4294901760
      %2052 = vmatmul.mubr.f32.gmra.mrb[0].mxu0 %v2051
      %v2053 = vpop.f32.mrb[0].mxu0
      %v2054 = vadd.f32 %v1897, %v2053
      %v2055 = vpop.f32.mrb[0].mxu0
      %2056 = vmatprep.mubr.f32.mxu0 0.0
      %v2057 = vand.u32 %v1794, 4294901760
      %2058 = vmatmul.mubr.f32.gmra.mrb[0].mxu0 %v2057
      %v2059 = vpop.f32.mrb[0].mxu0
      %v2060 = vadd.f32 %v1907, %v2059
      %v2061 = vpop.f32.mrb[0].mxu0
      %2062 = vmatprep.mubr.f32.mxu0 0.0
      %v2063 = vand.u32 %v1797, 4294901760
      %2064 = vmatmul.mubr.f32.gmra.mrb[0].mxu0 %v2063
      %v2065 = vpop.f32.mrb[0].mxu0
      %v2066 = vadd.f32 %v1917, %v2065
      %v2067 = vpop.f32.mrb[0].mxu0
      %2068 = vmatprep.mubr.f32.mxu0 0.0
      %v2069 = vand.u32 %v1800, 4294901760
      %2070 = vmatmul.mubr.f32.gmra.mrb[0].mxu0 %v2069
      %v2071 = vpop.f32.mrb[0].mxu0
      %v2072 = vadd.f32 %v1927, %v2071
      %v2073 = vpop.f32.mrb[0].mxu0
      %2074 = vmatprep.mubr.f32.mxu0 0.0
      %v2075 = vand.u32 %v1803, 4294901760
      %2076 = vmatmul.mubr.f32.gmra.mrb[0].mxu0 %v2075
      %v2077 = vpop.f32.mrb[0].mxu0
      %v2078 = vadd.f32 %v1937, %v2077
      %v2079 = vpop.f32.mrb[0].mxu0
      %2080 = vmatprep.mubr.f32.mxu0 0.0
      %v2081 = vand.u32 %v1806, 4294901760
      %2082 = vmatmul.mubr.f32.gmra.mrb[0].mxu0 %v2081
      %v2083 = vpop.f32.mrb[0].mxu0
      %v2084 = vadd.f32 %v1947, %v2083
      %v2085 = vpop.f32.mrb[0].mxu0
      %2086 = vmatprep.mubr.f32.mxu0 0.0
      %v2087 = vand.u32 %v1809, 4294901760
      %2088 = vmatmul.mubr.f32.gmra.mrb[0].mxu0 %v2087
      %v2089 = vpop.f32.mrb[0].mxu0
      %v2090 = vadd.f32 %v1957, %v2089
      %v2091 = vpop.f32.mrb[0].mxu0
      %2092 = vdwg.mxu0
      %2093 = vmatprep.subr.mxu0 0.0
      %v2094 = vand.u32 %v1749, 4294901760
      %v2095 = vsub.f32 %v1749, %v2094
      %2096 = vmatpush1.msra.mxu0 %v2095
      %2097 = vmatprep.subr.mxu0 0.0
      %v2098 = vand.u32 %v1755, 4294901760
      %v2099 = vsub.f32 %v1755, %v2098
      %2100 = vmatpush1.msra.mxu0 %v2099
      %2101 = vmatprep.subr.mxu0 0.0
      %v2102 = vand.u32 %v1761, 4294901760
      %v2103 = vsub.f32 %v1761, %v2102
      %2104 = vmatpush1.msra.mxu0 %v2103
      %2105 = vmatprep.subr.mxu0 0.0
      %v2106 = vand.u32 %v1767, 4294901760
      %v2107 = vsub.f32 %v1767, %v2106
      %2108 = vmatpush1.msra.mxu0 %v2107
      %2109 = vmatprep.subr.mxu0 0.0
      %2110 = vmatpush1.msra.mxu0 0.0
      %2111 = vmatprep.subr.mxu0 0.0
      %2112 = vmatpush1.msra.mxu0 0.0
      %2113 = vmatprep.subr.mxu0 0.0
      %2114 = vmatpush1.msra.mxu0 0.0
      %2115 = vmatprep.subr.mxu0 0.0
      %2116 = vmatpush1.msra.mxu0 0.0
      %2117 = vmatprep.subr.mxu0 0.0
      %2118 = vmatpush1.msra.mxu0 0.0
      %2119 = vmatprep.subr.mxu0 0.0
      %2120 = vmatpush1.msra.mxu0 0.0
      %2121 = vmatprep.subr.mxu0 0.0
      %2122 = vmatpush1.msra.mxu0 0.0
      %2123 = vmatprep.subr.mxu0 0.0
      %2124 = vmatpush1.msra.mxu0 0.0
      %2125 = vmatprep.subr.mxu0 0.0
      %2126 = vmatpush1.msra.mxu0 0.0
      %2127 = vmatprep.subr.mxu0 0.0
      %2128 = vmatpush1.msra.mxu0 0.0
      %2129 = vmatprep.subr.mxu0 0.0
      %2130 = vmatpush1.msra.mxu0 0.0
      %2131 = vmatprep.subr.mxu0 0.0
      %2132 = vmatpush1.msra.mxu0 0.0
      %2133 = vmatprep.subr.mxu0 0.0
      %2134 = vmatpush1.msra.mxu0 0.0
      %2135 = vmatprep.subr.mxu0 0.0
      %2136 = vmatpush1.msra.mxu0 0.0
      %2137 = vmatprep.subr.mxu0 0.0
      %2138 = vmatpush1.msra.mxu0 0.0
      %2139 = vmatprep.subr.mxu0 0.0
      %2140 = vmatpush1.msra.mxu0 0.0
      %2141 = vmatprep.subr.mxu0 0.0
      %2142 = vmatpush1.msra.mxu0 0.0
      %2143 = vmatprep.subr.mxu0 0.0
      %2144 = vmatpush1.msra.mxu0 0.0
      %2145 = vmatprep.subr.mxu0 0.0
      %2146 = vmatpush1.msra.mxu0 0.0
      %2147 = vmatprep.subr.mxu0 0.0
      %2148 = vmatpush1.msra.mxu0 0.0
      %2149 = vmatprep.subr.mxu0 0.0
      %2150 = vmatpush1.msra.mxu0 0.0
      %2151 = vmatprep.subr.mxu0 0.0
      %2152 = vmatpush1.msra.mxu0 0.0
      %2153 = vmatprep.subr.mxu0 0.0
      %2154 = vmatpush1.msra.mxu0 0.0
      %2155 = vmatprep.subr.mxu0 0.0
      %2156 = vmatpush1.msra.mxu0 0.0
      %2157 = vmatprep.subr.mxu0 0.0
      %2158 = vmatpush1.msra.mxu0 0.0
      %2159 = vmatprep.subr.mxu0 0.0
      %2160 = vmatpush1.msra.mxu0 0.0
      %2161 = vmatprep.subr.mxu0 0.0
      %2162 = vmatpush1.msra.mxu0 0.0
      %2163 = vmatprep.subr.mxu0 0.0
      %2164 = vmatpush1.msra.mxu0 0.0
      %2165 = vmatprep.mubr.f32.mxu0 0.0
      %v2166 = vand.u32 %v1788, 4294901760
      %v2167 = vsub.f32 %v1788, %v2166
      %2168 = vmatmul.mubr.f32.gmra.mrb[0].mxu0 %v2167
      %v2169 = vpop.f32.mrb[0].mxu0
      %v2170 = vadd.f32 %v2048, %v2169
      %v2171 = vpop.f32.mrb[0].mxu0
      %2172 = vmatprep.mubr.f32.mxu0 0.0
      %v2173 = vand.u32 %v1791, 4294901760
      %v2174 = vsub.f32 %v1791, %v2173
      %2175 = vmatmul.mubr.f32.gmra.mrb[0].mxu0 %v2174
      %v2176 = vpop.f32.mrb[0].mxu0
      %v2177 = vadd.f32 %v2054, %v2176
      %v2178 = vpop.f32.mrb[0].mxu0
      %2179 = vmatprep.mubr.f32.mxu0 0.0
      %v2180 = vand.u32 %v1794, 4294901760
      %v2181 = vsub.f32 %v1794, %v2180
      %2182 = vmatmul.mubr.f32.gmra.mrb[0].mxu0 %v2181
      %v2183 = vpop.f32.mrb[0].mxu0
      %v2184 = vadd.f32 %v2060, %v2183
      %v2185 = vpop.f32.mrb[0].mxu0
      %2186 = vmatprep.mubr.f32.mxu0 0.0
      %v2187 = vand.u32 %v1797, 4294901760
      %v2188 = vsub.f32 %v1797, %v2187
      %2189 = vmatmul.mubr.f32.gmra.mrb[0].mxu0 %v2188
      %v2190 = vpop.f32.mrb[0].mxu0
      %v2191 = vadd.f32 %v2066, %v2190
      %v2192 = vpop.f32.mrb[0].mxu0
      %2193 = vmatprep.mubr.f32.mxu0 0.0
      %v2194 = vand.u32 %v1800, 4294901760
      %v2195 = vsub.f32 %v1800, %v2194
      %2196 = vmatmul.mubr.f32.gmra.mrb[0].mxu0 %v2195
      %v2197 = vpop.f32.mrb[0].mxu0
      %v2198 = vadd.f32 %v2072, %v2197
      %v2199 = vpop.f32.mrb[0].mxu0
      %2200 = vmatprep.mubr.f32.mxu0 0.0
      %v2201 = vand.u32 %v1803, 4294901760
      %v2202 = vsub.f32 %v1803, %v2201
      %2203 = vmatmul.mubr.f32.gmra.mrb[0].mxu0 %v2202
      %v2204 = vpop.f32.mrb[0].mxu0
      %v2205 = vadd.f32 %v2078, %v2204
      %v2206 = vpop.f32.mrb[0].mxu0
      %2207 = vmatprep.mubr.f32.mxu0 0.0
      %v2208 = vand.u32 %v1806, 4294901760
      %v2209 = vsub.f32 %v1806, %v2208
      %2210 = vmatmul.mubr.f32.gmra.mrb[0].mxu0 %v2209
      %v2211 = vpop.f32.mrb[0].mxu0
      %v2212 = vadd.f32 %v2084, %v2211
      %v2213 = vpop.f32.mrb[0].mxu0
      %2214 = vmatprep.mubr.f32.mxu0 0.0
      %v2215 = vand.u32 %v1809, 4294901760
      %v2216 = vsub.f32 %v1809, %v2215
      %2217 = vmatmul.mubr.f32.gmra.mrb[0].mxu0 %v2216
      %v2218 = vpop.f32.mrb[0].mxu0
      %v2219 = vadd.f32 %v2090, %v2218
      %v2220 = vpop.f32.mrb[0].mxu0
      %2221 = vdwg.mxu0
      %2222 = vmatprep.subr.mxu0 0.0
      %v2223 = vand.u32 %v1749, 4294901760
      %2224 = vmatpush1.msra.mxu0 %v2223
      %2225 = vmatprep.subr.mxu0 0.0
      %v2226 = vand.u32 %v1755, 4294901760
      %2227 = vmatpush1.msra.mxu0 %v2226
      %2228 = vmatprep.subr.mxu0 0.0
      %v2229 = vand.u32 %v1761, 4294901760
      %2230 = vmatpush1.msra.mxu0 %v2229
      %2231 = vmatprep.subr.mxu0 0.0
      %v2232 = vand.u32 %v1767, 4294901760
      %2233 = vmatpush1.msra.mxu0 %v2232
      %2234 = vmatprep.subr.mxu0 0.0
      %2235 = vmatpush1.msra.mxu0 0.0
      %2236 = vmatprep.subr.mxu0 0.0
      %2237 = vmatpush1.msra.mxu0 0.0
      %2238 = vmatprep.subr.mxu0 0.0
      %2239 = vmatpush1.msra.mxu0 0.0
      %2240 = vmatprep.subr.mxu0 0.0
      %2241 = vmatpush1.msra.mxu0 0.0
      %2242 = vmatprep.subr.mxu0 0.0
      %2243 = vmatpush1.msra.mxu0 0.0
      %2244 = vmatprep.subr.mxu0 0.0
      %2245 = vmatpush1.msra.mxu0 0.0
      %2246 = vmatprep.subr.mxu0 0.0
      %2247 = vmatpush1.msra.mxu0 0.0
      %2248 = vmatprep.subr.mxu0 0.0
      %2249 = vmatpush1.msra.mxu0 0.0
      %2250 = vmatprep.subr.mxu0 0.0
      %2251 = vmatpush1.msra.mxu0 0.0
      %2252 = vmatprep.subr.mxu0 0.0
      %2253 = vmatpush1.msra.mxu0 0.0
      %2254 = vmatprep.subr.mxu0 0.0
      %2255 = vmatpush1.msra.mxu0 0.0
      %2256 = vmatprep.subr.mxu0 0.0
      %2257 = vmatpush1.msra.mxu0 0.0
      %2258 = vmatprep.subr.mxu0 0.0
      %2259 = vmatpush1.msra.mxu0 0.0
      %2260 = vmatprep.subr.mxu0 0.0
      %2261 = vmatpush1.msra.mxu0 0.0
      %2262 = vmatprep.subr.mxu0 0.0
      %2263 = vmatpush1.msra.mxu0 0.0
      %2264 = vmatprep.subr.mxu0 0.0
      %2265 = vmatpush1.msra.mxu0 0.0
      %2266 = vmatprep.subr.mxu0 0.0
      %2267 = vmatpush1.msra.mxu0 0.0
      %2268 = vmatprep.subr.mxu0 0.0
      %2269 = vmatpush1.msra.mxu0 0.0
      %2270 = vmatprep.subr.mxu0 0.0
      %2271 = vmatpush1.msra.mxu0 0.0
      %2272 = vmatprep.subr.mxu0 0.0
      %2273 = vmatpush1.msra.mxu0 0.0
      %2274 = vmatprep.subr.mxu0 0.0
      %2275 = vmatpush1.msra.mxu0 0.0
      %2276 = vmatprep.subr.mxu0 0.0
      %2277 = vmatpush1.msra.mxu0 0.0
      %2278 = vmatprep.subr.mxu0 0.0
      %2279 = vmatpush1.msra.mxu0 0.0
      %2280 = vmatprep.subr.mxu0 0.0
      %2281 = vmatpush1.msra.mxu0 0.0
      %2282 = vmatprep.subr.mxu0 0.0
      %2283 = vmatpush1.msra.mxu0 0.0
      %2284 = vmatprep.subr.mxu0 0.0
      %2285 = vmatpush1.msra.mxu0 0.0
      %2286 = vmatprep.subr.mxu0 0.0
      %2287 = vmatpush1.msra.mxu0 0.0
      %2288 = vmatprep.subr.mxu0 0.0
      %2289 = vmatpush1.msra.mxu0 0.0
      %2290 = vmatprep.mubr.f32.mxu0 0.0
      %v2291 = vand.u32 %v1788, 4294901760
      %v2292 = vsub.f32 %v1788, %v2291
      %v2293 = vand.u32 %v2292, 4294901760
      %2294 = vmatmul.mubr.f32.gmra.mrb[0].mxu0 %v2293
      %v2295 = vpop.f32.mrb[0].mxu0
      %v2296 = vadd.f32 %v2170, %v2295
      %v2297 = vpop.f32.mrb[0].mxu0
      %2298 = vmatprep.mubr.f32.mxu0 0.0
      %v2299 = vand.u32 %v1791, 4294901760
      %v2300 = vsub.f32 %v1791, %v2299
      %v2301 = vand.u32 %v2300, 4294901760
      %2302 = vmatmul.mubr.f32.gmra.mrb[0].mxu0 %v2301
      %v2303 = vpop.f32.mrb[0].mxu0
      %v2304 = vadd.f32 %v2177, %v2303
      %v2305 = vpop.f32.mrb[0].mxu0
      %2306 = vmatprep.mubr.f32.mxu0 0.0
      %v2307 = vand.u32 %v1794, 4294901760
      %v2308 = vsub.f32 %v1794, %v2307
      %v2309 = vand.u32 %v2308, 4294901760
      %2310 = vmatmul.mubr.f32.gmra.mrb[0].mxu0 %v2309
      %v2311 = vpop.f32.mrb[0].mxu0
      %v2312 = vadd.f32 %v2184, %v2311
      %v2313 = vpop.f32.mrb[0].mxu0
      %2314 = vmatprep.mubr.f32.mxu0 0.0
      %v2315 = vand.u32 %v1797, 4294901760
      %v2316 = vsub.f32 %v1797, %v2315
      %v2317 = vand.u32 %v2316, 4294901760
      %2318 = vmatmul.mubr.f32.gmra.mrb[0].mxu0 %v2317
      %v2319 = vpop.f32.mrb[0].mxu0
      %v2320 = vadd.f32 %v2191, %v2319
      %v2321 = vpop.f32.mrb[0].mxu0
      %2322 = vmatprep.mubr.f32.mxu0 0.0
      %v2323 = vand.u32 %v1800, 4294901760
      %v2324 = vsub.f32 %v1800, %v2323
      %v2325 = vand.u32 %v2324, 4294901760
      %2326 = vmatmul.mubr.f32.gmra.mrb[0].mxu0 %v2325
      %v2327 = vpop.f32.mrb[0].mxu0
      %v2328 = vadd.f32 %v2198, %v2327
      %v2329 = vpop.f32.mrb[0].mxu0
      %2330 = vmatprep.mubr.f32.mxu0 0.0
      %v2331 = vand.u32 %v1803, 4294901760
      %v2332 = vsub.f32 %v1803, %v2331
      %v2333 = vand.u32 %v2332, 4294901760
      %2334 = vmatmul.mubr.f32.gmra.mrb[0].mxu0 %v2333
      %v2335 = vpop.f32.mrb[0].mxu0
      %v2336 = vadd.f32 %v2205, %v2335
      %v2337 = vpop.f32.mrb[0].mxu0
      %2338 = vmatprep.mubr.f32.mxu0 0.0
      %v2339 = vand.u32 %v1806, 4294901760
      %v2340 = vsub.f32 %v1806, %v2339
      %v2341 = vand.u32 %v2340, 4294901760
      %2342 = vmatmul.mubr.f32.gmra.mrb[0].mxu0 %v2341
      %v2343 = vpop.f32.mrb[0].mxu0
      %v2344 = vadd.f32 %v2212, %v2343
      %v2345 = vpop.f32.mrb[0].mxu0
      %2346 = vmatprep.mubr.f32.mxu0 0.0
      %v2347 = vand.u32 %v1809, 4294901760
      %v2348 = vsub.f32 %v1809, %v2347
      %v2349 = vand.u32 %v2348, 4294901760
      %2350 = vmatmul.mubr.f32.gmra.mrb[0].mxu0 %v2349
      %v2351 = vpop.f32.mrb[0].mxu0
      %v2352 = vadd.f32 %v2219, %v2351
      %v2353 = vpop.f32.mrb[0].mxu0
      %2354 = vdwg.mxu0
      %2355 = vmatprep.subr.mxu0 0.0
      %v2356 = vand.u32 %v1749, 4294901760
      %v2357 = vsub.f32 %v1749, %v2356
      %v2358 = vand.u32 %v2357, 4294901760
      %2359 = vmatpush1.msra.mxu0 %v2358
      %2360 = vmatprep.subr.mxu0 0.0
      %v2361 = vand.u32 %v1755, 4294901760
      %v2362 = vsub.f32 %v1755, %v2361
      %v2363 = vand.u32 %v2362, 4294901760
      %2364 = vmatpush1.msra.mxu0 %v2363
      %2365 = vmatprep.subr.mxu0 0.0
      %v2366 = vand.u32 %v1761, 4294901760
      %v2367 = vsub.f32 %v1761, %v2366
      %v2368 = vand.u32 %v2367, 4294901760
      %2369 = vmatpush1.msra.mxu0 %v2368
      %2370 = vmatprep.subr.mxu0 0.0
      %v2371 = vand.u32 %v1767, 4294901760
      %v2372 = vsub.f32 %v1767, %v2371
      %v2373 = vand.u32 %v2372, 4294901760
      %2374 = vmatpush1.msra.mxu0 %v2373
      %2375 = vmatprep.subr.mxu0 0.0
      %2376 = vmatpush1.msra.mxu0 0.0
      %2377 = vmatprep.subr.mxu0 0.0
      %2378 = vmatpush1.msra.mxu0 0.0
      %2379 = vmatprep.subr.mxu0 0.0
      %2380 = vmatpush1.msra.mxu0 0.0
      %2381 = vmatprep.subr.mxu0 0.0
      %2382 = vmatpush1.msra.mxu0 0.0
      %2383 = vmatprep.subr.mxu0 0.0
      %2384 = vmatpush1.msra.mxu0 0.0
      %2385 = vmatprep.subr.mxu0 0.0
      %2386 = vmatpush1.msra.mxu0 0.0
      %2387 = vmatprep.subr.mxu0 0.0
      %2388 = vmatpush1.msra.mxu0 0.0
      %2389 = vmatprep.subr.mxu0 0.0
      %2390 = vmatpush1.msra.mxu0 0.0
      %2391 = vmatprep.subr.mxu0 0.0
      %2392 = vmatpush1.msra.mxu0 0.0
      %2393 = vmatprep.subr.mxu0 0.0
      %2394 = vmatpush1.msra.mxu0 0.0
      %2395 = vmatprep.subr.mxu0 0.0
      %2396 = vmatpush1.msra.mxu0 0.0
      %2397 = vmatprep.subr.mxu0 0.0
      %2398 = vmatpush1.msra.mxu0 0.0
      %2399 = vmatprep.subr.mxu0 0.0
      %2400 = vmatpush1.msra.mxu0 0.0
      %2401 = vmatprep.subr.mxu0 0.0
      %2402 = vmatpush1.msra.mxu0 0.0
      %2403 = vmatprep.subr.mxu0 0.0
      %2404 = vmatpush1.msra.mxu0 0.0
      %2405 = vmatprep.subr.mxu0 0.0
      %2406 = vmatpush1.msra.mxu0 0.0
      %2407 = vmatprep.subr.mxu0 0.0
      %2408 = vmatpush1.msra.mxu0 0.0
      %2409 = vmatprep.subr.mxu0 0.0
      %2410 = vmatpush1.msra.mxu0 0.0
      %2411 = vmatprep.subr.mxu0 0.0
      %2412 = vmatpush1.msra.mxu0 0.0
      %2413 = vmatprep.subr.mxu0 0.0
      %2414 = vmatpush1.msra.mxu0 0.0
      %2415 = vmatprep.subr.mxu0 0.0
      %2416 = vmatpush1.msra.mxu0 0.0
      %2417 = vmatprep.subr.mxu0 0.0
      %2418 = vmatpush1.msra.mxu0 0.0
      %2419 = vmatprep.subr.mxu0 0.0
      %2420 = vmatpush1.msra.mxu0 0.0
      %2421 = vmatprep.subr.mxu0 0.0
      %2422 = vmatpush1.msra.mxu0 0.0
      %2423 = vmatprep.subr.mxu0 0.0
      %2424 = vmatpush1.msra.mxu0 0.0
      %2425 = vmatprep.subr.mxu0 0.0
      %2426 = vmatpush1.msra.mxu0 0.0
      %2427 = vmatprep.subr.mxu0 0.0
      %2428 = vmatpush1.msra.mxu0 0.0
      %2429 = vmatprep.subr.mxu0 0.0
      %2430 = vmatpush1.msra.mxu0 0.0
      %2431 = vmatprep.mubr.f32.mxu0 0.0
      %v2432 = vand.u32 %v1788, 4294901760
      %2433 = vmatmul.mubr.f32.gmra.mrb[0].mxu0 %v2432
      %v2434 = vpop.f32.mrb[0].mxu0
      %v2435 = vadd.f32 %v2296, %v2434
      %v2436 = vpop.f32.mrb[0].mxu0
      %2437 = vmatprep.mubr.f32.mxu0 0.0
      %v2438 = vand.u32 %v1791, 4294901760
      %2439 = vmatmul.mubr.f32.gmra.mrb[0].mxu0 %v2438
      %v2440 = vpop.f32.mrb[0].mxu0
      %v2441 = vadd.f32 %v2304, %v2440
      %v2442 = vpop.f32.mrb[0].mxu0
      %2443 = vmatprep.mubr.f32.mxu0 0.0
      %v2444 = vand.u32 %v1794, 4294901760
      %2445 = vmatmul.mubr.f32.gmra.mrb[0].mxu0 %v2444
      %v2446 = vpop.f32.mrb[0].mxu0
      %v2447 = vadd.f32 %v2312, %v2446
      %v2448 = vpop.f32.mrb[0].mxu0
      %2449 = vmatprep.mubr.f32.mxu0 0.0
      %v2450 = vand.u32 %v1797, 4294901760
      %2451 = vmatmul.mubr.f32.gmra.mrb[0].mxu0 %v2450
      %v2452 = vpop.f32.mrb[0].mxu0
      %v2453 = vadd.f32 %v2320, %v2452
      %v2454 = vpop.f32.mrb[0].mxu0
      %2455 = vmatprep.mubr.f32.mxu0 0.0
      %v2456 = vand.u32 %v1800, 4294901760
      %2457 = vmatmul.mubr.f32.gmra.mrb[0].mxu0 %v2456
      %v2458 = vpop.f32.mrb[0].mxu0
      %v2459 = vadd.f32 %v2328, %v2458
      %v2460 = vpop.f32.mrb[0].mxu0
      %2461 = vmatprep.mubr.f32.mxu0 0.0
      %v2462 = vand.u32 %v1803, 4294901760
      %2463 = vmatmul.mubr.f32.gmra.mrb[0].mxu0 %v2462
      %v2464 = vpop.f32.mrb[0].mxu0
      %v2465 = vadd.f32 %v2336, %v2464
      %v2466 = vpop.f32.mrb[0].mxu0
      %2467 = vmatprep.mubr.f32.mxu0 0.0
      %v2468 = vand.u32 %v1806, 4294901760
      %2469 = vmatmul.mubr.f32.gmra.mrb[0].mxu0 %v2468
      %v2470 = vpop.f32.mrb[0].mxu0
      %v2471 = vadd.f32 %v2344, %v2470
      %v2472 = vpop.f32.mrb[0].mxu0
      %2473 = vmatprep.mubr.f32.mxu0 0.0
      %v2474 = vand.u32 %v1809, 4294901760
      %2475 = vmatmul.mubr.f32.gmra.mrb[0].mxu0 %v2474
      %v2476 = vpop.f32.mrb[0].mxu0
      %v2477 = vadd.f32 %v2352, %v2476
      %v2478 = vpop.f32.mrb[0].mxu0
      %2479 = vdwg.mxu0
      %2480 = vmatprep.subr.mxu0 0.0
      %v2481 = vand.u32 %v1749, 4294901760
      %2482 = vmatpush1.msra.mxu0 %v2481
      %2483 = vmatprep.subr.mxu0 0.0
      %v2484 = vand.u32 %v1755, 4294901760
      %2485 = vmatpush1.msra.mxu0 %v2484
      %2486 = vmatprep.subr.mxu0 0.0
      %v2487 = vand.u32 %v1761, 4294901760
      %2488 = vmatpush1.msra.mxu0 %v2487
      %2489 = vmatprep.subr.mxu0 0.0
      %v2490 = vand.u32 %v1767, 4294901760
      %2491 = vmatpush1.msra.mxu0 %v2490
      %2492 = vmatprep.subr.mxu0 0.0
      %2493 = vmatpush1.msra.mxu0 0.0
      %2494 = vmatprep.subr.mxu0 0.0
      %2495 = vmatpush1.msra.mxu0 0.0
      %2496 = vmatprep.subr.mxu0 0.0
      %2497 = vmatpush1.msra.mxu0 0.0
      %2498 = vmatprep.subr.mxu0 0.0
      %2499 = vmatpush1.msra.mxu0 0.0
      %2500 = vmatprep.subr.mxu0 0.0
      %2501 = vmatpush1.msra.mxu0 0.0
      %2502 = vmatprep.subr.mxu0 0.0
      %2503 = vmatpush1.msra.mxu0 0.0
      %2504 = vmatprep.subr.mxu0 0.0
      %2505 = vmatpush1.msra.mxu0 0.0
      %2506 = vmatprep.subr.mxu0 0.0
      %2507 = vmatpush1.msra.mxu0 0.0
      %2508 = vmatprep.subr.mxu0 0.0
      %2509 = vmatpush1.msra.mxu0 0.0
      %2510 = vmatprep.subr.mxu0 0.0
      %2511 = vmatpush1.msra.mxu0 0.0
      %2512 = vmatprep.subr.mxu0 0.0
      %2513 = vmatpush1.msra.mxu0 0.0
      %2514 = vmatprep.subr.mxu0 0.0
      %2515 = vmatpush1.msra.mxu0 0.0
      %2516 = vmatprep.subr.mxu0 0.0
      %2517 = vmatpush1.msra.mxu0 0.0
      %2518 = vmatprep.subr.mxu0 0.0
      %2519 = vmatpush1.msra.mxu0 0.0
      %2520 = vmatprep.subr.mxu0 0.0
      %2521 = vmatpush1.msra.mxu0 0.0
      %2522 = vmatprep.subr.mxu0 0.0
      %2523 = vmatpush1.msra.mxu0 0.0
      %2524 = vmatprep.subr.mxu0 0.0
      %2525 = vmatpush1.msra.mxu0 0.0
      %2526 = vmatprep.subr.mxu0 0.0
      %2527 = vmatpush1.msra.mxu0 0.0
      %2528 = vmatprep.subr.mxu0 0.0
      %2529 = vmatpush1.msra.mxu0 0.0
      %2530 = vmatprep.subr.mxu0 0.0
      %2531 = vmatpush1.msra.mxu0 0.0
      %2532 = vmatprep.subr.mxu0 0.0
      %2533 = vmatpush1.msra.mxu0 0.0
      %2534 = vmatprep.subr.mxu0 0.0
      %2535 = vmatpush1.msra.mxu0 0.0
      %2536 = vmatprep.subr.mxu0 0.0
      %2537 = vmatpush1.msra.mxu0 0.0
      %2538 = vmatprep.subr.mxu0 0.0
      %2539 = vmatpush1.msra.mxu0 0.0
      %2540 = vmatprep.subr.mxu0 0.0
      %2541 = vmatpush1.msra.mxu0 0.0
      %2542 = vmatprep.subr.mxu0 0.0
      %2543 = vmatpush1.msra.mxu0 0.0
      %2544 = vmatprep.subr.mxu0 0.0
      %2545 = vmatpush1.msra.mxu0 0.0
      %2546 = vmatprep.subr.mxu0 0.0
      %2547 = vmatpush1.msra.mxu0 0.0
      %2548 = vmatprep.mubr.f32.mxu0 0.0
      %v2549 = vand.u32 %v1788, 4294901760
      %2550 = vmatmul.mubr.f32.gmra.mrb[0].mxu0 %v2549
      %v2551 = vpop.f32.mrb[0].mxu0
      %v2552 = vadd.f32 %v2435, %v2551
      %v2553 = vpop.f32.mrb[0].mxu0
      %2554 = vmatprep.mubr.f32.mxu0 0.0
      %v2555 = vand.u32 %v1791, 4294901760
      %2556 = vmatmul.mubr.f32.gmra.mrb[0].mxu0 %v2555
      %v2557 = vpop.f32.mrb[0].mxu0
      %v2558 = vadd.f32 %v2441, %v2557
      %v2559 = vpop.f32.mrb[0].mxu0
      %2560 = vmatprep.mubr.f32.mxu0 0.0
      %v2561 = vand.u32 %v1794, 4294901760
      %2562 = vmatmul.mubr.f32.gmra.mrb[0].mxu0 %v2561
      %v2563 = vpop.f32.mrb[0].mxu0
      %v2564 = vadd.f32 %v2447, %v2563
      %v2565 = vpop.f32.mrb[0].mxu0
      %2566 = vmatprep.mubr.f32.mxu0 0.0
      %v2567 = vand.u32 %v1797, 4294901760
      %2568 = vmatmul.mubr.f32.gmra.mrb[0].mxu0 %v2567
      %v2569 = vpop.f32.mrb[0].mxu0
      %v2570 = vadd.f32 %v2453, %v2569
      %v2571 = vpop.f32.mrb[0].mxu0
      %2572 = vmatprep.mubr.f32.mxu0 0.0
      %v2573 = vand.u32 %v1800, 4294901760
      %2574 = vmatmul.mubr.f32.gmra.mrb[0].mxu0 %v2573
      %v2575 = vpop.f32.mrb[0].mxu0
      %v2576 = vadd.f32 %v2459, %v2575
      %v2577 = vpop.f32.mrb[0].mxu0
      %2578 = vmatprep.mubr.f32.mxu0 0.0
      %v2579 = vand.u32 %v1803, 4294901760
      %2580 = vmatmul.mubr.f32.gmra.mrb[0].mxu0 %v2579
      %v2581 = vpop.f32.mrb[0].mxu0
      %v2582 = vadd.f32 %v2465, %v2581
      %v2583 = vpop.f32.mrb[0].mxu0
      %2584 = vmatprep.mubr.f32.mxu0 0.0
      %v2585 = vand.u32 %v1806, 4294901760
      %2586 = vmatmul.mubr.f32.gmra.mrb[0].mxu0 %v2585
      %v2587 = vpop.f32.mrb[0].mxu0
      %v2588 = vadd.f32 %v2471, %v2587
      %v2589 = vpop.f32.mrb[0].mxu0
      %2590 = vmatprep.mubr.f32.mxu0 0.0
      %v2591 = vand.u32 %v1809, 4294901760
      %2592 = vmatmul.mubr.f32.gmra.mrb[0].mxu0 %v2591
      %v2593 = vpop.f32.mrb[0].mxu0
      %v2594 = vadd.f32 %v2477, %v2593
      %v2595 = vpop.f32.mrb[0].mxu0
      %2596 = vdwg.mxu0
      %vm2597 = vcmask 7168
      %v2598 = vsel %vm2597, %v2552, 0.0
      %v2599 = vsel %vm2597, %v2558, 0.0
      %v2600 = vadd.f32 %v2598, %v2599
      %v2601 = vsel %vm2597, %v2564, 0.0
      %v2602 = vadd.f32 %v2600, %v2601
      %v2603 = vsel %vm2597, %v2570, 0.0
      %v2604 = vadd.f32 %v2602, %v2603
      %v2605 = vsel %vm2597, %v2576, 0.0
      %v2606 = vadd.f32 %v2604, %v2605
      %v2607 = vsel %vm2597, %v2582, 0.0
      %v2608 = vadd.f32 %v2606, %v2607
      %v2609 = vsel %vm2597, %v2588, 0.0
      %v2610 = vadd.f32 %v2608, %v2609
      %v2611 = vsel %vm2597, %v2594, 0.0
      %v2612 = vadd.f32 %v2610, %v2611
      %v2613 = vrot.slane %v2612, 4
      %v2614 = vadd.f32 %v2612, %v2613
      %v2615 = vrot.slane %v2614, 2
      %v2616 = vadd.f32 %v2614, %v2615
      %v2617 = vrot.slane %v2616, 1
      %v2618 = vadd.f32 %v2616, %v2617
      %v2619 = vrcp.pop 64.0
      %v2620 = vmul.f32 %v2618, %v2619
      %v2621 = vsub.f32 %v2552, %v2620
      %v2622 = vsub.f32 %v2558, %v2620
      %v2623 = vsub.f32 %v2564, %v2620
      %v2624 = vsub.f32 %v2570, %v2620
      %v2625 = vsub.f32 %v2576, %v2620
      %v2626 = vsub.f32 %v2582, %v2620
      %v2627 = vsub.f32 %v2588, %v2620
      %v2628 = vsub.f32 %v2594, %v2620
      %v2629 = vmul.f32 %v2621, %v2621
      %v2630 = vmul.f32 %v2622, %v2622
      %v2631 = vmul.f32 %v2623, %v2623
      %v2632 = vmul.f32 %v2624, %v2624
      %v2633 = vmul.f32 %v2625, %v2625
      %v2634 = vmul.f32 %v2626, %v2626
      %v2635 = vmul.f32 %v2627, %v2627
      %v2636 = vmul.f32 %v2628, %v2628
      %v2637 = vsel %vm2597, %v2629, 0.0
      %v2638 = vsel %vm2597, %v2630, 0.0
      %v2639 = vadd.f32 %v2637, %v2638
      %v2640 = vsel %vm2597, %v2631, 0.0
      %v2641 = vadd.f32 %v2639, %v2640
      %v2642 = vsel %vm2597, %v2632, 0.0
      %v2643 = vadd.f32 %v2641, %v2642
      %v2644 = vsel %vm2597, %v2633, 0.0
      %v2645 = vadd.f32 %v2643, %v2644
      %v2646 = vsel %vm2597, %v2634, 0.0
      %v2647 = vadd.f32 %v2645, %v2646
      %v2648 = vsel %vm2597, %v2635, 0.0
      %v2649 = vadd.f32 %v2647, %v2648
      %v2650 = vsel %vm2597, %v2636, 0.0
      %v2651 = vadd.f32 %v2649, %v2650
      %v2652 = vrot.slane %v2651, 4
      %v2653 = vadd.f32 %v2651, %v2652
      %v2654 = vrot.slane %v2653, 2
      %v2655 = vadd.f32 %v2653, %v2654
      %v2656 = vrot.slane %v2655, 1
      %v2657 = vadd.f32 %v2655, %v2656
      %v2658 = vmul.f32 %v2657, %v2619
      %v2659 = vadd.f32 %v2658, 1e-05
      %v2660 = vrsqrt.pop %v2659
      %v2661 = vmul.f32 %v2621, %v2660
      %v2662 = vmul.f32 %v2622, %v2660
      %v2663 = vmul.f32 %v2623, %v2660
      %v2664 = vmul.f32 %v2624, %v2660
      %v2665 = vmul.f32 %v2625, %v2660
      %v2666 = vmul.f32 %v2626, %v2660
      %v2667 = vmul.f32 %v2627, %v2660
      %v2668 = vmul.f32 %v2628, %v2660
      %2677 = vrot.lane.b32.xlu0 %v1778, 127
      %v2678 = vpop.permute.xlu0 %2677
      %2679 = vrot.lane.b32.xlu0 %v1779, 127
      %v2680 = vpop.permute.xlu0 %2679
      %2681 = vrot.lane.b32.xlu0 %v1780, 127
      %v2682 = vpop.permute.xlu0 %2681
      %2683 = vrot.lane.b32.xlu0 %v1781, 127
      %v2684 = vpop.permute.xlu0 %2683
      %2685 = vrot.lane.b32.xlu0 %v1782, 127
      %v2686 = vpop.permute.xlu0 %2685
      %2687 = vrot.lane.b32.xlu0 %v1783, 127
      %v2688 = vpop.permute.xlu0 %2687
      %2689 = vrot.lane.b32.xlu0 %v1784, 127
      %v2690 = vpop.permute.xlu0 %2689
      %2691 = vrot.lane.b32.xlu0 %v1785, 127
      %v2692 = vpop.permute.xlu0 %2691
      %v2701 = vmul.f32 %v2661, %v2678
      %v2702 = vmul.f32 %v2662, %v2680
      %v2703 = vmul.f32 %v2663, %v2682
      %v2704 = vmul.f32 %v2664, %v2684
      %v2705 = vmul.f32 %v2665, %v2686
      %v2706 = vmul.f32 %v2666, %v2688
      %v2707 = vmul.f32 %v2667, %v2690
      %v2708 = vmul.f32 %v2668, %v2692
      %2709 = vrot.lane.b32.xlu0 %v1778, 126
      %v2710 = vpop.permute.xlu0 %2709
      %2711 = vrot.lane.b32.xlu0 %v1779, 126
      %v2712 = vpop.permute.xlu0 %2711
      %2713 = vrot.lane.b32.xlu0 %v1780, 126
      %v2714 = vpop.permute.xlu0 %2713
      %2715 = vrot.lane.b32.xlu0 %v1781, 126
      %v2716 = vpop.permute.xlu0 %2715
      %2717 = vrot.lane.b32.xlu0 %v1782, 126
      %v2718 = vpop.permute.xlu0 %2717
      %2719 = vrot.lane.b32.xlu0 %v1783, 126
      %v2720 = vpop.permute.xlu0 %2719
      %2721 = vrot.lane.b32.xlu0 %v1784, 126
      %v2722 = vpop.permute.xlu0 %2721
      %2723 = vrot.lane.b32.xlu0 %v1785, 126
      %v2724 = vpop.permute.xlu0 %2723
      %v2733 = vadd.f32 %v2701, %v2710
      %v2734 = vadd.f32 %v2702, %v2712
      %v2735 = vadd.f32 %v2703, %v2714
      %v2736 = vadd.f32 %v2704, %v2716
      %v2737 = vadd.f32 %v2705, %v2718
      %v2738 = vadd.f32 %v2706, %v2720
      %v2739 = vadd.f32 %v2707, %v2722
      %v2740 = vadd.f32 %v2708, %v2724
      %v2741 = vxor.u32 %v2733, 2147483648
      %v2742 = vxor.u32 %v2734, 2147483648
      %v2743 = vxor.u32 %v2735, 2147483648
      %v2744 = vxor.u32 %v2736, 2147483648
      %v2745 = vxor.u32 %v2737, 2147483648
      %v2746 = vxor.u32 %v2738, 2147483648
      %v2747 = vxor.u32 %v2739, 2147483648
      %v2748 = vxor.u32 %v2740, 2147483648
      %v2749 = vmul.f32 %v2741, 1.442695
      %v2750 = vpow.pop %v2749
      %v2751 = vmul.f32 %v2742, 1.442695
      %v2752 = vpow.pop %v2751
      %v2753 = vmul.f32 %v2743, 1.442695
      %v2754 = vpow.pop %v2753
      %v2755 = vmul.f32 %v2744, 1.442695
      %v2756 = vpow.pop %v2755
      %v2757 = vmul.f32 %v2745, 1.442695
      %v2758 = vpow.pop %v2757
      %v2759 = vmul.f32 %v2746, 1.442695
      %v2760 = vpow.pop %v2759
      %v2761 = vmul.f32 %v2747, 1.442695
      %v2762 = vpow.pop %v2761
      %v2763 = vmul.f32 %v2748, 1.442695
      %v2764 = vpow.pop %v2763
      %v2765 = vadd.f32 %v2750, 1.0
      %v2766 = vadd.f32 %v2752, 1.0
      %v2767 = vadd.f32 %v2754, 1.0
      %v2768 = vadd.f32 %v2756, 1.0
      %v2769 = vadd.f32 %v2758, 1.0
      %v2770 = vadd.f32 %v2760, 1.0
      %v2771 = vadd.f32 %v2762, 1.0
      %v2772 = vadd.f32 %v2764, 1.0
      %v2773 = vrcp.pop %v2765
      %v2774 = vmul.f32 1.0, %v2773
      %v2775 = vrcp.pop %v2766
      %v2776 = vmul.f32 1.0, %v2775
      %v2777 = vrcp.pop %v2767
      %v2778 = vmul.f32 1.0, %v2777
      %v2779 = vrcp.pop %v2768
      %v2780 = vmul.f32 1.0, %v2779
      %v2781 = vrcp.pop %v2769
      %v2782 = vmul.f32 1.0, %v2781
      %v2783 = vrcp.pop %v2770
      %v2784 = vmul.f32 1.0, %v2783
      %v2785 = vrcp.pop %v2771
      %v2786 = vmul.f32 1.0, %v2785
      %v2787 = vrcp.pop %v2772
      %v2788 = vmul.f32 1.0, %v2787
      %v2789 = vld [vmem:[%s4] sm:$0xff]
      %v2790 = vld [vmem:[%s4 + $0x8] sm:$0xff]
      %v2791 = vld [vmem:[%s4 + $0x10] sm:$0xff]
      %v2792 = vld [vmem:[%s4 + $0x18] sm:$0xff]
      %v2793 = vmul.f32 %v2774, %v1076
      %v2794 = vmul.f32 %v2776, %v1077
      %v2795 = vmul.f32 %v2778, %v1078
      %v2796 = vmul.f32 %v2780, %v1079
      %v2797 = vmul.f32 %v2782, %v1080
      %v2798 = vmul.f32 %v2784, %v1081
      %v2799 = vmul.f32 %v2786, %v1082
      %v2800 = vmul.f32 %v2788, %v1083
      %2805 = vrot.lane.b32.xlu0 %v1088, 127
      %v2806 = vpop.permute.xlu0 %2805
      %2807 = vrot.lane.b32.xlu0 %v1089, 127
      %v2808 = vpop.permute.xlu0 %2807
      %2809 = vrot.lane.b32.xlu0 %v1090, 127
      %v2810 = vpop.permute.xlu0 %2809
      %2811 = vrot.lane.b32.xlu0 %v1091, 127
      %v2812 = vpop.permute.xlu0 %2811
      %v2818 = vsel %vm323, %v2789, 0
      %v2821 = vsel %vm323, %v2790, 0
      %v2824 = vsel %vm323, %v2791, 0
      %v2827 = vsel %vm323, %v2792, 0
      %2829 = vmatprep.subr.mxu0 0.0
      %v2830 = vand.u32 %v2793, 4294901760
      %2831 = vmatpush1.msra.mxu0 %v2830
      %2832 = vmatprep.subr.mxu0 0.0
      %v2833 = vand.u32 %v2794, 4294901760
      %2834 = vmatpush1.msra.mxu0 %v2833
      %2835 = vmatprep.subr.mxu0 0.0
      %v2836 = vand.u32 %v2795, 4294901760
      %2837 = vmatpush1.msra.mxu0 %v2836
      %2838 = vmatprep.subr.mxu0 0.0
      %v2839 = vand.u32 %v2796, 4294901760
      %2840 = vmatpush1.msra.mxu0 %v2839
      %2841 = vmatprep.subr.mxu0 0.0
      %v2842 = vand.u32 %v2797, 4294901760
      %2843 = vmatpush1.msra.mxu0 %v2842
      %2844 = vmatprep.subr.mxu0 0.0
      %v2845 = vand.u32 %v2798, 4294901760
      %2846 = vmatpush1.msra.mxu0 %v2845
      %2847 = vmatprep.subr.mxu0 0.0
      %v2848 = vand.u32 %v2799, 4294901760
      %2849 = vmatpush1.msra.mxu0 %v2848
      %2850 = vmatprep.subr.mxu0 0.0
      %v2851 = vand.u32 %v2800, 4294901760
      %2852 = vmatpush1.msra.mxu0 %v2851
      %2853 = vmatprep.subr.mxu0 0.0
      %2854 = vmatpush1.msra.mxu0 0.0
      %2855 = vmatprep.subr.mxu0 0.0
      %2856 = vmatpush1.msra.mxu0 0.0
      %2857 = vmatprep.subr.mxu0 0.0
      %2858 = vmatpush1.msra.mxu0 0.0
      %2859 = vmatprep.subr.mxu0 0.0
      %2860 = vmatpush1.msra.mxu0 0.0
      %2861 = vmatprep.subr.mxu0 0.0
      %2862 = vmatpush1.msra.mxu0 0.0
      %2863 = vmatprep.subr.mxu0 0.0
      %2864 = vmatpush1.msra.mxu0 0.0
      %2865 = vmatprep.subr.mxu0 0.0
      %2866 = vmatpush1.msra.mxu0 0.0
      %2867 = vmatprep.subr.mxu0 0.0
      %2868 = vmatpush1.msra.mxu0 0.0
      %2869 = vmatprep.subr.mxu0 0.0
      %2870 = vmatpush1.msra.mxu0 0.0
      %2871 = vmatprep.subr.mxu0 0.0
      %2872 = vmatpush1.msra.mxu0 0.0
      %2873 = vmatprep.subr.mxu0 0.0
      %2874 = vmatpush1.msra.mxu0 0.0
      %2875 = vmatprep.subr.mxu0 0.0
      %2876 = vmatpush1.msra.mxu0 0.0
      %2877 = vmatprep.subr.mxu0 0.0
      %2878 = vmatpush1.msra.mxu0 0.0
      %2879 = vmatprep.subr.mxu0 0.0
      %2880 = vmatpush1.msra.mxu0 0.0
      %2881 = vmatprep.subr.mxu0 0.0
      %2882 = vmatpush1.msra.mxu0 0.0
      %2883 = vmatprep.subr.mxu0 0.0
      %2884 = vmatpush1.msra.mxu0 0.0
      %2885 = vmatprep.subr.mxu0 0.0
      %2886 = vmatpush1.msra.mxu0 0.0
      %2887 = vmatprep.subr.mxu0 0.0
      %2888 = vmatpush1.msra.mxu0 0.0
      %2889 = vmatprep.subr.mxu0 0.0
      %2890 = vmatpush1.msra.mxu0 0.0
      %2891 = vmatprep.subr.mxu0 0.0
      %2892 = vmatpush1.msra.mxu0 0.0
      %2893 = vmatprep.subr.mxu0 0.0
      %2894 = vmatpush1.msra.mxu0 0.0
      %2895 = vmatprep.subr.mxu0 0.0
      %2896 = vmatpush1.msra.mxu0 0.0
      %2897 = vmatprep.subr.mxu0 0.0
      %2898 = vmatpush1.msra.mxu0 0.0
      %2899 = vmatprep.subr.mxu0 0.0
      %2900 = vmatpush1.msra.mxu0 0.0
      %2901 = vmatprep.mubr.f32.mxu0 0.0
      %v2902 = vand.u32 %v2818, 4294901760
      %v2903 = vsub.f32 %v2818, %v2902
      %v2904 = vand.u32 %v2903, 4294901760
      %v2905 = vsub.f32 %v2903, %v2904
      %v2906 = vand.u32 %v2905, 4294901760
      %2907 = vmatmul.mubr.f32.gmra.mrb[0].mxu0 %v2906
      %v2908 = vpop.f32.mrb[0].mxu0
      %v2909 = vadd.f32 %v2806, %v2908
      %v2910 = vpop.f32.mrb[0].mxu0
      %2911 = vmatprep.mubr.f32.mxu0 0.0
      %v2912 = vand.u32 %v2821, 4294901760
      %v2913 = vsub.f32 %v2821, %v2912
      %v2914 = vand.u32 %v2913, 4294901760
      %v2915 = vsub.f32 %v2913, %v2914
      %v2916 = vand.u32 %v2915, 4294901760
      %2917 = vmatmul.mubr.f32.gmra.mrb[0].mxu0 %v2916
      %v2918 = vpop.f32.mrb[0].mxu0
      %v2919 = vadd.f32 %v2808, %v2918
      %v2920 = vpop.f32.mrb[0].mxu0
      %2921 = vmatprep.mubr.f32.mxu0 0.0
      %v2922 = vand.u32 %v2824, 4294901760
      %v2923 = vsub.f32 %v2824, %v2922
      %v2924 = vand.u32 %v2923, 4294901760
      %v2925 = vsub.f32 %v2923, %v2924
      %v2926 = vand.u32 %v2925, 4294901760
      %2927 = vmatmul.mubr.f32.gmra.mrb[0].mxu0 %v2926
      %v2928 = vpop.f32.mrb[0].mxu0
      %v2929 = vadd.f32 %v2810, %v2928
      %v2930 = vpop.f32.mrb[0].mxu0
      %2931 = vmatprep.mubr.f32.mxu0 0.0
      %v2932 = vand.u32 %v2827, 4294901760
      %v2933 = vsub.f32 %v2827, %v2932
      %v2934 = vand.u32 %v2933, 4294901760
      %v2935 = vsub.f32 %v2933, %v2934
      %v2936 = vand.u32 %v2935, 4294901760
      %2937 = vmatmul.mubr.f32.gmra.mrb[0].mxu0 %v2936
      %v2938 = vpop.f32.mrb[0].mxu0
      %v2939 = vadd.f32 %v2812, %v2938
      %v2940 = vpop.f32.mrb[0].mxu0
      %2941 = vdwg.mxu0
      %2942 = vmatprep.subr.mxu0 0.0
      %v2943 = vand.u32 %v2793, 4294901760
      %v2944 = vsub.f32 %v2793, %v2943
      %v2945 = vand.u32 %v2944, 4294901760
      %v2946 = vsub.f32 %v2944, %v2945
      %v2947 = vand.u32 %v2946, 4294901760
      %2948 = vmatpush1.msra.mxu0 %v2947
      %2949 = vmatprep.subr.mxu0 0.0
      %v2950 = vand.u32 %v2794, 4294901760
      %v2951 = vsub.f32 %v2794, %v2950
      %v2952 = vand.u32 %v2951, 4294901760
      %v2953 = vsub.f32 %v2951, %v2952
      %v2954 = vand.u32 %v2953, 4294901760
      %2955 = vmatpush1.msra.mxu0 %v2954
      %2956 = vmatprep.subr.mxu0 0.0
      %v2957 = vand.u32 %v2795, 4294901760
      %v2958 = vsub.f32 %v2795, %v2957
      %v2959 = vand.u32 %v2958, 4294901760
      %v2960 = vsub.f32 %v2958, %v2959
      %v2961 = vand.u32 %v2960, 4294901760
      %2962 = vmatpush1.msra.mxu0 %v2961
      %2963 = vmatprep.subr.mxu0 0.0
      %v2964 = vand.u32 %v2796, 4294901760
      %v2965 = vsub.f32 %v2796, %v2964
      %v2966 = vand.u32 %v2965, 4294901760
      %v2967 = vsub.f32 %v2965, %v2966
      %v2968 = vand.u32 %v2967, 4294901760
      %2969 = vmatpush1.msra.mxu0 %v2968
      %2970 = vmatprep.subr.mxu0 0.0
      %v2971 = vand.u32 %v2797, 4294901760
      %v2972 = vsub.f32 %v2797, %v2971
      %v2973 = vand.u32 %v2972, 4294901760
      %v2974 = vsub.f32 %v2972, %v2973
      %v2975 = vand.u32 %v2974, 4294901760
      %2976 = vmatpush1.msra.mxu0 %v2975
      %2977 = vmatprep.subr.mxu0 0.0
      %v2978 = vand.u32 %v2798, 4294901760
      %v2979 = vsub.f32 %v2798, %v2978
      %v2980 = vand.u32 %v2979, 4294901760
      %v2981 = vsub.f32 %v2979, %v2980
      %v2982 = vand.u32 %v2981, 4294901760
      %2983 = vmatpush1.msra.mxu0 %v2982
      %2984 = vmatprep.subr.mxu0 0.0
      %v2985 = vand.u32 %v2799, 4294901760
      %v2986 = vsub.f32 %v2799, %v2985
      %v2987 = vand.u32 %v2986, 4294901760
      %v2988 = vsub.f32 %v2986, %v2987
      %v2989 = vand.u32 %v2988, 4294901760
      %2990 = vmatpush1.msra.mxu0 %v2989
      %2991 = vmatprep.subr.mxu0 0.0
      %v2992 = vand.u32 %v2800, 4294901760
      %v2993 = vsub.f32 %v2800, %v2992
      %v2994 = vand.u32 %v2993, 4294901760
      %v2995 = vsub.f32 %v2993, %v2994
      %v2996 = vand.u32 %v2995, 4294901760
      %2997 = vmatpush1.msra.mxu0 %v2996
      %2998 = vmatprep.subr.mxu0 0.0
      %2999 = vmatpush1.msra.mxu0 0.0
      %3000 = vmatprep.subr.mxu0 0.0
      %3001 = vmatpush1.msra.mxu0 0.0
      %3002 = vmatprep.subr.mxu0 0.0
      %3003 = vmatpush1.msra.mxu0 0.0
      %3004 = vmatprep.subr.mxu0 0.0
      %3005 = vmatpush1.msra.mxu0 0.0
      %3006 = vmatprep.subr.mxu0 0.0
      %3007 = vmatpush1.msra.mxu0 0.0
      %3008 = vmatprep.subr.mxu0 0.0
      %3009 = vmatpush1.msra.mxu0 0.0
      %3010 = vmatprep.subr.mxu0 0.0
      %3011 = vmatpush1.msra.mxu0 0.0
      %3012 = vmatprep.subr.mxu0 0.0
      %3013 = vmatpush1.msra.mxu0 0.0
      %3014 = vmatprep.subr.mxu0 0.0
      %3015 = vmatpush1.msra.mxu0 0.0
      %3016 = vmatprep.subr.mxu0 0.0
      %3017 = vmatpush1.msra.mxu0 0.0
      %3018 = vmatprep.subr.mxu0 0.0
      %3019 = vmatpush1.msra.mxu0 0.0
      %3020 = vmatprep.subr.mxu0 0.0
      %3021 = vmatpush1.msra.mxu0 0.0
      %3022 = vmatprep.subr.mxu0 0.0
      %3023 = vmatpush1.msra.mxu0 0.0
      %3024 = vmatprep.subr.mxu0 0.0
      %3025 = vmatpush1.msra.mxu0 0.0
      %3026 = vmatprep.subr.mxu0 0.0
      %3027 = vmatpush1.msra.mxu0 0.0
      %3028 = vmatprep.subr.mxu0 0.0
      %3029 = vmatpush1.msra.mxu0 0.0
      %3030 = vmatprep.subr.mxu0 0.0
      %3031 = vmatpush1.msra.mxu0 0.0
      %3032 = vmatprep.subr.mxu0 0.0
      %3033 = vmatpush1.msra.mxu0 0.0
      %3034 = vmatprep.subr.mxu0 0.0
      %3035 = vmatpush1.msra.mxu0 0.0
      %3036 = vmatprep.subr.mxu0 0.0
      %3037 = vmatpush1.msra.mxu0 0.0
      %3038 = vmatprep.subr.mxu0 0.0
      %3039 = vmatpush1.msra.mxu0 0.0
      %3040 = vmatprep.subr.mxu0 0.0
      %3041 = vmatpush1.msra.mxu0 0.0
      %3042 = vmatprep.subr.mxu0 0.0
      %3043 = vmatpush1.msra.mxu0 0.0
      %3044 = vmatprep.subr.mxu0 0.0
      %3045 = vmatpush1.msra.mxu0 0.0
      %3046 = vmatprep.mubr.f32.mxu0 0.0
      %v3047 = vand.u32 %v2818, 4294901760
      %3048 = vmatmul.mubr.f32.gmra.mrb[0].mxu0 %v3047
      %v3049 = vpop.f32.mrb[0].mxu0
      %v3050 = vadd.f32 %v2909, %v3049
      %v3051 = vpop.f32.mrb[0].mxu0
      %3052 = vmatprep.mubr.f32.mxu0 0.0
      %v3053 = vand.u32 %v2821, 4294901760
      %3054 = vmatmul.mubr.f32.gmra.mrb[0].mxu0 %v3053
      %v3055 = vpop.f32.mrb[0].mxu0
      %v3056 = vadd.f32 %v2919, %v3055
      %v3057 = vpop.f32.mrb[0].mxu0
      %3058 = vmatprep.mubr.f32.mxu0 0.0
      %v3059 = vand.u32 %v2824, 4294901760
      %3060 = vmatmul.mubr.f32.gmra.mrb[0].mxu0 %v3059
      %v3061 = vpop.f32.mrb[0].mxu0
      %v3062 = vadd.f32 %v2929, %v3061
      %v3063 = vpop.f32.mrb[0].mxu0
      %3064 = vmatprep.mubr.f32.mxu0 0.0
      %v3065 = vand.u32 %v2827, 4294901760
      %3066 = vmatmul.mubr.f32.gmra.mrb[0].mxu0 %v3065
      %v3067 = vpop.f32.mrb[0].mxu0
      %v3068 = vadd.f32 %v2939, %v3067
      %v3069 = vpop.f32.mrb[0].mxu0
      %3070 = vdwg.mxu0
      %3071 = vmatprep.subr.mxu0 0.0
      %v3072 = vand.u32 %v2793, 4294901760
      %v3073 = vsub.f32 %v2793, %v3072
      %3074 = vmatpush1.msra.mxu0 %v3073
      %3075 = vmatprep.subr.mxu0 0.0
      %v3076 = vand.u32 %v2794, 4294901760
      %v3077 = vsub.f32 %v2794, %v3076
      %3078 = vmatpush1.msra.mxu0 %v3077
      %3079 = vmatprep.subr.mxu0 0.0
      %v3080 = vand.u32 %v2795, 4294901760
      %v3081 = vsub.f32 %v2795, %v3080
      %3082 = vmatpush1.msra.mxu0 %v3081
      %3083 = vmatprep.subr.mxu0 0.0
      %v3084 = vand.u32 %v2796, 4294901760
      %v3085 = vsub.f32 %v2796, %v3084
      %3086 = vmatpush1.msra.mxu0 %v3085
      %3087 = vmatprep.subr.mxu0 0.0
      %v3088 = vand.u32 %v2797, 4294901760
      %v3089 = vsub.f32 %v2797, %v3088
      %3090 = vmatpush1.msra.mxu0 %v3089
      %3091 = vmatprep.subr.mxu0 0.0
      %v3092 = vand.u32 %v2798, 4294901760
      %v3093 = vsub.f32 %v2798, %v3092
      %3094 = vmatpush1.msra.mxu0 %v3093
      %3095 = vmatprep.subr.mxu0 0.0
      %v3096 = vand.u32 %v2799, 4294901760
      %v3097 = vsub.f32 %v2799, %v3096
      %3098 = vmatpush1.msra.mxu0 %v3097
      %3099 = vmatprep.subr.mxu0 0.0
      %v3100 = vand.u32 %v2800, 4294901760
      %v3101 = vsub.f32 %v2800, %v3100
      %3102 = vmatpush1.msra.mxu0 %v3101
      %3103 = vmatprep.subr.mxu0 0.0
      %3104 = vmatpush1.msra.mxu0 0.0
      %3105 = vmatprep.subr.mxu0 0.0
      %3106 = vmatpush1.msra.mxu0 0.0
      %3107 = vmatprep.subr.mxu0 0.0
      %3108 = vmatpush1.msra.mxu0 0.0
      %3109 = vmatprep.subr.mxu0 0.0
      %3110 = vmatpush1.msra.mxu0 0.0
      %3111 = vmatprep.subr.mxu0 0.0
      %3112 = vmatpush1.msra.mxu0 0.0
      %3113 = vmatprep.subr.mxu0 0.0
      %3114 = vmatpush1.msra.mxu0 0.0
      %3115 = vmatprep.subr.mxu0 0.0
      %3116 = vmatpush1.msra.mxu0 0.0
      %3117 = vmatprep.subr.mxu0 0.0
      %3118 = vmatpush1.msra.mxu0 0.0
      %3119 = vmatprep.subr.mxu0 0.0
      %3120 = vmatpush1.msra.mxu0 0.0
      %3121 = vmatprep.subr.mxu0 0.0
      %3122 = vmatpush1.msra.mxu0 0.0
      %3123 = vmatprep.subr.mxu0 0.0
      %3124 = vmatpush1.msra.mxu0 0.0
      %3125 = vmatprep.subr.mxu0 0.0
      %3126 = vmatpush1.msra.mxu0 0.0
      %3127 = vmatprep.subr.mxu0 0.0
      %3128 = vmatpush1.msra.mxu0 0.0
      %3129 = vmatprep.subr.mxu0 0.0
      %3130 = vmatpush1.msra.mxu0 0.0
      %3131 = vmatprep.subr.mxu0 0.0
      %3132 = vmatpush1.msra.mxu0 0.0
      %3133 = vmatprep.subr.mxu0 0.0
      %3134 = vmatpush1.msra.mxu0 0.0
      %3135 = vmatprep.subr.mxu0 0.0
      %3136 = vmatpush1.msra.mxu0 0.0
      %3137 = vmatprep.subr.mxu0 0.0
      %3138 = vmatpush1.msra.mxu0 0.0
      %3139 = vmatprep.subr.mxu0 0.0
      %3140 = vmatpush1.msra.mxu0 0.0
      %3141 = vmatprep.subr.mxu0 0.0
      %3142 = vmatpush1.msra.mxu0 0.0
      %3143 = vmatprep.subr.mxu0 0.0
      %3144 = vmatpush1.msra.mxu0 0.0
      %3145 = vmatprep.subr.mxu0 0.0
      %3146 = vmatpush1.msra.mxu0 0.0
      %3147 = vmatprep.subr.mxu0 0.0
      %3148 = vmatpush1.msra.mxu0 0.0
      %3149 = vmatprep.subr.mxu0 0.0
      %3150 = vmatpush1.msra.mxu0 0.0
      %3151 = vmatprep.mubr.f32.mxu0 0.0
      %v3152 = vand.u32 %v2818, 4294901760
      %v3153 = vsub.f32 %v2818, %v3152
      %3154 = vmatmul.mubr.f32.gmra.mrb[0].mxu0 %v3153
      %v3155 = vpop.f32.mrb[0].mxu0
      %v3156 = vadd.f32 %v3050, %v3155
      %v3157 = vpop.f32.mrb[0].mxu0
      %3158 = vmatprep.mubr.f32.mxu0 0.0
      %v3159 = vand.u32 %v2821, 4294901760
      %v3160 = vsub.f32 %v2821, %v3159
      %3161 = vmatmul.mubr.f32.gmra.mrb[0].mxu0 %v3160
      %v3162 = vpop.f32.mrb[0].mxu0
      %v3163 = vadd.f32 %v3056, %v3162
      %v3164 = vpop.f32.mrb[0].mxu0
      %3165 = vmatprep.mubr.f32.mxu0 0.0
      %v3166 = vand.u32 %v2824, 4294901760
      %v3167 = vsub.f32 %v2824, %v3166
      %3168 = vmatmul.mubr.f32.gmra.mrb[0].mxu0 %v3167
      %v3169 = vpop.f32.mrb[0].mxu0
      %v3170 = vadd.f32 %v3062, %v3169
      %v3171 = vpop.f32.mrb[0].mxu0
      %3172 = vmatprep.mubr.f32.mxu0 0.0
      %v3173 = vand.u32 %v2827, 4294901760
      %v3174 = vsub.f32 %v2827, %v3173
      %3175 = vmatmul.mubr.f32.gmra.mrb[0].mxu0 %v3174
      %v3176 = vpop.f32.mrb[0].mxu0
      %v3177 = vadd.f32 %v3068, %v3176
      %v3178 = vpop.f32.mrb[0].mxu0
      %3179 = vdwg.mxu0
      %3180 = vmatprep.subr.mxu0 0.0
      %v3181 = vand.u32 %v2793, 4294901760
      %3182 = vmatpush1.msra.mxu0 %v3181
      %3183 = vmatprep.subr.mxu0 0.0
      %v3184 = vand.u32 %v2794, 4294901760
      %3185 = vmatpush1.msra.mxu0 %v3184
      %3186 = vmatprep.subr.mxu0 0.0
      %v3187 = vand.u32 %v2795, 4294901760
      %3188 = vmatpush1.msra.mxu0 %v3187
      %3189 = vmatprep.subr.mxu0 0.0
      %v3190 = vand.u32 %v2796, 4294901760
      %3191 = vmatpush1.msra.mxu0 %v3190
      %3192 = vmatprep.subr.mxu0 0.0
      %v3193 = vand.u32 %v2797, 4294901760
      %3194 = vmatpush1.msra.mxu0 %v3193
      %3195 = vmatprep.subr.mxu0 0.0
      %v3196 = vand.u32 %v2798, 4294901760
      %3197 = vmatpush1.msra.mxu0 %v3196
      %3198 = vmatprep.subr.mxu0 0.0
      %v3199 = vand.u32 %v2799, 4294901760
      %3200 = vmatpush1.msra.mxu0 %v3199
      %3201 = vmatprep.subr.mxu0 0.0
      %v3202 = vand.u32 %v2800, 4294901760
      %3203 = vmatpush1.msra.mxu0 %v3202
      %3204 = vmatprep.subr.mxu0 0.0
      %3205 = vmatpush1.msra.mxu0 0.0
      %3206 = vmatprep.subr.mxu0 0.0
      %3207 = vmatpush1.msra.mxu0 0.0
      %3208 = vmatprep.subr.mxu0 0.0
      %3209 = vmatpush1.msra.mxu0 0.0
      %3210 = vmatprep.subr.mxu0 0.0
      %3211 = vmatpush1.msra.mxu0 0.0
      %3212 = vmatprep.subr.mxu0 0.0
      %3213 = vmatpush1.msra.mxu0 0.0
      %3214 = vmatprep.subr.mxu0 0.0
      %3215 = vmatpush1.msra.mxu0 0.0
      %3216 = vmatprep.subr.mxu0 0.0
      %3217 = vmatpush1.msra.mxu0 0.0
      %3218 = vmatprep.subr.mxu0 0.0
      %3219 = vmatpush1.msra.mxu0 0.0
      %3220 = vmatprep.subr.mxu0 0.0
      %3221 = vmatpush1.msra.mxu0 0.0
      %3222 = vmatprep.subr.mxu0 0.0
      %3223 = vmatpush1.msra.mxu0 0.0
      %3224 = vmatprep.subr.mxu0 0.0
      %3225 = vmatpush1.msra.mxu0 0.0
      %3226 = vmatprep.subr.mxu0 0.0
      %3227 = vmatpush1.msra.mxu0 0.0
      %3228 = vmatprep.subr.mxu0 0.0
      %3229 = vmatpush1.msra.mxu0 0.0
      %3230 = vmatprep.subr.mxu0 0.0
      %3231 = vmatpush1.msra.mxu0 0.0
      %3232 = vmatprep.subr.mxu0 0.0
      %3233 = vmatpush1.msra.mxu0 0.0
      %3234 = vmatprep.subr.mxu0 0.0
      %3235 = vmatpush1.msra.mxu0 0.0
      %3236 = vmatprep.subr.mxu0 0.0
      %3237 = vmatpush1.msra.mxu0 0.0
      %3238 = vmatprep.subr.mxu0 0.0
      %3239 = vmatpush1.msra.mxu0 0.0
      %3240 = vmatprep.subr.mxu0 0.0
      %3241 = vmatpush1.msra.mxu0 0.0
      %3242 = vmatprep.subr.mxu0 0.0
      %3243 = vmatpush1.msra.mxu0 0.0
      %3244 = vmatprep.subr.mxu0 0.0
      %3245 = vmatpush1.msra.mxu0 0.0
      %3246 = vmatprep.subr.mxu0 0.0
      %3247 = vmatpush1.msra.mxu0 0.0
      %3248 = vmatprep.subr.mxu0 0.0
      %3249 = vmatpush1.msra.mxu0 0.0
      %3250 = vmatprep.subr.mxu0 0.0
      %3251 = vmatpush1.msra.mxu0 0.0
      %3252 = vmatprep.mubr.f32.mxu0 0.0
      %v3253 = vand.u32 %v2818, 4294901760
      %v3254 = vsub.f32 %v2818, %v3253
      %v3255 = vand.u32 %v3254, 4294901760
      %3256 = vmatmul.mubr.f32.gmra.mrb[0].mxu0 %v3255
      %v3257 = vpop.f32.mrb[0].mxu0
      %v3258 = vadd.f32 %v3156, %v3257
      %v3259 = vpop.f32.mrb[0].mxu0
      %3260 = vmatprep.mubr.f32.mxu0 0.0
      %v3261 = vand.u32 %v2821, 4294901760
      %v3262 = vsub.f32 %v2821, %v3261
      %v3263 = vand.u32 %v3262, 4294901760
      %3264 = vmatmul.mubr.f32.gmra.mrb[0].mxu0 %v3263
      %v3265 = vpop.f32.mrb[0].mxu0
      %v3266 = vadd.f32 %v3163, %v3265
      %v3267 = vpop.f32.mrb[0].mxu0
      %3268 = vmatprep.mubr.f32.mxu0 0.0
      %v3269 = vand.u32 %v2824, 4294901760
      %v3270 = vsub.f32 %v2824, %v3269
      %v3271 = vand.u32 %v3270, 4294901760
      %3272 = vmatmul.mubr.f32.gmra.mrb[0].mxu0 %v3271
      %v3273 = vpop.f32.mrb[0].mxu0
      %v3274 = vadd.f32 %v3170, %v3273
      %v3275 = vpop.f32.mrb[0].mxu0
      %3276 = vmatprep.mubr.f32.mxu0 0.0
      %v3277 = vand.u32 %v2827, 4294901760
      %v3278 = vsub.f32 %v2827, %v3277
      %v3279 = vand.u32 %v3278, 4294901760
      %3280 = vmatmul.mubr.f32.gmra.mrb[0].mxu0 %v3279
      %v3281 = vpop.f32.mrb[0].mxu0
      %v3282 = vadd.f32 %v3177, %v3281
      %v3283 = vpop.f32.mrb[0].mxu0
      %3284 = vdwg.mxu0
      %3285 = vmatprep.subr.mxu0 0.0
      %v3286 = vand.u32 %v2793, 4294901760
      %v3287 = vsub.f32 %v2793, %v3286
      %v3288 = vand.u32 %v3287, 4294901760
      %3289 = vmatpush1.msra.mxu0 %v3288
      %3290 = vmatprep.subr.mxu0 0.0
      %v3291 = vand.u32 %v2794, 4294901760
      %v3292 = vsub.f32 %v2794, %v3291
      %v3293 = vand.u32 %v3292, 4294901760
      %3294 = vmatpush1.msra.mxu0 %v3293
      %3295 = vmatprep.subr.mxu0 0.0
      %v3296 = vand.u32 %v2795, 4294901760
      %v3297 = vsub.f32 %v2795, %v3296
      %v3298 = vand.u32 %v3297, 4294901760
      %3299 = vmatpush1.msra.mxu0 %v3298
      %3300 = vmatprep.subr.mxu0 0.0
      %v3301 = vand.u32 %v2796, 4294901760
      %v3302 = vsub.f32 %v2796, %v3301
      %v3303 = vand.u32 %v3302, 4294901760
      %3304 = vmatpush1.msra.mxu0 %v3303
      %3305 = vmatprep.subr.mxu0 0.0
      %v3306 = vand.u32 %v2797, 4294901760
      %v3307 = vsub.f32 %v2797, %v3306
      %v3308 = vand.u32 %v3307, 4294901760
      %3309 = vmatpush1.msra.mxu0 %v3308
      %3310 = vmatprep.subr.mxu0 0.0
      %v3311 = vand.u32 %v2798, 4294901760
      %v3312 = vsub.f32 %v2798, %v3311
      %v3313 = vand.u32 %v3312, 4294901760
      %3314 = vmatpush1.msra.mxu0 %v3313
      %3315 = vmatprep.subr.mxu0 0.0
      %v3316 = vand.u32 %v2799, 4294901760
      %v3317 = vsub.f32 %v2799, %v3316
      %v3318 = vand.u32 %v3317, 4294901760
      %3319 = vmatpush1.msra.mxu0 %v3318
      %3320 = vmatprep.subr.mxu0 0.0
      %v3321 = vand.u32 %v2800, 4294901760
      %v3322 = vsub.f32 %v2800, %v3321
      %v3323 = vand.u32 %v3322, 4294901760
      %3324 = vmatpush1.msra.mxu0 %v3323
      %3325 = vmatprep.subr.mxu0 0.0
      %3326 = vmatpush1.msra.mxu0 0.0
      %3327 = vmatprep.subr.mxu0 0.0
      %3328 = vmatpush1.msra.mxu0 0.0
      %3329 = vmatprep.subr.mxu0 0.0
      %3330 = vmatpush1.msra.mxu0 0.0
      %3331 = vmatprep.subr.mxu0 0.0
      %3332 = vmatpush1.msra.mxu0 0.0
      %3333 = vmatprep.subr.mxu0 0.0
      %3334 = vmatpush1.msra.mxu0 0.0
      %3335 = vmatprep.subr.mxu0 0.0
      %3336 = vmatpush1.msra.mxu0 0.0
      %3337 = vmatprep.subr.mxu0 0.0
      %3338 = vmatpush1.msra.mxu0 0.0
      %3339 = vmatprep.subr.mxu0 0.0
      %3340 = vmatpush1.msra.mxu0 0.0
      %3341 = vmatprep.subr.mxu0 0.0
      %3342 = vmatpush1.msra.mxu0 0.0
      %3343 = vmatprep.subr.mxu0 0.0
      %3344 = vmatpush1.msra.mxu0 0.0
      %3345 = vmatprep.subr.mxu0 0.0
      %3346 = vmatpush1.msra.mxu0 0.0
      %3347 = vmatprep.subr.mxu0 0.0
      %3348 = vmatpush1.msra.mxu0 0.0
      %3349 = vmatprep.subr.mxu0 0.0
      %3350 = vmatpush1.msra.mxu0 0.0
      %3351 = vmatprep.subr.mxu0 0.0
      %3352 = vmatpush1.msra.mxu0 0.0
      %3353 = vmatprep.subr.mxu0 0.0
      %3354 = vmatpush1.msra.mxu0 0.0
      %3355 = vmatprep.subr.mxu0 0.0
      %3356 = vmatpush1.msra.mxu0 0.0
      %3357 = vmatprep.subr.mxu0 0.0
      %3358 = vmatpush1.msra.mxu0 0.0
      %3359 = vmatprep.subr.mxu0 0.0
      %3360 = vmatpush1.msra.mxu0 0.0
      %3361 = vmatprep.subr.mxu0 0.0
      %3362 = vmatpush1.msra.mxu0 0.0
      %3363 = vmatprep.subr.mxu0 0.0
      %3364 = vmatpush1.msra.mxu0 0.0
      %3365 = vmatprep.subr.mxu0 0.0
      %3366 = vmatpush1.msra.mxu0 0.0
      %3367 = vmatprep.subr.mxu0 0.0
      %3368 = vmatpush1.msra.mxu0 0.0
      %3369 = vmatprep.subr.mxu0 0.0
      %3370 = vmatpush1.msra.mxu0 0.0
      %3371 = vmatprep.subr.mxu0 0.0
      %3372 = vmatpush1.msra.mxu0 0.0
      %3373 = vmatprep.mubr.f32.mxu0 0.0
      %v3374 = vand.u32 %v2818, 4294901760
      %3375 = vmatmul.mubr.f32.gmra.mrb[0].mxu0 %v3374
      %v3376 = vpop.f32.mrb[0].mxu0
      %v3377 = vadd.f32 %v3258, %v3376
      %v3378 = vpop.f32.mrb[0].mxu0
      %3379 = vmatprep.mubr.f32.mxu0 0.0
      %v3380 = vand.u32 %v2821, 4294901760
      %3381 = vmatmul.mubr.f32.gmra.mrb[0].mxu0 %v3380
      %v3382 = vpop.f32.mrb[0].mxu0
      %v3383 = vadd.f32 %v3266, %v3382
      %v3384 = vpop.f32.mrb[0].mxu0
      %3385 = vmatprep.mubr.f32.mxu0 0.0
      %v3386 = vand.u32 %v2824, 4294901760
      %3387 = vmatmul.mubr.f32.gmra.mrb[0].mxu0 %v3386
      %v3388 = vpop.f32.mrb[0].mxu0
      %v3389 = vadd.f32 %v3274, %v3388
      %v3390 = vpop.f32.mrb[0].mxu0
      %3391 = vmatprep.mubr.f32.mxu0 0.0
      %v3392 = vand.u32 %v2827, 4294901760
      %3393 = vmatmul.mubr.f32.gmra.mrb[0].mxu0 %v3392
      %v3394 = vpop.f32.mrb[0].mxu0
      %v3395 = vadd.f32 %v3282, %v3394
      %v3396 = vpop.f32.mrb[0].mxu0
      %3397 = vdwg.mxu0
      %3398 = vmatprep.subr.mxu0 0.0
      %v3399 = vand.u32 %v2793, 4294901760
      %3400 = vmatpush1.msra.mxu0 %v3399
      %3401 = vmatprep.subr.mxu0 0.0
      %v3402 = vand.u32 %v2794, 4294901760
      %3403 = vmatpush1.msra.mxu0 %v3402
      %3404 = vmatprep.subr.mxu0 0.0
      %v3405 = vand.u32 %v2795, 4294901760
      %3406 = vmatpush1.msra.mxu0 %v3405
      %3407 = vmatprep.subr.mxu0 0.0
      %v3408 = vand.u32 %v2796, 4294901760
      %3409 = vmatpush1.msra.mxu0 %v3408
      %3410 = vmatprep.subr.mxu0 0.0
      %v3411 = vand.u32 %v2797, 4294901760
      %3412 = vmatpush1.msra.mxu0 %v3411
      %3413 = vmatprep.subr.mxu0 0.0
      %v3414 = vand.u32 %v2798, 4294901760
      %3415 = vmatpush1.msra.mxu0 %v3414
      %3416 = vmatprep.subr.mxu0 0.0
      %v3417 = vand.u32 %v2799, 4294901760
      %3418 = vmatpush1.msra.mxu0 %v3417
      %3419 = vmatprep.subr.mxu0 0.0
      %v3420 = vand.u32 %v2800, 4294901760
      %3421 = vmatpush1.msra.mxu0 %v3420
      %3422 = vmatprep.subr.mxu0 0.0
      %3423 = vmatpush1.msra.mxu0 0.0
      %3424 = vmatprep.subr.mxu0 0.0
      %3425 = vmatpush1.msra.mxu0 0.0
      %3426 = vmatprep.subr.mxu0 0.0
      %3427 = vmatpush1.msra.mxu0 0.0
      %3428 = vmatprep.subr.mxu0 0.0
      %3429 = vmatpush1.msra.mxu0 0.0
      %3430 = vmatprep.subr.mxu0 0.0
      %3431 = vmatpush1.msra.mxu0 0.0
      %3432 = vmatprep.subr.mxu0 0.0
      %3433 = vmatpush1.msra.mxu0 0.0
      %3434 = vmatprep.subr.mxu0 0.0
      %3435 = vmatpush1.msra.mxu0 0.0
      %3436 = vmatprep.subr.mxu0 0.0
      %3437 = vmatpush1.msra.mxu0 0.0
      %3438 = vmatprep.subr.mxu0 0.0
      %3439 = vmatpush1.msra.mxu0 0.0
      %3440 = vmatprep.subr.mxu0 0.0
      %3441 = vmatpush1.msra.mxu0 0.0
      %3442 = vmatprep.subr.mxu0 0.0
      %3443 = vmatpush1.msra.mxu0 0.0
      %3444 = vmatprep.subr.mxu0 0.0
      %3445 = vmatpush1.msra.mxu0 0.0
      %3446 = vmatprep.subr.mxu0 0.0
      %3447 = vmatpush1.msra.mxu0 0.0
      %3448 = vmatprep.subr.mxu0 0.0
      %3449 = vmatpush1.msra.mxu0 0.0
      %3450 = vmatprep.subr.mxu0 0.0
      %3451 = vmatpush1.msra.mxu0 0.0
      %3452 = vmatprep.subr.mxu0 0.0
      %3453 = vmatpush1.msra.mxu0 0.0
      %3454 = vmatprep.subr.mxu0 0.0
      %3455 = vmatpush1.msra.mxu0 0.0
      %3456 = vmatprep.subr.mxu0 0.0
      %3457 = vmatpush1.msra.mxu0 0.0
      %3458 = vmatprep.subr.mxu0 0.0
      %3459 = vmatpush1.msra.mxu0 0.0
      %3460 = vmatprep.subr.mxu0 0.0
      %3461 = vmatpush1.msra.mxu0 0.0
      %3462 = vmatprep.subr.mxu0 0.0
      %3463 = vmatpush1.msra.mxu0 0.0
      %3464 = vmatprep.subr.mxu0 0.0
      %3465 = vmatpush1.msra.mxu0 0.0
      %3466 = vmatprep.subr.mxu0 0.0
      %3467 = vmatpush1.msra.mxu0 0.0
      %3468 = vmatprep.subr.mxu0 0.0
      %3469 = vmatpush1.msra.mxu0 0.0
      %3470 = vmatprep.mubr.f32.mxu0 0.0
      %v3471 = vand.u32 %v2818, 4294901760
      %3472 = vmatmul.mubr.f32.gmra.mrb[0].mxu0 %v3471
      %v3473 = vpop.f32.mrb[0].mxu0
      %v3474 = vadd.f32 %v3377, %v3473
      %v3475 = vpop.f32.mrb[0].mxu0
      %3476 = vmatprep.mubr.f32.mxu0 0.0
      %v3477 = vand.u32 %v2821, 4294901760
      %3478 = vmatmul.mubr.f32.gmra.mrb[0].mxu0 %v3477
      %v3479 = vpop.f32.mrb[0].mxu0
      %v3480 = vadd.f32 %v3383, %v3479
      %v3481 = vpop.f32.mrb[0].mxu0
      %3482 = vmatprep.mubr.f32.mxu0 0.0
      %v3483 = vand.u32 %v2824, 4294901760
      %3484 = vmatmul.mubr.f32.gmra.mrb[0].mxu0 %v3483
      %v3485 = vpop.f32.mrb[0].mxu0
      %v3486 = vadd.f32 %v3389, %v3485
      %v3487 = vpop.f32.mrb[0].mxu0
      %3488 = vmatprep.mubr.f32.mxu0 0.0
      %v3489 = vand.u32 %v2827, 4294901760
      %3490 = vmatmul.mubr.f32.gmra.mrb[0].mxu0 %v3489
      %v3491 = vpop.f32.mrb[0].mxu0
      %v3492 = vadd.f32 %v3395, %v3491
      %v3493 = vpop.f32.mrb[0].mxu0
      %3494 = vdwg.mxu0
      %v3495 = vsel %vm2597, %v3474, -inf
      %v3496 = vsel %vm2597, %v3480, -inf
      %v3497 = vsel %vm2597, %v3486, -inf
      %v3498 = vsel %vm2597, %v3492, -inf
      %v3499 = vmax.f32 %v3495, %v3496
      %v3500 = vmax.f32 %v3497, %v3498
      %v3501 = vmax.f32 %v3499, %v3500
      %v3502 = vrot.slane %v3501, 4
      %v3503 = vmax.f32 %v3501, %v3502
      %v3504 = vrot.slane %v3503, 2
      %v3505 = vmax.f32 %v3503, %v3504
      %v3506 = vrot.slane %v3505, 1
      %v3507 = vmax.f32 %v3505, %v3506
      %v3508 = vsub.f32 %v3474, %v3507
      %v3509 = vsub.f32 %v3480, %v3507
      %v3510 = vsub.f32 %v3486, %v3507
      %v3511 = vsub.f32 %v3492, %v3507
      %v3512 = vmul.f32 %v3508, 1.442695
      %v3513 = vpow.pop %v3512
      %v3514 = vmul.f32 %v3509, 1.442695
      %v3515 = vpow.pop %v3514
      %v3516 = vmul.f32 %v3510, 1.442695
      %v3517 = vpow.pop %v3516
      %v3518 = vmul.f32 %v3511, 1.442695
      %v3519 = vpow.pop %v3518
      %v3520 = vsel %vm2597, %v3513, 0.0
      %v3521 = vsel %vm2597, %v3515, 0.0
      %v3522 = vadd.f32 %v3520, %v3521
      %v3523 = vsel %vm2597, %v3517, 0.0
      %v3524 = vadd.f32 %v3522, %v3523
      %v3525 = vsel %vm2597, %v3519, 0.0
      %v3526 = vadd.f32 %v3524, %v3525
      %v3527 = vrot.slane %v3526, 4
      %v3528 = vadd.f32 %v3526, %v3527
      %v3529 = vrot.slane %v3528, 2
      %v3530 = vadd.f32 %v3528, %v3529
      %v3531 = vrot.slane %v3530, 1
      %v3532 = vadd.f32 %v3530, %v3531
      %v3533 = vrcp.pop %v3532
      %v3534 = vmul.f32 %v3513, %v3533
      %v3535 = vmul.f32 %v3515, %v3533
      %v3536 = vmul.f32 %v3517, %v3533
      %v3537 = vmul.f32 %v3519, %v3533
      %v3538 = vld [vmem:[%s5] sm:$0xff]
      %v3539 = vld [vmem:[%s5 + $0x8] sm:$0xff]
      %v3540 = vld [vmem:[%s5 + $0x10] sm:$0xff]
      %v3541 = vld [vmem:[%s5 + $0x18] sm:$0xff]
      %v3542 = vld [vmem:[%s5 + $0x20] sm:$0xff]
      %v3543 = vld [vmem:[%s5 + $0x28] sm:$0xff]
      %v3544 = vld [vmem:[%s5 + $0x30] sm:$0xff]
      %v3545 = vld [vmem:[%s5 + $0x38] sm:$0xff]
      %v3547 = vsel %vm1786, %v3538, 0
      %v3550 = vsel %vm1786, %v3539, 0
      %v3553 = vsel %vm1786, %v3540, 0
      %v3556 = vsel %vm1786, %v3541, 0
      %v3559 = vsel %vm1786, %v3542, 0
      %v3562 = vsel %vm1786, %v3543, 0
      %v3565 = vsel %vm1786, %v3544, 0
      %v3568 = vsel %vm1786, %v3545, 0
      %3570 = vmatprep.subr.mxu0 0.0
      %v3571 = vand.u32 %v3534, 4294901760
      %3572 = vmatpush1.msra.mxu0 %v3571
      %3573 = vmatprep.subr.mxu0 0.0
      %v3574 = vand.u32 %v3535, 4294901760
      %3575 = vmatpush1.msra.mxu0 %v3574
      %3576 = vmatprep.subr.mxu0 0.0
      %v3577 = vand.u32 %v3536, 4294901760
      %3578 = vmatpush1.msra.mxu0 %v3577
      %3579 = vmatprep.subr.mxu0 0.0
      %v3580 = vand.u32 %v3537, 4294901760
      %3581 = vmatpush1.msra.mxu0 %v3580
      %3582 = vmatprep.subr.mxu0 0.0
      %3583 = vmatpush1.msra.mxu0 0.0
      %3584 = vmatprep.subr.mxu0 0.0
      %3585 = vmatpush1.msra.mxu0 0.0
      %3586 = vmatprep.subr.mxu0 0.0
      %3587 = vmatpush1.msra.mxu0 0.0
      %3588 = vmatprep.subr.mxu0 0.0
      %3589 = vmatpush1.msra.mxu0 0.0
      %3590 = vmatprep.subr.mxu0 0.0
      %3591 = vmatpush1.msra.mxu0 0.0
      %3592 = vmatprep.subr.mxu0 0.0
      %3593 = vmatpush1.msra.mxu0 0.0
      %3594 = vmatprep.subr.mxu0 0.0
      %3595 = vmatpush1.msra.mxu0 0.0
      %3596 = vmatprep.subr.mxu0 0.0
      %3597 = vmatpush1.msra.mxu0 0.0
      %3598 = vmatprep.subr.mxu0 0.0
      %3599 = vmatpush1.msra.mxu0 0.0
      %3600 = vmatprep.subr.mxu0 0.0
      %3601 = vmatpush1.msra.mxu0 0.0
      %3602 = vmatprep.subr.mxu0 0.0
      %3603 = vmatpush1.msra.mxu0 0.0
      %3604 = vmatprep.subr.mxu0 0.0
      %3605 = vmatpush1.msra.mxu0 0.0
      %3606 = vmatprep.subr.mxu0 0.0
      %3607 = vmatpush1.msra.mxu0 0.0
      %3608 = vmatprep.subr.mxu0 0.0
      %3609 = vmatpush1.msra.mxu0 0.0
      %3610 = vmatprep.subr.mxu0 0.0
      %3611 = vmatpush1.msra.mxu0 0.0
      %3612 = vmatprep.subr.mxu0 0.0
      %3613 = vmatpush1.msra.mxu0 0.0
      %3614 = vmatprep.subr.mxu0 0.0
      %3615 = vmatpush1.msra.mxu0 0.0
      %3616 = vmatprep.subr.mxu0 0.0
      %3617 = vmatpush1.msra.mxu0 0.0
      %3618 = vmatprep.subr.mxu0 0.0
      %3619 = vmatpush1.msra.mxu0 0.0
      %3620 = vmatprep.subr.mxu0 0.0
      %3621 = vmatpush1.msra.mxu0 0.0
      %3622 = vmatprep.subr.mxu0 0.0
      %3623 = vmatpush1.msra.mxu0 0.0
      %3624 = vmatprep.subr.mxu0 0.0
      %3625 = vmatpush1.msra.mxu0 0.0
      %3626 = vmatprep.subr.mxu0 0.0
      %3627 = vmatpush1.msra.mxu0 0.0
      %3628 = vmatprep.subr.mxu0 0.0
      %3629 = vmatpush1.msra.mxu0 0.0
      %3630 = vmatprep.subr.mxu0 0.0
      %3631 = vmatpush1.msra.mxu0 0.0
      %3632 = vmatprep.subr.mxu0 0.0
      %3633 = vmatpush1.msra.mxu0 0.0
      %3634 = vmatprep.subr.mxu0 0.0
      %3635 = vmatpush1.msra.mxu0 0.0
      %3636 = vmatprep.subr.mxu0 0.0
      %3637 = vmatpush1.msra.mxu0 0.0
      %3638 = vmatprep.mubr.f32.mxu0 0.0
      %v3639 = vand.u32 %v3547, 4294901760
      %v3640 = vsub.f32 %v3547, %v3639
      %v3641 = vand.u32 %v3640, 4294901760
      %v3642 = vsub.f32 %v3640, %v3641
      %v3643 = vand.u32 %v3642, 4294901760
      %3644 = vmatmul.mubr.f32.gmra.mrb[0].mxu0 %v3643
      %v3645 = vpop.f32.mrb[0].mxu0
      %v3646 = vadd.f32 0.0, %v3645
      %v3647 = vpop.f32.mrb[0].mxu0
      %3648 = vmatprep.mubr.f32.mxu0 0.0
      %v3649 = vand.u32 %v3550, 4294901760
      %v3650 = vsub.f32 %v3550, %v3649
      %v3651 = vand.u32 %v3650, 4294901760
      %v3652 = vsub.f32 %v3650, %v3651
      %v3653 = vand.u32 %v3652, 4294901760
      %3654 = vmatmul.mubr.f32.gmra.mrb[0].mxu0 %v3653
      %v3655 = vpop.f32.mrb[0].mxu0
      %v3656 = vadd.f32 0.0, %v3655
      %v3657 = vpop.f32.mrb[0].mxu0
      %3658 = vmatprep.mubr.f32.mxu0 0.0
      %v3659 = vand.u32 %v3553, 4294901760
      %v3660 = vsub.f32 %v3553, %v3659
      %v3661 = vand.u32 %v3660, 4294901760
      %v3662 = vsub.f32 %v3660, %v3661
      %v3663 = vand.u32 %v3662, 4294901760
      %3664 = vmatmul.mubr.f32.gmra.mrb[0].mxu0 %v3663
      %v3665 = vpop.f32.mrb[0].mxu0
      %v3666 = vadd.f32 0.0, %v3665
      %v3667 = vpop.f32.mrb[0].mxu0
      %3668 = vmatprep.mubr.f32.mxu0 0.0
      %v3669 = vand.u32 %v3556, 4294901760
      %v3670 = vsub.f32 %v3556, %v3669
      %v3671 = vand.u32 %v3670, 4294901760
      %v3672 = vsub.f32 %v3670, %v3671
      %v3673 = vand.u32 %v3672, 4294901760
      %3674 = vmatmul.mubr.f32.gmra.mrb[0].mxu0 %v3673
      %v3675 = vpop.f32.mrb[0].mxu0
      %v3676 = vadd.f32 0.0, %v3675
      %v3677 = vpop.f32.mrb[0].mxu0
      %3678 = vmatprep.mubr.f32.mxu0 0.0
      %v3679 = vand.u32 %v3559, 4294901760
      %v3680 = vsub.f32 %v3559, %v3679
      %v3681 = vand.u32 %v3680, 4294901760
      %v3682 = vsub.f32 %v3680, %v3681
      %v3683 = vand.u32 %v3682, 4294901760
      %3684 = vmatmul.mubr.f32.gmra.mrb[0].mxu0 %v3683
      %v3685 = vpop.f32.mrb[0].mxu0
      %v3686 = vadd.f32 0.0, %v3685
      %v3687 = vpop.f32.mrb[0].mxu0
      %3688 = vmatprep.mubr.f32.mxu0 0.0
      %v3689 = vand.u32 %v3562, 4294901760
      %v3690 = vsub.f32 %v3562, %v3689
      %v3691 = vand.u32 %v3690, 4294901760
      %v3692 = vsub.f32 %v3690, %v3691
      %v3693 = vand.u32 %v3692, 4294901760
      %3694 = vmatmul.mubr.f32.gmra.mrb[0].mxu0 %v3693
      %v3695 = vpop.f32.mrb[0].mxu0
      %v3696 = vadd.f32 0.0, %v3695
      %v3697 = vpop.f32.mrb[0].mxu0
      %3698 = vmatprep.mubr.f32.mxu0 0.0
      %v3699 = vand.u32 %v3565, 4294901760
      %v3700 = vsub.f32 %v3565, %v3699
      %v3701 = vand.u32 %v3700, 4294901760
      %v3702 = vsub.f32 %v3700, %v3701
      %v3703 = vand.u32 %v3702, 4294901760
      %3704 = vmatmul.mubr.f32.gmra.mrb[0].mxu0 %v3703
      %v3705 = vpop.f32.mrb[0].mxu0
      %v3706 = vadd.f32 0.0, %v3705
      %v3707 = vpop.f32.mrb[0].mxu0
      %3708 = vmatprep.mubr.f32.mxu0 0.0
      %v3709 = vand.u32 %v3568, 4294901760
      %v3710 = vsub.f32 %v3568, %v3709
      %v3711 = vand.u32 %v3710, 4294901760
      %v3712 = vsub.f32 %v3710, %v3711
      %v3713 = vand.u32 %v3712, 4294901760
      %3714 = vmatmul.mubr.f32.gmra.mrb[0].mxu0 %v3713
      %v3715 = vpop.f32.mrb[0].mxu0
      %v3716 = vadd.f32 0.0, %v3715
      %v3717 = vpop.f32.mrb[0].mxu0
      %3718 = vdwg.mxu0
      %3719 = vmatprep.subr.mxu0 0.0
      %v3720 = vand.u32 %v3534, 4294901760
      %v3721 = vsub.f32 %v3534, %v3720
      %v3722 = vand.u32 %v3721, 4294901760
      %v3723 = vsub.f32 %v3721, %v3722
      %v3724 = vand.u32 %v3723, 4294901760
      %3725 = vmatpush1.msra.mxu0 %v3724
      %3726 = vmatprep.subr.mxu0 0.0
      %v3727 = vand.u32 %v3535, 4294901760
      %v3728 = vsub.f32 %v3535, %v3727
      %v3729 = vand.u32 %v3728, 4294901760
      %v3730 = vsub.f32 %v3728, %v3729
      %v3731 = vand.u32 %v3730, 4294901760
      %3732 = vmatpush1.msra.mxu0 %v3731
      %3733 = vmatprep.subr.mxu0 0.0
      %v3734 = vand.u32 %v3536, 4294901760
      %v3735 = vsub.f32 %v3536, %v3734
      %v3736 = vand.u32 %v3735, 4294901760
      %v3737 = vsub.f32 %v3735, %v3736
      %v3738 = vand.u32 %v3737, 4294901760
      %3739 = vmatpush1.msra.mxu0 %v3738
      %3740 = vmatprep.subr.mxu0 0.0
      %v3741 = vand.u32 %v3537, 4294901760
      %v3742 = vsub.f32 %v3537, %v3741
      %v3743 = vand.u32 %v3742, 4294901760
      %v3744 = vsub.f32 %v3742, %v3743
      %v3745 = vand.u32 %v3744, 4294901760
      %3746 = vmatpush1.msra.mxu0 %v3745
      %3747 = vmatprep.subr.mxu0 0.0
      %3748 = vmatpush1.msra.mxu0 0.0
      %3749 = vmatprep.subr.mxu0 0.0
      %3750 = vmatpush1.msra.mxu0 0.0
      %3751 = vmatprep.subr.mxu0 0.0
      %3752 = vmatpush1.msra.mxu0 0.0
      %3753 = vmatprep.subr.mxu0 0.0
      %3754 = vmatpush1.msra.mxu0 0.0
      %3755 = vmatprep.subr.mxu0 0.0
      %3756 = vmatpush1.msra.mxu0 0.0
      %3757 = vmatprep.subr.mxu0 0.0
      %3758 = vmatpush1.msra.mxu0 0.0
      %3759 = vmatprep.subr.mxu0 0.0
      %3760 = vmatpush1.msra.mxu0 0.0
      %3761 = vmatprep.subr.mxu0 0.0
      %3762 = vmatpush1.msra.mxu0 0.0
      %3763 = vmatprep.subr.mxu0 0.0
      %3764 = vmatpush1.msra.mxu0 0.0
      %3765 = vmatprep.subr.mxu0 0.0
      %3766 = vmatpush1.msra.mxu0 0.0
      %3767 = vmatprep.subr.mxu0 0.0
      %3768 = vmatpush1.msra.mxu0 0.0
      %3769 = vmatprep.subr.mxu0 0.0
      %3770 = vmatpush1.msra.mxu0 0.0
      %3771 = vmatprep.subr.mxu0 0.0
      %3772 = vmatpush1.msra.mxu0 0.0
      %3773 = vmatprep.subr.mxu0 0.0
      %3774 = vmatpush1.msra.mxu0 0.0
      %3775 = vmatprep.subr.mxu0 0.0
      %3776 = vmatpush1.msra.mxu0 0.0
      %3777 = vmatprep.subr.mxu0 0.0
      %3778 = vmatpush1.msra.mxu0 0.0
      %3779 = vmatprep.subr.mxu0 0.0
      %3780 = vmatpush1.msra.mxu0 0.0
      %3781 = vmatprep.subr.mxu0 0.0
      %3782 = vmatpush1.msra.mxu0 0.0
      %3783 = vmatprep.subr.mxu0 0.0
      %3784 = vmatpush1.msra.mxu0 0.0
      %3785 = vmatprep.subr.mxu0 0.0
      %3786 = vmatpush1.msra.mxu0 0.0
      %3787 = vmatprep.subr.mxu0 0.0
      %3788 = vmatpush1.msra.mxu0 0.0
      %3789 = vmatprep.subr.mxu0 0.0
      %3790 = vmatpush1.msra.mxu0 0.0
      %3791 = vmatprep.subr.mxu0 0.0
      %3792 = vmatpush1.msra.mxu0 0.0
      %3793 = vmatprep.subr.mxu0 0.0
      %3794 = vmatpush1.msra.mxu0 0.0
      %3795 = vmatprep.subr.mxu0 0.0
      %3796 = vmatpush1.msra.mxu0 0.0
      %3797 = vmatprep.subr.mxu0 0.0
      %3798 = vmatpush1.msra.mxu0 0.0
      %3799 = vmatprep.subr.mxu0 0.0
      %3800 = vmatpush1.msra.mxu0 0.0
      %3801 = vmatprep.subr.mxu0 0.0
      %3802 = vmatpush1.msra.mxu0 0.0
      %3803 = vmatprep.mubr.f32.mxu0 0.0
      %v3804 = vand.u32 %v3547, 4294901760
      %3805 = vmatmul.mubr.f32.gmra.mrb[0].mxu0 %v3804
      %v3806 = vpop.f32.mrb[0].mxu0
      %v3807 = vadd.f32 %v3646, %v3806
      %v3808 = vpop.f32.mrb[0].mxu0
      %3809 = vmatprep.mubr.f32.mxu0 0.0
      %v3810 = vand.u32 %v3550, 4294901760
      %3811 = vmatmul.mubr.f32.gmra.mrb[0].mxu0 %v3810
      %v3812 = vpop.f32.mrb[0].mxu0
      %v3813 = vadd.f32 %v3656, %v3812
      %v3814 = vpop.f32.mrb[0].mxu0
      %3815 = vmatprep.mubr.f32.mxu0 0.0
      %v3816 = vand.u32 %v3553, 4294901760
      %3817 = vmatmul.mubr.f32.gmra.mrb[0].mxu0 %v3816
      %v3818 = vpop.f32.mrb[0].mxu0
      %v3819 = vadd.f32 %v3666, %v3818
      %v3820 = vpop.f32.mrb[0].mxu0
      %3821 = vmatprep.mubr.f32.mxu0 0.0
      %v3822 = vand.u32 %v3556, 4294901760
      %3823 = vmatmul.mubr.f32.gmra.mrb[0].mxu0 %v3822
      %v3824 = vpop.f32.mrb[0].mxu0
      %v3825 = vadd.f32 %v3676, %v3824
      %v3826 = vpop.f32.mrb[0].mxu0
      %3827 = vmatprep.mubr.f32.mxu0 0.0
      %v3828 = vand.u32 %v3559, 4294901760
      %3829 = vmatmul.mubr.f32.gmra.mrb[0].mxu0 %v3828
      %v3830 = vpop.f32.mrb[0].mxu0
      %v3831 = vadd.f32 %v3686, %v3830
      %v3832 = vpop.f32.mrb[0].mxu0
      %3833 = vmatprep.mubr.f32.mxu0 0.0
      %v3834 = vand.u32 %v3562, 4294901760
      %3835 = vmatmul.mubr.f32.gmra.mrb[0].mxu0 %v3834
      %v3836 = vpop.f32.mrb[0].mxu0
      %v3837 = vadd.f32 %v3696, %v3836
      %v3838 = vpop.f32.mrb[0].mxu0
      %3839 = vmatprep.mubr.f32.mxu0 0.0
      %v3840 = vand.u32 %v3565, 4294901760
      %3841 = vmatmul.mubr.f32.gmra.mrb[0].mxu0 %v3840
      %v3842 = vpop.f32.mrb[0].mxu0
      %v3843 = vadd.f32 %v3706, %v3842
      %v3844 = vpop.f32.mrb[0].mxu0
      %3845 = vmatprep.mubr.f32.mxu0 0.0
      %v3846 = vand.u32 %v3568, 4294901760
      %3847 = vmatmul.mubr.f32.gmra.mrb[0].mxu0 %v3846
      %v3848 = vpop.f32.mrb[0].mxu0
      %v3849 = vadd.f32 %v3716, %v3848
      %v3850 = vpop.f32.mrb[0].mxu0
      %3851 = vdwg.mxu0
      %3852 = vmatprep.subr.mxu0 0.0
      %v3853 = vand.u32 %v3534, 4294901760
      %v3854 = vsub.f32 %v3534, %v3853
      %3855 = vmatpush1.msra.mxu0 %v3854
      %3856 = vmatprep.subr.mxu0 0.0
      %v3857 = vand.u32 %v3535, 4294901760
      %v3858 = vsub.f32 %v3535, %v3857
      %3859 = vmatpush1.msra.mxu0 %v3858
      %3860 = vmatprep.subr.mxu0 0.0
      %v3861 = vand.u32 %v3536, 4294901760
      %v3862 = vsub.f32 %v3536, %v3861
      %3863 = vmatpush1.msra.mxu0 %v3862
      %3864 = vmatprep.subr.mxu0 0.0
      %v3865 = vand.u32 %v3537, 4294901760
      %v3866 = vsub.f32 %v3537, %v3865
      %3867 = vmatpush1.msra.mxu0 %v3866
      %3868 = vmatprep.subr.mxu0 0.0
      %3869 = vmatpush1.msra.mxu0 0.0
      %3870 = vmatprep.subr.mxu0 0.0
      %3871 = vmatpush1.msra.mxu0 0.0
      %3872 = vmatprep.subr.mxu0 0.0
      %3873 = vmatpush1.msra.mxu0 0.0
      %3874 = vmatprep.subr.mxu0 0.0
      %3875 = vmatpush1.msra.mxu0 0.0
      %3876 = vmatprep.subr.mxu0 0.0
      %3877 = vmatpush1.msra.mxu0 0.0
      %3878 = vmatprep.subr.mxu0 0.0
      %3879 = vmatpush1.msra.mxu0 0.0
      %3880 = vmatprep.subr.mxu0 0.0
      %3881 = vmatpush1.msra.mxu0 0.0
      %3882 = vmatprep.subr.mxu0 0.0
      %3883 = vmatpush1.msra.mxu0 0.0
      %3884 = vmatprep.subr.mxu0 0.0
      %3885 = vmatpush1.msra.mxu0 0.0
      %3886 = vmatprep.subr.mxu0 0.0
      %3887 = vmatpush1.msra.mxu0 0.0
      %3888 = vmatprep.subr.mxu0 0.0
      %3889 = vmatpush1.msra.mxu0 0.0
      %3890 = vmatprep.subr.mxu0 0.0
      %3891 = vmatpush1.msra.mxu0 0.0
      %3892 = vmatprep.subr.mxu0 0.0
      %3893 = vmatpush1.msra.mxu0 0.0
      %3894 = vmatprep.subr.mxu0 0.0
      %3895 = vmatpush1.msra.mxu0 0.0
      %3896 = vmatprep.subr.mxu0 0.0
      %3897 = vmatpush1.msra.mxu0 0.0
      %3898 = vmatprep.subr.mxu0 0.0
      %3899 = vmatpush1.msra.mxu0 0.0
      %3900 = vmatprep.subr.mxu0 0.0
      %3901 = vmatpush1.msra.mxu0 0.0
      %3902 = vmatprep.subr.mxu0 0.0
      %3903 = vmatpush1.msra.mxu0 0.0
      %3904 = vmatprep.subr.mxu0 0.0
      %3905 = vmatpush1.msra.mxu0 0.0
      %3906 = vmatprep.subr.mxu0 0.0
      %3907 = vmatpush1.msra.mxu0 0.0
      %3908 = vmatprep.subr.mxu0 0.0
      %3909 = vmatpush1.msra.mxu0 0.0
      %3910 = vmatprep.subr.mxu0 0.0
      %3911 = vmatpush1.msra.mxu0 0.0
      %3912 = vmatprep.subr.mxu0 0.0
      %3913 = vmatpush1.msra.mxu0 0.0
      %3914 = vmatprep.subr.mxu0 0.0
      %3915 = vmatpush1.msra.mxu0 0.0
      %3916 = vmatprep.subr.mxu0 0.0
      %3917 = vmatpush1.msra.mxu0 0.0
      %3918 = vmatprep.subr.mxu0 0.0
      %3919 = vmatpush1.msra.mxu0 0.0
      %3920 = vmatprep.subr.mxu0 0.0
      %3921 = vmatpush1.msra.mxu0 0.0
      %3922 = vmatprep.subr.mxu0 0.0
      %3923 = vmatpush1.msra.mxu0 0.0
      %3924 = vmatprep.mubr.f32.mxu0 0.0
      %v3925 = vand.u32 %v3547, 4294901760
      %v3926 = vsub.f32 %v3547, %v3925
      %3927 = vmatmul.mubr.f32.gmra.mrb[0].mxu0 %v3926
      %v3928 = vpop.f32.mrb[0].mxu0
      %v3929 = vadd.f32 %v3807, %v3928
      %v3930 = vpop.f32.mrb[0].mxu0
      %3931 = vmatprep.mubr.f32.mxu0 0.0
      %v3932 = vand.u32 %v3550, 4294901760
      %v3933 = vsub.f32 %v3550, %v3932
      %3934 = vmatmul.mubr.f32.gmra.mrb[0].mxu0 %v3933
      %v3935 = vpop.f32.mrb[0].mxu0
      %v3936 = vadd.f32 %v3813, %v3935
      %v3937 = vpop.f32.mrb[0].mxu0
      %3938 = vmatprep.mubr.f32.mxu0 0.0
      %v3939 = vand.u32 %v3553, 4294901760
      %v3940 = vsub.f32 %v3553, %v3939
      %3941 = vmatmul.mubr.f32.gmra.mrb[0].mxu0 %v3940
      %v3942 = vpop.f32.mrb[0].mxu0
      %v3943 = vadd.f32 %v3819, %v3942
      %v3944 = vpop.f32.mrb[0].mxu0
      %3945 = vmatprep.mubr.f32.mxu0 0.0
      %v3946 = vand.u32 %v3556, 4294901760
      %v3947 = vsub.f32 %v3556, %v3946
      %3948 = vmatmul.mubr.f32.gmra.mrb[0].mxu0 %v3947
      %v3949 = vpop.f32.mrb[0].mxu0
      %v3950 = vadd.f32 %v3825, %v3949
      %v3951 = vpop.f32.mrb[0].mxu0
      %3952 = vmatprep.mubr.f32.mxu0 0.0
      %v3953 = vand.u32 %v3559, 4294901760
      %v3954 = vsub.f32 %v3559, %v3953
      %3955 = vmatmul.mubr.f32.gmra.mrb[0].mxu0 %v3954
      %v3956 = vpop.f32.mrb[0].mxu0
      %v3957 = vadd.f32 %v3831, %v3956
      %v3958 = vpop.f32.mrb[0].mxu0
      %3959 = vmatprep.mubr.f32.mxu0 0.0
      %v3960 = vand.u32 %v3562, 4294901760
      %v3961 = vsub.f32 %v3562, %v3960
      %3962 = vmatmul.mubr.f32.gmra.mrb[0].mxu0 %v3961
      %v3963 = vpop.f32.mrb[0].mxu0
      %v3964 = vadd.f32 %v3837, %v3963
      %v3965 = vpop.f32.mrb[0].mxu0
      %3966 = vmatprep.mubr.f32.mxu0 0.0
      %v3967 = vand.u32 %v3565, 4294901760
      %v3968 = vsub.f32 %v3565, %v3967
      %3969 = vmatmul.mubr.f32.gmra.mrb[0].mxu0 %v3968
      %v3970 = vpop.f32.mrb[0].mxu0
      %v3971 = vadd.f32 %v3843, %v3970
      %v3972 = vpop.f32.mrb[0].mxu0
      %3973 = vmatprep.mubr.f32.mxu0 0.0
      %v3974 = vand.u32 %v3568, 4294901760
      %v3975 = vsub.f32 %v3568, %v3974
      %3976 = vmatmul.mubr.f32.gmra.mrb[0].mxu0 %v3975
      %v3977 = vpop.f32.mrb[0].mxu0
      %v3978 = vadd.f32 %v3849, %v3977
      %v3979 = vpop.f32.mrb[0].mxu0
      %3980 = vdwg.mxu0
      %3981 = vmatprep.subr.mxu0 0.0
      %v3982 = vand.u32 %v3534, 4294901760
      %3983 = vmatpush1.msra.mxu0 %v3982
      %3984 = vmatprep.subr.mxu0 0.0
      %v3985 = vand.u32 %v3535, 4294901760
      %3986 = vmatpush1.msra.mxu0 %v3985
      %3987 = vmatprep.subr.mxu0 0.0
      %v3988 = vand.u32 %v3536, 4294901760
      %3989 = vmatpush1.msra.mxu0 %v3988
      %3990 = vmatprep.subr.mxu0 0.0
      %v3991 = vand.u32 %v3537, 4294901760
      %3992 = vmatpush1.msra.mxu0 %v3991
      %3993 = vmatprep.subr.mxu0 0.0
      %3994 = vmatpush1.msra.mxu0 0.0
      %3995 = vmatprep.subr.mxu0 0.0
      %3996 = vmatpush1.msra.mxu0 0.0
      %3997 = vmatprep.subr.mxu0 0.0
      %3998 = vmatpush1.msra.mxu0 0.0
      %3999 = vmatprep.subr.mxu0 0.0
      %4000 = vmatpush1.msra.mxu0 0.0
      %4001 = vmatprep.subr.mxu0 0.0
      %4002 = vmatpush1.msra.mxu0 0.0
      %4003 = vmatprep.subr.mxu0 0.0
      %4004 = vmatpush1.msra.mxu0 0.0
      %4005 = vmatprep.subr.mxu0 0.0
      %4006 = vmatpush1.msra.mxu0 0.0
      %4007 = vmatprep.subr.mxu0 0.0
      %4008 = vmatpush1.msra.mxu0 0.0
      %4009 = vmatprep.subr.mxu0 0.0
      %4010 = vmatpush1.msra.mxu0 0.0
      %4011 = vmatprep.subr.mxu0 0.0
      %4012 = vmatpush1.msra.mxu0 0.0
      %4013 = vmatprep.subr.mxu0 0.0
      %4014 = vmatpush1.msra.mxu0 0.0
      %4015 = vmatprep.subr.mxu0 0.0
      %4016 = vmatpush1.msra.mxu0 0.0
      %4017 = vmatprep.subr.mxu0 0.0
      %4018 = vmatpush1.msra.mxu0 0.0
      %4019 = vmatprep.subr.mxu0 0.0
      %4020 = vmatpush1.msra.mxu0 0.0
      %4021 = vmatprep.subr.mxu0 0.0
      %4022 = vmatpush1.msra.mxu0 0.0
      %4023 = vmatprep.subr.mxu0 0.0
      %4024 = vmatpush1.msra.mxu0 0.0
      %4025 = vmatprep.subr.mxu0 0.0
      %4026 = vmatpush1.msra.mxu0 0.0
      %4027 = vmatprep.subr.mxu0 0.0
      %4028 = vmatpush1.msra.mxu0 0.0
      %4029 = vmatprep.subr.mxu0 0.0
      %4030 = vmatpush1.msra.mxu0 0.0
      %4031 = vmatprep.subr.mxu0 0.0
      %4032 = vmatpush1.msra.mxu0 0.0
      %4033 = vmatprep.subr.mxu0 0.0
      %4034 = vmatpush1.msra.mxu0 0.0
      %4035 = vmatprep.subr.mxu0 0.0
      %4036 = vmatpush1.msra.mxu0 0.0
      %4037 = vmatprep.subr.mxu0 0.0
      %4038 = vmatpush1.msra.mxu0 0.0
      %4039 = vmatprep.subr.mxu0 0.0
      %4040 = vmatpush1.msra.mxu0 0.0
      %4041 = vmatprep.subr.mxu0 0.0
      %4042 = vmatpush1.msra.mxu0 0.0
      %4043 = vmatprep.subr.mxu0 0.0
      %4044 = vmatpush1.msra.mxu0 0.0
      %4045 = vmatprep.subr.mxu0 0.0
      %4046 = vmatpush1.msra.mxu0 0.0
      %4047 = vmatprep.subr.mxu0 0.0
      %4048 = vmatpush1.msra.mxu0 0.0
      %4049 = vmatprep.mubr.f32.mxu0 0.0
      %v4050 = vand.u32 %v3547, 4294901760
      %v4051 = vsub.f32 %v3547, %v4050
      %v4052 = vand.u32 %v4051, 4294901760
      %4053 = vmatmul.mubr.f32.gmra.mrb[0].mxu0 %v4052
      %v4054 = vpop.f32.mrb[0].mxu0
      %v4055 = vadd.f32 %v3929, %v4054
      %v4056 = vpop.f32.mrb[0].mxu0
      %4057 = vmatprep.mubr.f32.mxu0 0.0
      %v4058 = vand.u32 %v3550, 4294901760
      %v4059 = vsub.f32 %v3550, %v4058
      %v4060 = vand.u32 %v4059, 4294901760
      %4061 = vmatmul.mubr.f32.gmra.mrb[0].mxu0 %v4060
      %v4062 = vpop.f32.mrb[0].mxu0
      %v4063 = vadd.f32 %v3936, %v4062
      %v4064 = vpop.f32.mrb[0].mxu0
      %4065 = vmatprep.mubr.f32.mxu0 0.0
      %v4066 = vand.u32 %v3553, 4294901760
      %v4067 = vsub.f32 %v3553, %v4066
      %v4068 = vand.u32 %v4067, 4294901760
      %4069 = vmatmul.mubr.f32.gmra.mrb[0].mxu0 %v4068
      %v4070 = vpop.f32.mrb[0].mxu0
      %v4071 = vadd.f32 %v3943, %v4070
      %v4072 = vpop.f32.mrb[0].mxu0
      %4073 = vmatprep.mubr.f32.mxu0 0.0
      %v4074 = vand.u32 %v3556, 4294901760
      %v4075 = vsub.f32 %v3556, %v4074
      %v4076 = vand.u32 %v4075, 4294901760
      %4077 = vmatmul.mubr.f32.gmra.mrb[0].mxu0 %v4076
      %v4078 = vpop.f32.mrb[0].mxu0
      %v4079 = vadd.f32 %v3950, %v4078
      %v4080 = vpop.f32.mrb[0].mxu0
      %4081 = vmatprep.mubr.f32.mxu0 0.0
      %v4082 = vand.u32 %v3559, 4294901760
      %v4083 = vsub.f32 %v3559, %v4082
      %v4084 = vand.u32 %v4083, 4294901760
      %4085 = vmatmul.mubr.f32.gmra.mrb[0].mxu0 %v4084
      %v4086 = vpop.f32.mrb[0].mxu0
      %v4087 = vadd.f32 %v3957, %v4086
      %v4088 = vpop.f32.mrb[0].mxu0
      %4089 = vmatprep.mubr.f32.mxu0 0.0
      %v4090 = vand.u32 %v3562, 4294901760
      %v4091 = vsub.f32 %v3562, %v4090
      %v4092 = vand.u32 %v4091, 4294901760
      %4093 = vmatmul.mubr.f32.gmra.mrb[0].mxu0 %v4092
      %v4094 = vpop.f32.mrb[0].mxu0
      %v4095 = vadd.f32 %v3964, %v4094
      %v4096 = vpop.f32.mrb[0].mxu0
      %4097 = vmatprep.mubr.f32.mxu0 0.0
      %v4098 = vand.u32 %v3565, 4294901760
      %v4099 = vsub.f32 %v3565, %v4098
      %v4100 = vand.u32 %v4099, 4294901760
      %4101 = vmatmul.mubr.f32.gmra.mrb[0].mxu0 %v4100
      %v4102 = vpop.f32.mrb[0].mxu0
      %v4103 = vadd.f32 %v3971, %v4102
      %v4104 = vpop.f32.mrb[0].mxu0
      %4105 = vmatprep.mubr.f32.mxu0 0.0
      %v4106 = vand.u32 %v3568, 4294901760
      %v4107 = vsub.f32 %v3568, %v4106
      %v4108 = vand.u32 %v4107, 4294901760
      %4109 = vmatmul.mubr.f32.gmra.mrb[0].mxu0 %v4108
      %v4110 = vpop.f32.mrb[0].mxu0
      %v4111 = vadd.f32 %v3978, %v4110
      %v4112 = vpop.f32.mrb[0].mxu0
      %4113 = vdwg.mxu0
      %4114 = vmatprep.subr.mxu0 0.0
      %v4115 = vand.u32 %v3534, 4294901760
      %v4116 = vsub.f32 %v3534, %v4115
      %v4117 = vand.u32 %v4116, 4294901760
      %4118 = vmatpush1.msra.mxu0 %v4117
      %4119 = vmatprep.subr.mxu0 0.0
      %v4120 = vand.u32 %v3535, 4294901760
      %v4121 = vsub.f32 %v3535, %v4120
      %v4122 = vand.u32 %v4121, 4294901760
      %4123 = vmatpush1.msra.mxu0 %v4122
      %4124 = vmatprep.subr.mxu0 0.0
      %v4125 = vand.u32 %v3536, 4294901760
      %v4126 = vsub.f32 %v3536, %v4125
      %v4127 = vand.u32 %v4126, 4294901760
      %4128 = vmatpush1.msra.mxu0 %v4127
      %4129 = vmatprep.subr.mxu0 0.0
      %v4130 = vand.u32 %v3537, 4294901760
      %v4131 = vsub.f32 %v3537, %v4130
      %v4132 = vand.u32 %v4131, 4294901760
      %4133 = vmatpush1.msra.mxu0 %v4132
      %4134 = vmatprep.subr.mxu0 0.0
      %4135 = vmatpush1.msra.mxu0 0.0
      %4136 = vmatprep.subr.mxu0 0.0
      %4137 = vmatpush1.msra.mxu0 0.0
      %4138 = vmatprep.subr.mxu0 0.0
      %4139 = vmatpush1.msra.mxu0 0.0
      %4140 = vmatprep.subr.mxu0 0.0
      %4141 = vmatpush1.msra.mxu0 0.0
      %4142 = vmatprep.subr.mxu0 0.0
      %4143 = vmatpush1.msra.mxu0 0.0
      %4144 = vmatprep.subr.mxu0 0.0
      %4145 = vmatpush1.msra.mxu0 0.0
      %4146 = vmatprep.subr.mxu0 0.0
      %4147 = vmatpush1.msra.mxu0 0.0
      %4148 = vmatprep.subr.mxu0 0.0
      %4149 = vmatpush1.msra.mxu0 0.0
      %4150 = vmatprep.subr.mxu0 0.0
      %4151 = vmatpush1.msra.mxu0 0.0
      %4152 = vmatprep.subr.mxu0 0.0
      %4153 = vmatpush1.msra.mxu0 0.0
      %4154 = vmatprep.subr.mxu0 0.0
      %4155 = vmatpush1.msra.mxu0 0.0
      %4156 = vmatprep.subr.mxu0 0.0
      %4157 = vmatpush1.msra.mxu0 0.0
      %4158 = vmatprep.subr.mxu0 0.0
      %4159 = vmatpush1.msra.mxu0 0.0
      %4160 = vmatprep.subr.mxu0 0.0
      %4161 = vmatpush1.msra.mxu0 0.0
      %4162 = vmatprep.subr.mxu0 0.0
      %4163 = vmatpush1.msra.mxu0 0.0
      %4164 = vmatprep.subr.mxu0 0.0
      %4165 = vmatpush1.msra.mxu0 0.0
      %4166 = vmatprep.subr.mxu0 0.0
      %4167 = vmatpush1.msra.mxu0 0.0
      %4168 = vmatprep.subr.mxu0 0.0
      %4169 = vmatpush1.msra.mxu0 0.0
      %4170 = vmatprep.subr.mxu0 0.0
      %4171 = vmatpush1.msra.mxu0 0.0
      %4172 = vmatprep.subr.mxu0 0.0
      %4173 = vmatpush1.msra.mxu0 0.0
      %4174 = vmatprep.subr.mxu0 0.0
      %4175 = vmatpush1.msra.mxu0 0.0
      %4176 = vmatprep.subr.mxu0 0.0
      %4177 = vmatpush1.msra.mxu0 0.0
      %4178 = vmatprep.subr.mxu0 0.0
      %4179 = vmatpush1.msra.mxu0 0.0
      %4180 = vmatprep.subr.mxu0 0.0
      %4181 = vmatpush1.msra.mxu0 0.0
      %4182 = vmatprep.subr.mxu0 0.0
      %4183 = vmatpush1.msra.mxu0 0.0
      %4184 = vmatprep.subr.mxu0 0.0
      %4185 = vmatpush1.msra.mxu0 0.0
      %4186 = vmatprep.subr.mxu0 0.0
      %4187 = vmatpush1.msra.mxu0 0.0
      %4188 = vmatprep.subr.mxu0 0.0
      %4189 = vmatpush1.msra.mxu0 0.0
      %4190 = vmatprep.mubr.f32.mxu0 0.0
      %v4191 = vand.u32 %v3547, 4294901760
      %4192 = vmatmul.mubr.f32.gmra.mrb[0].mxu0 %v4191
      %v4193 = vpop.f32.mrb[0].mxu0
      %v4194 = vadd.f32 %v4055, %v4193
      %v4195 = vpop.f32.mrb[0].mxu0
      %4196 = vmatprep.mubr.f32.mxu0 0.0
      %v4197 = vand.u32 %v3550, 4294901760
      %4198 = vmatmul.mubr.f32.gmra.mrb[0].mxu0 %v4197
      %v4199 = vpop.f32.mrb[0].mxu0
      %v4200 = vadd.f32 %v4063, %v4199
      %v4201 = vpop.f32.mrb[0].mxu0
      %4202 = vmatprep.mubr.f32.mxu0 0.0
      %v4203 = vand.u32 %v3553, 4294901760
      %4204 = vmatmul.mubr.f32.gmra.mrb[0].mxu0 %v4203
      %v4205 = vpop.f32.mrb[0].mxu0
      %v4206 = vadd.f32 %v4071, %v4205
      %v4207 = vpop.f32.mrb[0].mxu0
      %4208 = vmatprep.mubr.f32.mxu0 0.0
      %v4209 = vand.u32 %v3556, 4294901760
      %4210 = vmatmul.mubr.f32.gmra.mrb[0].mxu0 %v4209
      %v4211 = vpop.f32.mrb[0].mxu0
      %v4212 = vadd.f32 %v4079, %v4211
      %v4213 = vpop.f32.mrb[0].mxu0
      %4214 = vmatprep.mubr.f32.mxu0 0.0
      %v4215 = vand.u32 %v3559, 4294901760
      %4216 = vmatmul.mubr.f32.gmra.mrb[0].mxu0 %v4215
      %v4217 = vpop.f32.mrb[0].mxu0
      %v4218 = vadd.f32 %v4087, %v4217
      %v4219 = vpop.f32.mrb[0].mxu0
      %4220 = vmatprep.mubr.f32.mxu0 0.0
      %v4221 = vand.u32 %v3562, 4294901760
      %4222 = vmatmul.mubr.f32.gmra.mrb[0].mxu0 %v4221
      %v4223 = vpop.f32.mrb[0].mxu0
      %v4224 = vadd.f32 %v4095, %v4223
      %v4225 = vpop.f32.mrb[0].mxu0
      %4226 = vmatprep.mubr.f32.mxu0 0.0
      %v4227 = vand.u32 %v3565, 4294901760
      %4228 = vmatmul.mubr.f32.gmra.mrb[0].mxu0 %v4227
      %v4229 = vpop.f32.mrb[0].mxu0
      %v4230 = vadd.f32 %v4103, %v4229
      %v4231 = vpop.f32.mrb[0].mxu0
      %4232 = vmatprep.mubr.f32.mxu0 0.0
      %v4233 = vand.u32 %v3568, 4294901760
      %4234 = vmatmul.mubr.f32.gmra.mrb[0].mxu0 %v4233
      %v4235 = vpop.f32.mrb[0].mxu0
      %v4236 = vadd.f32 %v4111, %v4235
      %v4237 = vpop.f32.mrb[0].mxu0
      %4238 = vdwg.mxu0
      %4239 = vmatprep.subr.mxu0 0.0
      %v4240 = vand.u32 %v3534, 4294901760
      %4241 = vmatpush1.msra.mxu0 %v4240
      %4242 = vmatprep.subr.mxu0 0.0
      %v4243 = vand.u32 %v3535, 4294901760
      %4244 = vmatpush1.msra.mxu0 %v4243
      %4245 = vmatprep.subr.mxu0 0.0
      %v4246 = vand.u32 %v3536, 4294901760
      %4247 = vmatpush1.msra.mxu0 %v4246
      %4248 = vmatprep.subr.mxu0 0.0
      %v4249 = vand.u32 %v3537, 4294901760
      %4250 = vmatpush1.msra.mxu0 %v4249
      %4251 = vmatprep.subr.mxu0 0.0
      %4252 = vmatpush1.msra.mxu0 0.0
      %4253 = vmatprep.subr.mxu0 0.0
      %4254 = vmatpush1.msra.mxu0 0.0
      %4255 = vmatprep.subr.mxu0 0.0
      %4256 = vmatpush1.msra.mxu0 0.0
      %4257 = vmatprep.subr.mxu0 0.0
      %4258 = vmatpush1.msra.mxu0 0.0
      %4259 = vmatprep.subr.mxu0 0.0
      %4260 = vmatpush1.msra.mxu0 0.0
      %4261 = vmatprep.subr.mxu0 0.0
      %4262 = vmatpush1.msra.mxu0 0.0
      %4263 = vmatprep.subr.mxu0 0.0
      %4264 = vmatpush1.msra.mxu0 0.0
      %4265 = vmatprep.subr.mxu0 0.0
      %4266 = vmatpush1.msra.mxu0 0.0
      %4267 = vmatprep.subr.mxu0 0.0
      %4268 = vmatpush1.msra.mxu0 0.0
      %4269 = vmatprep.subr.mxu0 0.0
      %4270 = vmatpush1.msra.mxu0 0.0
      %4271 = vmatprep.subr.mxu0 0.0
      %4272 = vmatpush1.msra.mxu0 0.0
      %4273 = vmatprep.subr.mxu0 0.0
      %4274 = vmatpush1.msra.mxu0 0.0
      %4275 = vmatprep.subr.mxu0 0.0
      %4276 = vmatpush1.msra.mxu0 0.0
      %4277 = vmatprep.subr.mxu0 0.0
      %4278 = vmatpush1.msra.mxu0 0.0
      %4279 = vmatprep.subr.mxu0 0.0
      %4280 = vmatpush1.msra.mxu0 0.0
      %4281 = vmatprep.subr.mxu0 0.0
      %4282 = vmatpush1.msra.mxu0 0.0
      %4283 = vmatprep.subr.mxu0 0.0
      %4284 = vmatpush1.msra.mxu0 0.0
      %4285 = vmatprep.subr.mxu0 0.0
      %4286 = vmatpush1.msra.mxu0 0.0
      %4287 = vmatprep.subr.mxu0 0.0
      %4288 = vmatpush1.msra.mxu0 0.0
      %4289 = vmatprep.subr.mxu0 0.0
      %4290 = vmatpush1.msra.mxu0 0.0
      %4291 = vmatprep.subr.mxu0 0.0
      %4292 = vmatpush1.msra.mxu0 0.0
      %4293 = vmatprep.subr.mxu0 0.0
      %4294 = vmatpush1.msra.mxu0 0.0
      %4295 = vmatprep.subr.mxu0 0.0
      %4296 = vmatpush1.msra.mxu0 0.0
      %4297 = vmatprep.subr.mxu0 0.0
      %4298 = vmatpush1.msra.mxu0 0.0
      %4299 = vmatprep.subr.mxu0 0.0
      %4300 = vmatpush1.msra.mxu0 0.0
      %4301 = vmatprep.subr.mxu0 0.0
      %4302 = vmatpush1.msra.mxu0 0.0
      %4303 = vmatprep.subr.mxu0 0.0
      %4304 = vmatpush1.msra.mxu0 0.0
      %4305 = vmatprep.subr.mxu0 0.0
      %4306 = vmatpush1.msra.mxu0 0.0
      %4307 = vmatprep.mubr.f32.mxu0 0.0
      %v4308 = vand.u32 %v3547, 4294901760
      %4309 = vmatmul.mubr.f32.gmra.mrb[0].mxu0 %v4308
      %v4310 = vpop.f32.mrb[0].mxu0
      %v4311 = vadd.f32 %v4194, %v4310
      %v4312 = vpop.f32.mrb[0].mxu0
      %4313 = vmatprep.mubr.f32.mxu0 0.0
      %v4314 = vand.u32 %v3550, 4294901760
      %4315 = vmatmul.mubr.f32.gmra.mrb[0].mxu0 %v4314
      %v4316 = vpop.f32.mrb[0].mxu0
      %v4317 = vadd.f32 %v4200, %v4316
      %v4318 = vpop.f32.mrb[0].mxu0
      %4319 = vmatprep.mubr.f32.mxu0 0.0
      %v4320 = vand.u32 %v3553, 4294901760
      %4321 = vmatmul.mubr.f32.gmra.mrb[0].mxu0 %v4320
      %v4322 = vpop.f32.mrb[0].mxu0
      %v4323 = vadd.f32 %v4206, %v4322
      %v4324 = vpop.f32.mrb[0].mxu0
      %4325 = vmatprep.mubr.f32.mxu0 0.0
      %v4326 = vand.u32 %v3556, 4294901760
      %4327 = vmatmul.mubr.f32.gmra.mrb[0].mxu0 %v4326
      %v4328 = vpop.f32.mrb[0].mxu0
      %v4329 = vadd.f32 %v4212, %v4328
      %v4330 = vpop.f32.mrb[0].mxu0
      %4331 = vmatprep.mubr.f32.mxu0 0.0
      %v4332 = vand.u32 %v3559, 4294901760
      %4333 = vmatmul.mubr.f32.gmra.mrb[0].mxu0 %v4332
      %v4334 = vpop.f32.mrb[0].mxu0
      %v4335 = vadd.f32 %v4218, %v4334
      %v4336 = vpop.f32.mrb[0].mxu0
      %4337 = vmatprep.mubr.f32.mxu0 0.0
      %v4338 = vand.u32 %v3562, 4294901760
      %4339 = vmatmul.mubr.f32.gmra.mrb[0].mxu0 %v4338
      %v4340 = vpop.f32.mrb[0].mxu0
      %v4341 = vadd.f32 %v4224, %v4340
      %v4342 = vpop.f32.mrb[0].mxu0
      %4343 = vmatprep.mubr.f32.mxu0 0.0
      %v4344 = vand.u32 %v3565, 4294901760
      %4345 = vmatmul.mubr.f32.gmra.mrb[0].mxu0 %v4344
      %v4346 = vpop.f32.mrb[0].mxu0
      %v4347 = vadd.f32 %v4230, %v4346
      %v4348 = vpop.f32.mrb[0].mxu0
      %4349 = vmatprep.mubr.f32.mxu0 0.0
      %v4350 = vand.u32 %v3568, 4294901760
      %4351 = vmatmul.mubr.f32.gmra.mrb[0].mxu0 %v4350
      %v4352 = vpop.f32.mrb[0].mxu0
      %v4353 = vadd.f32 %v4236, %v4352
      %v4354 = vpop.f32.mrb[0].mxu0
      %4355 = vdwg.mxu0
      %v4356 = vmul.f32 %v2774, %v4311
      %v4357 = vmul.f32 %v2776, %v4317
      %v4358 = vmul.f32 %v2778, %v4323
      %v4359 = vmul.f32 %v2780, %v4329
      %v4360 = vmul.f32 %v2782, %v4335
      %v4361 = vmul.f32 %v2784, %v4341
      %v4362 = vmul.f32 %v2786, %v4347
      %v4363 = vmul.f32 %v2788, %v4353
      %4364 = vrot.lane.b32.xlu0 %v1088, 126
      %v4365 = vpop.permute.xlu0 %4364
      %4366 = vrot.lane.b32.xlu0 %v1089, 126
      %v4367 = vpop.permute.xlu0 %4366
      %4368 = vrot.lane.b32.xlu0 %v1090, 126
      %v4369 = vpop.permute.xlu0 %4368
      %4370 = vrot.lane.b32.xlu0 %v1091, 126
      %v4371 = vpop.permute.xlu0 %4370
      %v4376 = vmul.f32 %v3534, %v4365
      %v4377 = vmul.f32 %v3535, %v4367
      %v4378 = vmul.f32 %v3536, %v4369
      %v4379 = vmul.f32 %v3537, %v4371
      %v4380 = vsel %vm2597, %v4376, 0.0
      %v4381 = vsel %vm2597, %v4377, 0.0
      %v4382 = vadd.f32 %v4380, %v4381
      %v4383 = vsel %vm2597, %v4378, 0.0
      %v4384 = vadd.f32 %v4382, %v4383
      %v4385 = vsel %vm2597, %v4379, 0.0
      %v4386 = vadd.f32 %v4384, %v4385
      %v4387 = vrot.slane %v4386, 4
      %v4388 = vadd.f32 %v4386, %v4387
      %v4389 = vrot.slane %v4388, 2
      %v4390 = vadd.f32 %v4388, %v4389
      %v4391 = vrot.slane %v4390, 1
      %v4392 = vadd.f32 %v4390, %v4391
      %4394 = vset.pattern.permute.xlu0 0
      %4395 = vperm.xlu0 %4394, %v4356
      %v4396 = vpop.permute.xlu0 %4395
      %4399 = vset.pattern.permute.xlu0 0
      %4400 = vperm.xlu0 %4399, %v4357
      %v4401 = vpop.permute.xlu0 %4400
      %4404 = vset.pattern.permute.xlu0 0
      %4405 = vperm.xlu0 %4404, %v4358
      %v4406 = vpop.permute.xlu0 %4405
      %4409 = vset.pattern.permute.xlu0 0
      %4410 = vperm.xlu0 %4409, %v4359
      %v4411 = vpop.permute.xlu0 %4410
      %4414 = vset.pattern.permute.xlu0 0
      %4415 = vperm.xlu0 %4414, %v4360
      %v4416 = vpop.permute.xlu0 %4415
      %4419 = vset.pattern.permute.xlu0 0
      %4420 = vperm.xlu0 %4419, %v4361
      %v4421 = vpop.permute.xlu0 %4420
      %4424 = vset.pattern.permute.xlu0 0
      %4425 = vperm.xlu0 %4424, %v4362
      %v4426 = vpop.permute.xlu0 %4425
      %4429 = vset.pattern.permute.xlu0 0
      %4430 = vperm.xlu0 %4429, %v4363
      %v4431 = vpop.permute.xlu0 %4430
      %v4433 = vmul.f32 %v4396, %v306
      %v4434 = vmul.f32 %v4396, %v307
      %v4435 = vmul.f32 %v4401, %v308
      %v4436 = vmul.f32 %v4401, %v309
      %v4437 = vmul.f32 %v4406, %v310
      %v4438 = vmul.f32 %v4406, %v311
      %v4439 = vmul.f32 %v4411, %v312
      %v4440 = vmul.f32 %v4411, %v313
      %v4441 = vmul.f32 %v4416, %v314
      %v4442 = vmul.f32 %v4416, %v315
      %v4443 = vmul.f32 %v4421, %v316
      %v4444 = vmul.f32 %v4421, %v317
      %v4445 = vmul.f32 %v4426, %v318
      %v4446 = vmul.f32 %v4426, %v319
      %v4447 = vmul.f32 %v4431, %v320
      %v4448 = vmul.f32 %v4431, %v321
      %v4449 = vadd.f32 %v4433, %v4435
      %v4450 = vadd.f32 %v4449, %v4437
      %v4451 = vadd.f32 %v4450, %v4439
      %v4452 = vadd.f32 %v4451, %v4441
      %v4453 = vadd.f32 %v4452, %v4443
      %v4454 = vadd.f32 %v4453, %v4445
      %v4455 = vadd.f32 %v4454, %v4447
      %v4456 = vrot.slane %v4455, 4
      %v4457 = vadd.f32 %v4455, %v4456
      %v4458 = vrot.slane %v4457, 2
      %v4459 = vadd.f32 %v4457, %v4458
      %v4460 = vrot.slane %v4459, 1
      %v4461 = vadd.f32 %v4459, %v4460
      %v4462 = vadd.f32 %v4434, %v4436
      %v4463 = vadd.f32 %v4462, %v4438
      %v4464 = vadd.f32 %v4463, %v4440
      %v4465 = vadd.f32 %v4464, %v4442
      %v4466 = vadd.f32 %v4465, %v4444
      %v4467 = vadd.f32 %v4466, %v4446
      %v4468 = vadd.f32 %v4467, %v4448
      %v4469 = vrot.slane %v4468, 4
      %v4470 = vadd.f32 %v4468, %v4469
      %v4471 = vrot.slane %v4470, 2
      %v4472 = vadd.f32 %v4470, %v4471
      %v4473 = vrot.slane %v4472, 1
      %v4474 = vadd.f32 %v4472, %v4473
      %4476 = vset.pattern.permute.xlu0 0
      %4477 = vperm.xlu0 %4476, %v4392
      %v4478 = vpop.permute.xlu0 %4477
      %v4480 = vadd.f32 %v4461, %v4478
      %v4481 = vadd.f32 %v4474, %v4478
      %v4482 = vxor.u32 %v4480, 2147483648
      %v4483 = vxor.u32 %v4481, 2147483648
      %v4484 = vmul.f32 %v4482, 1.442695
      %v4485 = vpow.pop %v4484
      %v4486 = vmul.f32 %v4483, 1.442695
      %v4487 = vpow.pop %v4486
      %v4488 = vadd.f32 %v4485, 1.0
      %v4489 = vadd.f32 %v4487, 1.0
      %v4490 = vrcp.pop %v4488
      %v4491 = vmul.f32 1.0, %v4490
      %v4492 = vrcp.pop %v4489
      %v4493 = vmul.f32 1.0, %v4492
      %4495 = vset.pattern.permute.xlu0 0
      %4496 = vperm.xlu0 %4495, %v2774
      %v4497 = vpop.permute.xlu0 %4496
      %4500 = vset.pattern.permute.xlu0 0
      %4501 = vperm.xlu0 %4500, %v2776
      %v4502 = vpop.permute.xlu0 %4501
      %4505 = vset.pattern.permute.xlu0 0
      %4506 = vperm.xlu0 %4505, %v2778
      %v4507 = vpop.permute.xlu0 %4506
      %4510 = vset.pattern.permute.xlu0 0
      %4511 = vperm.xlu0 %4510, %v2780
      %v4512 = vpop.permute.xlu0 %4511
      %4515 = vset.pattern.permute.xlu0 0
      %4516 = vperm.xlu0 %4515, %v2782
      %v4517 = vpop.permute.xlu0 %4516
      %4520 = vset.pattern.permute.xlu0 0
      %4521 = vperm.xlu0 %4520, %v2784
      %v4522 = vpop.permute.xlu0 %4521
      %4525 = vset.pattern.permute.xlu0 0
      %4526 = vperm.xlu0 %4525, %v2786
      %v4527 = vpop.permute.xlu0 %4526
      %4530 = vset.pattern.permute.xlu0 0
      %4531 = vperm.xlu0 %4530, %v2788
      %v4532 = vpop.permute.xlu0 %4531
      %v4534 = vmul.f32 %v4497, %v306
      %v4535 = vmul.f32 %v4497, %v307
      %v4536 = vmul.f32 %v4502, %v308
      %v4537 = vmul.f32 %v4502, %v309
      %v4538 = vmul.f32 %v4507, %v310
      %v4539 = vmul.f32 %v4507, %v311
      %v4540 = vmul.f32 %v4512, %v312
      %v4541 = vmul.f32 %v4512, %v313
      %v4542 = vmul.f32 %v4517, %v314
      %v4543 = vmul.f32 %v4517, %v315
      %v4544 = vmul.f32 %v4522, %v316
      %v4545 = vmul.f32 %v4522, %v317
      %v4546 = vmul.f32 %v4527, %v318
      %v4547 = vmul.f32 %v4527, %v319
      %v4548 = vmul.f32 %v4532, %v320
      %v4549 = vmul.f32 %v4532, %v321
      %v4550 = vmul.f32 %v4491, %v4534
      %v4551 = vmul.f32 %v4493, %v4535
      %v4552 = vmul.f32 %v4491, %v4536
      %v4553 = vmul.f32 %v4493, %v4537
      %v4554 = vmul.f32 %v4491, %v4538
      %v4555 = vmul.f32 %v4493, %v4539
      %v4556 = vmul.f32 %v4491, %v4540
      %v4557 = vmul.f32 %v4493, %v4541
      %v4558 = vmul.f32 %v4491, %v4542
      %v4559 = vmul.f32 %v4493, %v4543
      %v4560 = vmul.f32 %v4491, %v4544
      %v4561 = vmul.f32 %v4493, %v4545
      %v4562 = vmul.f32 %v4491, %v4546
      %v4563 = vmul.f32 %v4493, %v4547
      %v4564 = vmul.f32 %v4491, %v4548
      %v4565 = vmul.f32 %v4493, %v4549
      %4566 = vst [vmem:[%s305] sm:$0xff] %v4550
      %4567 = vst [vmem:[%s305 + $0x8] sm:$0xff] %v4551
      %4568 = vst [vmem:[%s305 + $0x10] sm:$0xff] %v4552
      %4569 = vst [vmem:[%s305 + $0x18] sm:$0xff] %v4553
      %4570 = vst [vmem:[%s305 + $0x20] sm:$0xff] %v4554
      %4571 = vst [vmem:[%s305 + $0x28] sm:$0xff] %v4555
      %4572 = vst [vmem:[%s305 + $0x30] sm:$0xff] %v4556
      %4573 = vst [vmem:[%s305 + $0x38] sm:$0xff] %v4557
      %4574 = vst [vmem:[%s305 + $0x40] sm:$0xff] %v4558
      %4575 = vst [vmem:[%s305 + $0x48] sm:$0xff] %v4559
      %4576 = vst [vmem:[%s305 + $0x50] sm:$0xff] %v4560
      %4577 = vst [vmem:[%s305 + $0x58] sm:$0xff] %v4561
      %4578 = vst [vmem:[%s305 + $0x60] sm:$0xff] %v4562
      %4579 = vst [vmem:[%s305 + $0x68] sm:$0xff] %v4563
      %4580 = vst [vmem:[%s305 + $0x70] sm:$0xff] %v4564
      %4581 = vst [vmem:[%s305 + $0x78] sm:$0xff] %v4565
      %p4582 = scmp.lt.s32.totalorder %s19, 1
      %s4583 = scalar_select %p4582, %s19, 1
      %s4584 = smul.addr %s4583, 16
      %s4585 = smul.addr %s4584, 8
      %s4586 = scalar_lea.vmem %s8, %s4585
      // Predicated region
      $region53: #{polarized_self_attention.1} parent=51 // pred_check
        %p4587 = pneg %p210
      $region54: #{polarized_self_attention.1} parent=51 // pred_check_branch
        %4589 = sbr.rel (%p4587) target = $region56
      $region55: #{polarized_self_attention.1} parent=51 // pred_region
        _
      $region56: #{polarized_self_attention.1} parent=51 // pred_fallthru
        _
    $region52: #{polarized_self_attention.1} parent=5 // pred_fallthru
      _
    %p4590 = scmp.le.s32.totalorder 2, %s14
    // Predicated region
    $region57: #{polarized_self_attention.1} parent=5 // pred_check
      %p4591 = pneg %p4590
    $region58: #{polarized_self_attention.1} parent=5 // pred_check_branch
      %4593 = sbr.rel (%p4591) target = $region60
    $region59: #{polarized_self_attention.1} parent=5 // pred_region
      %s4594 = ssub.s32 %s14, 2
      // Predicated region
      $region61: #{polarized_self_attention.1} parent=59 // pred_check
        %p4595 = pneg %p216
      $region62: #{polarized_self_attention.1} parent=59 // pred_check_branch
        %4597 = sbr.rel (%p4595) target = $region64
      $region63: #{polarized_self_attention.1} parent=59 // pred_region
        %p4598 = scmp.lt.s32.totalorder %s20, 1
        %s4599 = scalar_select %p4598, %s20, 1
        %s4600 = smul.addr %s4599, 16
        %s4601 = smul.addr %s4600, 8
        %s4602 = scalar_lea.vmem %s8, %s4601
      $region64: #{polarized_self_attention.1} parent=59 // pred_fallthru
        _
    $region60: #{polarized_self_attention.1} parent=5 // pred_fallthru
      _
  $region6: #{polarized_self_attention.1} parent=0 // loop_footer
    %s18 = sadd.s32 1, %s14
  $region7: #{polarized_self_attention.1} parent=0 // loop_footer_branch
    %13 = sbr.rel target = $region3
  $region8: #{polarized_self_attention.1} parent=0 // loop_exit
    _

</llo_original>
